<compile_context>
chip_gen: v6e
topology: v6e:2x2x1
jax: 0.10.0
libtpu: 0.0.40
codegen_flags: <defaults>
</compile_context>

<pallas_src>
import math

import jax
import jax.numpy as jnp
from jax.experimental import pallas as pl
from jax.experimental.pallas import tpu as pltpu


_NEG_INF = -1e9
_LN_EPS = 1e-5


def _default_vmem_limit():
    try:
        cap = pltpu.get_tpu_info().vmem_capacity_bytes
        return int(cap * 3 // 4)          # leave headroom for compiler scratch
    except Exception:
        return 48 * 1024 * 1024           # safe on v5e / v6e / v7x


_VMEM_LIMIT = _default_vmem_limit()


def _pick_tile(total, preferred):
    """Largest multiple of 128 that divides `total` and is <= preferred, else `total`."""
    if total % 128 == 0:
        t = min(preferred, total)
        t -= t % 128
        while t >= 128:
            if total % t == 0:
                return t
            t -= 128
    return total


def _layernorm(h, gamma, beta, eps=_LN_EPS):
    mu = jnp.mean(h, axis=-1, keepdims=True)
    var = jnp.mean(jnp.square(h - mu), axis=-1, keepdims=True)
    return (h - mu) * jax.lax.rsqrt(var + eps) * gamma + beta


# ----------------------------------------------------------------------------
# Fused multi-head attention + residual + LayerNorm
#   grid = (B, n_q_tiles); K/V projected once per batch element into VMEM
#   scratch and reused across query tiles; heads looped in-kernel.
# ----------------------------------------------------------------------------

def pallas_mha_add_ln(x_q, x_kv, mask, wq, bq, wk, bk, wv, bv, wo, bo,
                      ln_g, ln_b, num_heads):
    """y = LayerNorm(x_q + MHA(x_q, x_kv, mask)).

    x_q: (B, Tq, D) bf16, x_kv: (B, Tk, D) bf16, mask: (B,Tq,Tk) or (B,1,Tk) int8.
    Weights are pre-transposed (D_in, D_out) bf16; 1/sqrt(hd) folded into wq/bq.
    """
    B, Tq, D = x_q.shape
    Tk = x_kv.shape[1]
    H = num_heads
    assert D % H == 0
    hd = D // H
    TQ = _pick_tile(Tq, 512)
    n_qt = Tq // TQ

    mq = mask.shape[1]                     # Tq (full mask) or 1 (padding mask)
    if mq == Tq:
        mq_blk = TQ
        mask_idx = lambda b, qi: (b, qi, 0)
    else:
        mq_blk = 1
        mask_idx = lambda b, qi: (b, 0, 0)

    def kernel(xq_ref, xkv_ref, m_ref,
               wq_ref, bq_ref, wk_ref, bk_ref, wv_ref, bv_ref,
               wo_ref, bo_ref, g_ref, b_ref, o_ref, k_sc, v_sc):
        qi = pl.program_id(1)

        # K/V depend only on the batch element: project once per b (qi == 0),
        # keep in VMEM scratch, reuse across all query tiles.
        @pl.when(qi == 0)
        def _project_kv():
            xkv = xkv_ref[0]                                   # (Tk, D) bf16
            k_sc[...] = (jnp.dot(xkv, wk_ref[...],
                                 preferred_element_type=jnp.float32)
                         + bk_ref[...]).astype(jnp.bfloat16)
            v_sc[...] = (jnp.dot(xkv, wv_ref[...],
                                 preferred_element_type=jnp.float32)
                         + bv_ref[...]).astype(jnp.bfloat16)

        xq = xq_ref[0]                                         # (TQ, D) bf16
        # full-width QKV projection (lane-dense, N = D); scale folded in wq/bq
        q = (jnp.dot(xq, wq_ref[...], preferred_element_type=jnp.float32)
             + bq_ref[...]).astype(jnp.bfloat16)               # (TQ, D)

        kc = k_sc[...]                                         # (Tk, D) bf16
        vc = v_sc[...]                                         # (Tk, D) bf16
        m = m_ref[0].astype(jnp.float32)                       # (TQ,Tk) or (1,Tk)

        ctx_parts = []
        for h in range(H):                                     # static head loop
            lo, hi = h * hd, (h + 1) * hd
            s = jax.lax.dot_general(
                q[:, lo:hi], kc[:, lo:hi],
                dimension_numbers=(((1,), (1,)), ((), ())),
                preferred_element_type=jnp.float32)            # (TQ, Tk)
            # NOTE: fully-masked rows degenerate to a uniform distribution
            # (finite -1e9 fill, matching masked_fill-with-large-negative).
            s = jnp.where(m > 0, s, _NEG_INF)
            s = s - jnp.max(s, axis=-1, keepdims=True)
            p = jnp.exp(s)
            denom = jnp.sum(p, axis=-1, keepdims=True)
            ctx_h = jnp.dot(p.astype(jnp.bfloat16), vc[:, lo:hi],
                            preferred_element_type=jnp.float32)  # (TQ, hd)
            ctx_h = ctx_h * pl.reciprocal(denom, approx=True)
            ctx_parts.append(ctx_h.astype(jnp.bfloat16))

        ctx = jnp.concatenate(ctx_parts, axis=-1)              # (TQ, D) bf16
        # single lane-dense output projection (K = D)
        attn = (jnp.dot(ctx, wo_ref[...], preferred_element_type=jnp.float32)
                + bo_ref[...])
        res = xq.astype(jnp.float32) + attn                    # residual in f32
        o_ref[0] = _layernorm(res, g_ref[...], b_ref[...]).astype(o_ref.dtype)

    return pl.pallas_call(
        kernel,
        out_shape=jax.ShapeDtypeStruct((B, Tq, D), x_q.dtype),
        grid=(B, n_qt),
        in_specs=[
            pl.BlockSpec((1, TQ, D), lambda b, qi: (b, qi, 0)),   # x_q tile
            pl.BlockSpec((1, Tk, D), lambda b, qi: (b, 0, 0)),    # x_kv (per b)
            pl.BlockSpec((1, mq_blk, Tk), mask_idx),              # mask (int8)
            pl.BlockSpec((D, D), lambda b, qi: (0, 0)),           # Wq (scaled)
            pl.BlockSpec((1, D), lambda b, qi: (0, 0)),           # bq (scaled)
            pl.BlockSpec((D, D), lambda b, qi: (0, 0)),           # Wk
            pl.BlockSpec((1, D), lambda b, qi: (0, 0)),           # bk
            pl.BlockSpec((D, D), lambda b, qi: (0, 0)),           # Wv
            pl.BlockSpec((1, D), lambda b, qi: (0, 0)),           # bv
            pl.BlockSpec((D, D), lambda b, qi: (0, 0)),           # Wo
            pl.BlockSpec((1, D), lambda b, qi: (0, 0)),           # bo
            pl.BlockSpec((1, D), lambda b, qi: (0, 0)),           # ln gamma
            pl.BlockSpec((1, D), lambda b, qi: (0, 0)),           # ln beta
        ],
        out_specs=pl.BlockSpec((1, TQ, D), lambda b, qi: (b, qi, 0)),
        scratch_shapes=[pltpu.VMEM((Tk, D), jnp.bfloat16),        # K cache
                        pltpu.VMEM((Tk, D), jnp.bfloat16)],       # V cache
        compiler_params=pltpu.CompilerParams(
            dimension_semantics=("parallel", "arbitrary"),
            vmem_limit_bytes=_VMEM_LIMIT),
    )(x_q, x_kv, mask, wq, bq, wk, bk, wv, bv, wo, bo, ln_g, ln_b)


# ----------------------------------------------------------------------------
# Fused feed-forward + residual + LayerNorm
#   rows = B*S flattened; grid = (row_tiles, F_tiles); (rows, D) f32 accumulator
#   so the w1/w2 weights stream through VMEM once per row tile (not per batch).
# ----------------------------------------------------------------------------

def pallas_ffn_add_ln(x, w1, b1, w2, b2, ln_g, ln_b, tile_f=1024, tile_r=1024):
    """y = LayerNorm(x + relu(x @ w1 + b1) @ w2 + b2); w1:(D,F), w2:(F,D) bf16."""
    B, S, D = x.shape
    F = w1.shape[1]
    R = B * S
    x2 = x.reshape(R, D)
    TF = _pick_tile(F, tile_f)
    n_ft = F // TF
    TR = _pick_tile(R, tile_r)
    n_rt = R // TR

    def kernel(x_ref, w1_ref, b1_ref, w2_ref, b2_ref, g_ref, b_ref, o_ref, acc_ref):
        f = pl.program_id(1)

        @pl.when(f == 0)
        def _init():
            # residual + second-layer bias folded into the accumulator
            acc_ref[...] = x_ref[...].astype(jnp.float32) + b2_ref[...]

        h = (jnp.dot(x_ref[...], w1_ref[...], preferred_element_type=jnp.float32)
             + b1_ref[...])
        h = jnp.maximum(h, 0.0)
        acc_ref[...] += jnp.dot(h.astype(jnp.bfloat16), w2_ref[...],
                                preferred_element_type=jnp.float32)

        @pl.when(f == pl.num_programs(1) - 1)
        def _finalize():
            o_ref[...] = _layernorm(acc_ref[...], g_ref[...],
                                    b_ref[...]).astype(o_ref.dtype)

    out = pl.pallas_call(
        kernel,
        out_shape=jax.ShapeDtypeStruct((R, D), x.dtype),
        grid=(n_rt, n_ft),
        in_specs=[
            pl.BlockSpec((TR, D), lambda r, f: (r, 0)),
            pl.BlockSpec((D, TF), lambda r, f: (0, f)),
            pl.BlockSpec((1, TF), lambda r, f: (0, f)),
            pl.BlockSpec((TF, D), lambda r, f: (f, 0)),
            pl.BlockSpec((1, D), lambda r, f: (0, 0)),
            pl.BlockSpec((1, D), lambda r, f: (0, 0)),
            pl.BlockSpec((1, D), lambda r, f: (0, 0)),
        ],
        out_specs=pl.BlockSpec((TR, D), lambda r, f: (r, 0)),
        scratch_shapes=[pltpu.VMEM((TR, D), jnp.float32)],
        compiler_params=pltpu.CompilerParams(
            dimension_semantics=("parallel", "arbitrary"),
            vmem_limit_bytes=_VMEM_LIMIT),
    )(x2, w1, b1, w2, b2, ln_g, ln_b)
    return out.reshape(B, S, D)


# ----------------------------------------------------------------------------
# Output projection to vocabulary
#   rows = B*S flattened; V-tile axis is the OUTER grid axis so each (D, TV)
#   weight tile is DMA'd exactly once; logits emitted in f32.
# ----------------------------------------------------------------------------

def pallas_vocab_proj(x, w, b, tile_v=2048, tile_r=512):
    """logits = x @ w + b;  w: (D, V) bf16, tiled over V (outer) and rows (inner)."""
    B, S, D = x.shape
    V = w.shape[1]
    R = B * S
    x2 = x.reshape(R, D)
    TV = _pick_tile(V, tile_v)
    n_vt = V // TV
    TR = _pick_tile(R, tile_r)
    n_rt = R // TR

    def kernel(x_ref, w_ref, b_ref, o_ref):
        y = (jnp.dot(x_ref[...], w_ref[...], preferred_element_type=jnp.float32)
             + b_ref[...])
        o_ref[...] = y.astype(o_ref.dtype)

    out = pl.pallas_call(
        kernel,
        out_shape=jax.ShapeDtypeStruct((R, V), jnp.float32),
        grid=(n_vt, n_rt),                 # weight axis outer -> DMA'd once
        in_specs=[
            pl.BlockSpec((TR, D), lambda v, r: (r, 0)),
            pl.BlockSpec((D, TV), lambda v, r: (0, v)),
            pl.BlockSpec((1, TV), lambda v, r: (0, v)),
        ],
        out_specs=pl.BlockSpec((TR, TV), lambda v, r: (r, v)),
        compiler_params=pltpu.CompilerParams(
            dimension_semantics=("parallel", "parallel"),
            vmem_limit_bytes=_VMEM_LIMIT),
    )(x2, w, b)
    return out.reshape(B, S, V)


# ----------------------------------------------------------------------------
# Parameter construction (deterministic, synthetic) + one-time prep/relayout
# ----------------------------------------------------------------------------

def sinusoidal_pe(max_len, d):
    pos = jnp.arange(max_len, dtype=jnp.float32)[:, None]
    i = jnp.arange(d // 2, dtype=jnp.float32)[None, :]
    angles = pos / jnp.power(10000.0, 2.0 * i / d)
    pe = jnp.zeros((max_len, d), jnp.float32)
    pe = pe.at[:, 0::2].set(jnp.sin(angles))
    pe = pe.at[:, 1::2].set(jnp.cos(angles))
    return pe


def init_params(key, vocab_size, input_dim, max_len, feature_dim, n_layers):
    D, V, F = input_dim, vocab_size, feature_dim
    keys = iter(jax.random.split(key, 8 + n_layers * 32))

    def dense(kout, kin):
        return 0.02 * jax.random.normal(next(keys), (kout, kin), jnp.float32)

    params = {
        "emb_table": 0.02 * jax.random.normal(next(keys), (V, D), jnp.float32),
        "pos_enc": sinusoidal_pe(max_len, D),
        "out_w": dense(V, D),
        "out_b": jnp.zeros((1, V), jnp.float32),
        "layers": [],
    }
    for _ in range(n_layers):
        layer = {}
        for prefix in ("self", "cross"):
            for name in ("q", "k", "v", "o"):
                layer[f"{prefix}_w{name}"] = dense(D, D)
                layer[f"{prefix}_b{name}"] = jnp.zeros((1, D), jnp.float32)
        layer["ffn_w1"] = dense(F, D)
        layer["ffn_b1"] = jnp.zeros((1, F), jnp.float32)
        layer["ffn_w2"] = dense(D, F)
        layer["ffn_b2"] = jnp.zeros((1, D), jnp.float32)
        for ln in ("ln1", "ln2", "ln3"):
            layer[f"{ln}_g"] = jnp.ones((1, D), jnp.float32)
            layer[f"{ln}_b"] = jnp.zeros((1, D), jnp.float32)
        params["layers"].append(layer)
    return params


def prepare_params(params, num_heads):
    """One-time relayout: transpose to 'x @ W', cast to bf16, fold 1/sqrt(hd)."""
    D = params["emb_table"].shape[1]
    hd = D // num_heads
    scale = 1.0 / math.sqrt(hd)
    bf = jnp.bfloat16

    def attn(layer, prefix):
        return {
            "wq": (layer[f"{prefix}_wq"].T * scale).astype(bf),   # (D, D), scaled
            "bq": layer[f"{prefix}_bq"] * scale,
            "wk": layer[f"{prefix}_wk"].T.astype(bf),
            "bk": layer[f"{prefix}_bk"],
            "wv": layer[f"{prefix}_wv"].T.astype(bf),
            "bv": layer[f"{prefix}_bv"],
            "wo": layer[f"{prefix}_wo"].T.astype(bf),
            "bo": layer[f"{prefix}_bo"],
        }

    prepped = {
        "emb_table": params["emb_table"],
        "pos_enc": params["pos_enc"],
        "out_w": params["out_w"].T.astype(bf),      # (D, V)
        "out_b": params["out_b"],
        "layers": [],
    }
    for layer in params["layers"]:
        prepped["layers"].append({
            "self": attn(layer, "self"),
            "cross": attn(layer, "cross"),
            "ffn_w1": layer["ffn_w1"].T.astype(bf),  # (D, F)
            "ffn_b1": layer["ffn_b1"],
            "ffn_w2": layer["ffn_w2"].T.astype(bf),  # (F, D)
            "ffn_b2": layer["ffn_b2"],
            "ln1_g": layer["ln1_g"], "ln1_b": layer["ln1_b"],
            "ln2_g": layer["ln2_g"], "ln2_b": layer["ln2_b"],
            "ln3_g": layer["ln3_g"], "ln3_b": layer["ln3_b"],
        })
    return prepped


# ----------------------------------------------------------------------------
# Decoder forward (post-norm transformer decoder; dropout omitted == eval mode)
# ----------------------------------------------------------------------------

def decoder_forward(params, encoder_outputs, target_tokens, encoder_mask,
                    decoder_mask, num_heads):
    B, T = target_tokens.shape
    D = params["emb_table"].shape[1]

    # Embedding: token gather (XLA glue) * sqrt(D) + positional encoding.
    # TODO(synk): dropout (after embedding and inside layers) omitted -- eval semantics.
    x = params["emb_table"][target_tokens] * jnp.float32(math.sqrt(D))
    x = x + params["pos_enc"][None, :T, :]
    x = x.astype(jnp.bfloat16)                      # bf16 activations between kernels
    enc = encoder_outputs.astype(jnp.bfloat16)

    # Masks at native shapes, int8 (4x less HBM traffic than f32).
    dec_mask = (decoder_mask != 0).astype(jnp.int8)   # (B, T, T)
    enc_mask = (encoder_mask != 0).astype(jnp.int8)   # (B, 1, S)

    for layer in params["layers"]:
        sa = layer["self"]
        x = pallas_mha_add_ln(x, x, dec_mask,
                              sa["wq"], sa["bq"], sa["wk"], sa["bk"],
                              sa["wv"], sa["bv"], sa["wo"], sa["bo"],
                              layer["ln1_g"], layer["ln1_b"], num_heads)
        ca = layer["cross"]
        x = pallas_mha_add_ln(x, enc, enc_mask,
                              ca["wq"], ca["bq"], ca["wk"], ca["bk"],
                              ca["wv"], ca["bv"], ca["wo"], ca["bo"],
                              layer["ln2_g"], layer["ln2_b"], num_heads)
        x = pallas_ffn_add_ln(x, layer["ffn_w1"], layer["ffn_b1"],
                              layer["ffn_w2"], layer["ffn_b2"],
                              layer["ln3_g"], layer["ln3_b"])

    # output projection to vocabulary logits (V-tiled, weight-outer), f32 logits
    return pallas_vocab_proj(x, params["out_w"], params["out_b"])


# ----------------------------------------------------------------------------
# Demo
# ----------------------------------------------------------------------------

if __name__ == "__main__":
    VOCAB, DIM, MAX_LEN, HEADS, FEAT, NLAYERS = 64, 32, 16, 4, 64, 2
    B, SRC_LEN, TGT_LEN = 2, 8, 8

    key = jax.random.PRNGKey(0)
    k_params, k_enc, k_tok = jax.random.split(key, 3)

    params = init_params(k_params, VOCAB, DIM, MAX_LEN, FEAT, NLAYERS)
    prepped = prepare_params(params, HEADS)         # one-time weight relayout

    encoder_outputs = jax.random.normal(k_enc, (B, SRC_LEN, DIM), jnp.float32)
    target_tokens = jax.random.randint(k_tok, (B, TGT_LEN), 0, VOCAB)
    encoder_mask = jnp.ones((B, 1, SRC_LEN), jnp.float32)
    decoder_mask = jnp.tril(jnp.ones((TGT_LEN, TGT_LEN), jnp.float32))[None, :, :]
    decoder_mask = jnp.broadcast_to(decoder_mask, (B, TGT_LEN, TGT_LEN))

    fwd = jax.jit(decoder_forward, static_argnames=("num_heads",))
    logits = fwd(prepped, encoder_outputs, target_tokens, encoder_mask,
                 decoder_mask, num_heads=HEADS)
    jax.block_until_ready(logits)

    assert logits.shape == (B, TGT_LEN, VOCAB), logits.shape
    assert bool(jnp.all(jnp.isfinite(logits)))
    print("KERNEL_OK")
</pallas_src>

<mosaic_0001>
module attributes {stable_mosaic.version = 11 : i64} {
  func.func @kernel(%arg0: i32, %arg1: i32, %arg2: memref<1x8x32xbf16, #tpu.memory_space<vmem>>, %arg3: memref<1x8x32xbf16, #tpu.memory_space<vmem>>, %arg4: memref<1x1x8xi8, #tpu.memory_space<vmem>>, %arg5: memref<32x32xbf16, #tpu.memory_space<vmem>>, %arg6: memref<1x32xf32, #tpu.memory_space<vmem>>, %arg7: memref<32x32xbf16, #tpu.memory_space<vmem>>, %arg8: memref<1x32xf32, #tpu.memory_space<vmem>>, %arg9: memref<32x32xbf16, #tpu.memory_space<vmem>>, %arg10: memref<1x32xf32, #tpu.memory_space<vmem>>, %arg11: memref<32x32xbf16, #tpu.memory_space<vmem>>, %arg12: memref<1x32xf32, #tpu.memory_space<vmem>>, %arg13: memref<1x32xf32, #tpu.memory_space<vmem>>, %arg14: memref<1x32xf32, #tpu.memory_space<vmem>>, %arg15: memref<1x8x32xbf16, #tpu.memory_space<vmem>>, %arg16: memref<8x32xbf16, #tpu.memory_space<vmem>>, %arg17: memref<8x32xbf16, #tpu.memory_space<vmem>>) attributes {dimension_semantics = [#tpu.dimension_semantics<parallel>, #tpu.dimension_semantics<arbitrary>], iteration_bounds = array<i64: 2, 1>, scalar_prefetch = 0 : i64, scratch_operands = 2 : i64, tpu.core_type = #tpu.core_type<tc>, window_params = [{transform_indices = @transform_0, window_bounds = array<i64: 1, 8, 32>}, {transform_indices = @transform_1, window_bounds = array<i64: 1, 8, 32>}, {transform_indices = @transform_2, window_bounds = array<i64: 1, 1, 8>}, {pipeline_mode = #tpu.pipeline_mode<synchronous>, transform_indices = @transform_3, window_bounds = array<i64: 32, 32>}, {pipeline_mode = #tpu.pipeline_mode<synchronous>, transform_indices = @transform_4, window_bounds = array<i64: 1, 32>}, {pipeline_mode = #tpu.pipeline_mode<synchronous>, transform_indices = @transform_5, window_bounds = array<i64: 32, 32>}, {pipeline_mode = #tpu.pipeline_mode<synchronous>, transform_indices = @transform_6, window_bounds = array<i64: 1, 32>}, {pipeline_mode = #tpu.pipeline_mode<synchronous>, transform_indices = @transform_7, window_bounds = array<i64: 32, 32>}, {pipeline_mode = #tpu.pipeline_mode<synchronous>, transform_indices = @transform_8, window_bounds = array<i64: 1, 32>}, {pipeline_mode = #tpu.pipeline_mode<synchronous>, transform_indices = @transform_9, window_bounds = array<i64: 32, 32>}, {pipeline_mode = #tpu.pipeline_mode<synchronous>, transform_indices = @transform_10, window_bounds = array<i64: 1, 32>}, {pipeline_mode = #tpu.pipeline_mode<synchronous>, transform_indices = @transform_11, window_bounds = array<i64: 1, 32>}, {pipeline_mode = #tpu.pipeline_mode<synchronous>, transform_indices = @transform_12, window_bounds = array<i64: 1, 32>}, {transform_indices = @transform_13, window_bounds = array<i64: 1, 8, 32>}]} {
    %c0_i32 = arith.constant 0 : i32
    %0 = arith.cmpi eq, %arg1, %c0_i32 : i32
    %1 = arith.extui %0 : i1 to i32
    %c0_i32_0 = arith.constant 0 : i32
    %2 = arith.cmpi ne, %1, %c0_i32_0 : i32
    scf.if %2 {
      %c0_55 = arith.constant 0 : index
      %c0_56 = arith.constant 0 : index
      %c0_57 = arith.constant 0 : index
      %144 = vector.load %arg3[%c0_55, %c0_56, %c0_57] : memref<1x8x32xbf16, #tpu.memory_space<vmem>>, vector<1x8x32xbf16>
      %145 = vector.shape_cast %144 : vector<1x8x32xbf16> to vector<8x32xbf16>
      %c0_58 = arith.constant 0 : index
      %c0_59 = arith.constant 0 : index
      %146 = vector.load %arg7[%c0_58, %c0_59] : memref<32x32xbf16, #tpu.memory_space<vmem>>, vector<32x32xbf16>
      %cst_60 = arith.constant dense<0.000000e+00> : vector<8x32xf32>
      %147 = tpu.matmul %145, %146, %cst_60 {dimension_numbers = #tpu.dot_dimension_numbers<[1], [0], [0], [1], [0, 0, 1, 1], [], []>} : vector<8x32xbf16>, vector<32x32xbf16>, vector<8x32xf32> -> vector<8x32xf32>
      %c0_61 = arith.constant 0 : index
      %c0_62 = arith.constant 0 : index
      %148 = vector.load %arg8[%c0_61, %c0_62] : memref<1x32xf32, #tpu.memory_space<vmem>>, vector<1x32xf32>
      %149 = vector.broadcast %148 : vector<1x32xf32> to vector<8x32xf32>
      %150 = arith.addf %147, %149 : vector<8x32xf32>
      %151 = arith.truncf %150 : vector<8x32xf32> to vector<8x32xbf16>
      %c0_63 = arith.constant 0 : index
      %c0_64 = arith.constant 0 : index
      %152 = vector.load %arg16[%c0_63, %c0_64] : memref<8x32xbf16, #tpu.memory_space<vmem>>, vector<8x32xbf16>
      tpu.vector_store %arg16[%c0_63, %c0_64], %151 {strides = array<i32>} : memref<8x32xbf16, #tpu.memory_space<vmem>>, vector<8x32xbf16>,
      %c0_65 = arith.constant 0 : index
      %c0_66 = arith.constant 0 : index
      %153 = vector.load %arg9[%c0_65, %c0_66] : memref<32x32xbf16, #tpu.memory_space<vmem>>, vector<32x32xbf16>
      %cst_67 = arith.constant dense<0.000000e+00> : vector<8x32xf32>
      %154 = tpu.matmul %145, %153, %cst_67 {dimension_numbers = #tpu.dot_dimension_numbers<[1], [0], [0], [1], [0, 0, 1, 1], [], []>} : vector<8x32xbf16>, vector<32x32xbf16>, vector<8x32xf32> -> vector<8x32xf32>
      %c0_68 = arith.constant 0 : index
      %c0_69 = arith.constant 0 : index
      %155 = vector.load %arg10[%c0_68, %c0_69] : memref<1x32xf32, #tpu.memory_space<vmem>>, vector<1x32xf32>
      %156 = vector.broadcast %155 : vector<1x32xf32> to vector<8x32xf32>
      %157 = arith.addf %154, %156 : vector<8x32xf32>
      %158 = arith.truncf %157 : vector<8x32xf32> to vector<8x32xbf16>
      %c0_70 = arith.constant 0 : index
      %c0_71 = arith.constant 0 : index
      %159 = vector.load %arg17[%c0_70, %c0_71] : memref<8x32xbf16, #tpu.memory_space<vmem>>, vector<8x32xbf16>
      tpu.vector_store %arg17[%c0_70, %c0_71], %158 {strides = array<i32>} : memref<8x32xbf16, #tpu.memory_space<vmem>>, vector<8x32xbf16>,
    } else {
    }
    %c0 = arith.constant 0 : index
    %c0_1 = arith.constant 0 : index
    %c0_2 = arith.constant 0 : index
    %3 = vector.load %arg2[%c0, %c0_1, %c0_2] : memref<1x8x32xbf16, #tpu.memory_space<vmem>>, vector<1x8x32xbf16>
    %4 = vector.shape_cast %3 : vector<1x8x32xbf16> to vector<8x32xbf16>
    %c0_3 = arith.constant 0 : index
    %c0_4 = arith.constant 0 : index
    %5 = vector.load %arg5[%c0_3, %c0_4] : memref<32x32xbf16, #tpu.memory_space<vmem>>, vector<32x32xbf16>
    %cst = arith.constant dense<0.000000e+00> : vector<8x32xf32>
    %6 = tpu.matmul %4, %5, %cst {dimension_numbers = #tpu.dot_dimension_numbers<[1], [0], [0], [1], [0, 0, 1, 1], [], []>} : vector<8x32xbf16>, vector<32x32xbf16>, vector<8x32xf32> -> vector<8x32xf32>
    %c0_5 = arith.constant 0 : index
    %c0_6 = arith.constant 0 : index
    %7 = vector.load %arg6[%c0_5, %c0_6] : memref<1x32xf32, #tpu.memory_space<vmem>>, vector<1x32xf32>
    %8 = vector.broadcast %7 : vector<1x32xf32> to vector<8x32xf32>
    %9 = arith.addf %6, %8 : vector<8x32xf32>
    %10 = arith.truncf %9 : vector<8x32xf32> to vector<8x32xbf16>
    %c0_7 = arith.constant 0 : index
    %c0_8 = arith.constant 0 : index
    %11 = vector.load %arg16[%c0_7, %c0_8] : memref<8x32xbf16, #tpu.memory_space<vmem>>, vector<8x32xbf16>
    %c0_9 = arith.constant 0 : index
    %c0_10 = arith.constant 0 : index
    %12 = vector.load %arg17[%c0_9, %c0_10] : memref<8x32xbf16, #tpu.memory_space<vmem>>, vector<8x32xbf16>
    %c0_11 = arith.constant 0 : index
    %c0_12 = arith.constant 0 : index
    %c0_13 = arith.constant 0 : index
    %13 = vector.load %arg4[%c0_11, %c0_12, %c0_13] : memref<1x1x8xi8, #tpu.memory_space<vmem>>, vector<1x1x8xi8>
    %14 = vector.shape_cast %13 : vector<1x1x8xi8> to vector<1x8xi8>
    %15 = arith.sitofp %14 : vector<1x8xi8> to vector<1x8xf32>
    %16 = vector.extract_strided_slice %10 {offsets = [0, 0], sizes = [8, 8], strides = [1, 1]} : vector<8x32xbf16> to vector<8x8xbf16>
    %17 = vector.extract_strided_slice %11 {offsets = [0, 0], sizes = [8, 8], strides = [1, 1]} : vector<8x32xbf16> to vector<8x8xbf16>
    %cst_14 = arith.constant dense<0.000000e+00> : vector<8x8xf32>
    %18 = tpu.matmul %16, %17, %cst_14 {dimension_numbers = #tpu.dot_dimension_numbers<[1], [1], [0], [0], [0, 0, 1, 0], [], []>} : vector<8x8xbf16>, vector<8x8xbf16>, vector<8x8xf32> -> vector<8x8xf32>
    %cst_15 = arith.constant 0.000000e+00 : f32
    %19 = vector.broadcast %cst_15 : f32 to vector<1x8xf32>
    %20 = arith.cmpf ogt, %15, %19 : vector<1x8xf32>
    %cst_16 = arith.constant -1.000000e+09 : f32
    %21 = vector.shape_cast %20 : vector<1x8xi1> to vector<1x8xi1>
    %22 = vector.broadcast %21 : vector<1x8xi1> to vector<8x8xi1>
    %23 = vector.broadcast %cst_16 : f32 to vector<8x8xf32>
    %24 = arith.select %22, %18, %23 : vector<8x8xi1>, vector<8x8xf32>
    %cst_17 = arith.constant dense<0xFF800000> : vector<8xf32>
    %25 = vector.multi_reduction <maximumf>, %24, %cst_17 [1] : vector<8x8xf32> to vector<8xf32>
    %26 = vector.shape_cast %25 : vector<8xf32> to vector<8x1xf32>
    %27 = vector.broadcast %26 : vector<8x1xf32> to vector<8x8xf32>
    %28 = arith.subf %24, %27 : vector<8x8xf32>
    %29 = math.exp %28 : vector<8x8xf32>
    %cst_18 = arith.constant dense<0.000000e+00> : vector<8xf32>
    %30 = vector.multi_reduction <add>, %29, %cst_18 [1] : vector<8x8xf32> to vector<8xf32>
    %31 = vector.shape_cast %30 : vector<8xf32> to vector<8x1xf32>
    %32 = arith.truncf %29 : vector<8x8xf32> to vector<8x8xbf16>
    %33 = vector.extract_strided_slice %12 {offsets = [0, 0], sizes = [8, 8], strides = [1, 1]} : vector<8x32xbf16> to vector<8x8xbf16>
    %cst_19 = arith.constant dense<0.000000e+00> : vector<8x8xf32>
    %34 = tpu.matmul %32, %33, %cst_19 {dimension_numbers = #tpu.dot_dimension_numbers<[1], [0], [0], [1], [0, 0, 1, 1], [], []>} : vector<8x8xbf16>, vector<8x8xbf16>, vector<8x8xf32> -> vector<8x8xf32>
    %35 = tpu.reciprocal %31 {approx = true} : vector<8x1xf32> -> vector<8x1xf32>
    %36 = vector.broadcast %35 : vector<8x1xf32> to vector<8x8xf32>
    %37 = arith.mulf %34, %36 : vector<8x8xf32>
    %38 = arith.truncf %37 : vector<8x8xf32> to vector<8x8xbf16>
    %39 = vector.extract_strided_slice %10 {offsets = [0, 8], sizes = [8, 8], strides = [1, 1]} : vector<8x32xbf16> to vector<8x8xbf16>
    %40 = vector.extract_strided_slice %11 {offsets = [0, 8], sizes = [8, 8], strides = [1, 1]} : vector<8x32xbf16> to vector<8x8xbf16>
    %cst_20 = arith.constant dense<0.000000e+00> : vector<8x8xf32>
    %41 = tpu.matmul %39, %40, %cst_20 {dimension_numbers = #tpu.dot_dimension_numbers<[1], [1], [0], [0], [0, 0, 1, 0], [], []>} : vector<8x8xbf16>, vector<8x8xbf16>, vector<8x8xf32> -> vector<8x8xf32>
    %cst_21 = arith.constant 0.000000e+00 : f32
    %42 = vector.broadcast %cst_21 : f32 to vector<1x8xf32>
    %43 = arith.cmpf ogt, %15, %42 : vector<1x8xf32>
    %cst_22 = arith.constant -1.000000e+09 : f32
    %44 = vector.shape_cast %43 : vector<1x8xi1> to vector<1x8xi1>
    %45 = vector.broadcast %44 : vector<1x8xi1> to vector<8x8xi1>
    %46 = vector.broadcast %cst_22 : f32 to vector<8x8xf32>
    %47 = arith.select %45, %41, %46 : vector<8x8xi1>, vector<8x8xf32>
    %cst_23 = arith.constant dense<0xFF800000> : vector<8xf32>
    %48 = vector.multi_reduction <maximumf>, %47, %cst_23 [1] : vector<8x8xf32> to vector<8xf32>
    %49 = vector.shape_cast %48 : vector<8xf32> to vector<8x1xf32>
    %50 = vector.broadcast %49 : vector<8x1xf32> to vector<8x8xf32>
    %51 = arith.subf %47, %50 : vector<8x8xf32>
    %52 = math.exp %51 : vector<8x8xf32>
    %cst_24 = arith.constant dense<0.000000e+00> : vector<8xf32>
    %53 = vector.multi_reduction <add>, %52, %cst_24 [1] : vector<8x8xf32> to vector<8xf32>
    %54 = vector.shape_cast %53 : vector<8xf32> to vector<8x1xf32>
    %55 = arith.truncf %52 : vector<8x8xf32> to vector<8x8xbf16>
    %56 = vector.extract_strided_slice %12 {offsets = [0, 8], sizes = [8, 8], strides = [1, 1]} : vector<8x32xbf16> to vector<8x8xbf16>
    %cst_25 = arith.constant dense<0.000000e+00> : vector<8x8xf32>
    %57 = tpu.matmul %55, %56, %cst_25 {dimension_numbers = #tpu.dot_dimension_numbers<[1], [0], [0], [1], [0, 0, 1, 1], [], []>} : vector<8x8xbf16>, vector<8x8xbf16>, vector<8x8xf32> -> vector<8x8xf32>
    %58 = tpu.reciprocal %54 {approx = true} : vector<8x1xf32> -> vector<8x1xf32>
    %59 = vector.broadcast %58 : vector<8x1xf32> to vector<8x8xf32>
    %60 = arith.mulf %57, %59 : vector<8x8xf32>
    %61 = arith.truncf %60 : vector<8x8xf32> to vector<8x8xbf16>
    %62 = vector.extract_strided_slice %10 {offsets = [0, 16], sizes = [8, 8], strides = [1, 1]} : vector<8x32xbf16> to vector<8x8xbf16>
    %63 = vector.extract_strided_slice %11 {offsets = [0, 16], sizes = [8, 8], strides = [1, 1]} : vector<8x32xbf16> to vector<8x8xbf16>
    %cst_26 = arith.constant dense<0.000000e+00> : vector<8x8xf32>
    %64 = tpu.matmul %62, %63, %cst_26 {dimension_numbers = #tpu.dot_dimension_numbers<[1], [1], [0], [0], [0, 0, 1, 0], [], []>} : vector<8x8xbf16>, vector<8x8xbf16>, vector<8x8xf32> -> vector<8x8xf32>
    %cst_27 = arith.constant 0.000000e+00 : f32
    %65 = vector.broadcast %cst_27 : f32 to vector<1x8xf32>
    %66 = arith.cmpf ogt, %15, %65 : vector<1x8xf32>
    %cst_28 = arith.constant -1.000000e+09 : f32
    %67 = vector.shape_cast %66 : vector<1x8xi1> to vector<1x8xi1>
    %68 = vector.broadcast %67 : vector<1x8xi1> to vector<8x8xi1>
    %69 = vector.broadcast %cst_28 : f32 to vector<8x8xf32>
    %70 = arith.select %68, %64, %69 : vector<8x8xi1>, vector<8x8xf32>
    %cst_29 = arith.constant dense<0xFF800000> : vector<8xf32>
    %71 = vector.multi_reduction <maximumf>, %70, %cst_29 [1] : vector<8x8xf32> to vector<8xf32>
    %72 = vector.shape_cast %71 : vector<8xf32> to vector<8x1xf32>
    %73 = vector.broadcast %72 : vector<8x1xf32> to vector<8x8xf32>
    %74 = arith.subf %70, %73 : vector<8x8xf32>
    %75 = math.exp %74 : vector<8x8xf32>
    %cst_30 = arith.constant dense<0.000000e+00> : vector<8xf32>
    %76 = vector.multi_reduction <add>, %75, %cst_30 [1] : vector<8x8xf32> to vector<8xf32>
    %77 = vector.shape_cast %76 : vector<8xf32> to vector<8x1xf32>
    %78 = arith.truncf %75 : vector<8x8xf32> to vector<8x8xbf16>
    %79 = vector.extract_strided_slice %12 {offsets = [0, 16], sizes = [8, 8], strides = [1, 1]} : vector<8x32xbf16> to vector<8x8xbf16>
    %cst_31 = arith.constant dense<0.000000e+00> : vector<8x8xf32>
    %80 = tpu.matmul %78, %79, %cst_31 {dimension_numbers = #tpu.dot_dimension_numbers<[1], [0], [0], [1], [0, 0, 1, 1], [], []>} : vector<8x8xbf16>, vector<8x8xbf16>, vector<8x8xf32> -> vector<8x8xf32>
    %81 = tpu.reciprocal %77 {approx = true} : vector<8x1xf32> -> vector<8x1xf32>
    %82 = vector.broadcast %81 : vector<8x1xf32> to vector<8x8xf32>
    %83 = arith.mulf %80, %82 : vector<8x8xf32>
    %84 = arith.truncf %83 : vector<8x8xf32> to vector<8x8xbf16>
    %85 = vector.extract_strided_slice %10 {offsets = [0, 24], sizes = [8, 8], strides = [1, 1]} : vector<8x32xbf16> to vector<8x8xbf16>
    %86 = vector.extract_strided_slice %11 {offsets = [0, 24], sizes = [8, 8], strides = [1, 1]} : vector<8x32xbf16> to vector<8x8xbf16>
    %cst_32 = arith.constant dense<0.000000e+00> : vector<8x8xf32>
    %87 = tpu.matmul %85, %86, %cst_32 {dimension_numbers = #tpu.dot_dimension_numbers<[1], [1], [0], [0], [0, 0, 1, 0], [], []>} : vector<8x8xbf16>, vector<8x8xbf16>, vector<8x8xf32> -> vector<8x8xf32>
    %cst_33 = arith.constant 0.000000e+00 : f32
    %88 = vector.broadcast %cst_33 : f32 to vector<1x8xf32>
    %89 = arith.cmpf ogt, %15, %88 : vector<1x8xf32>
    %cst_34 = arith.constant -1.000000e+09 : f32
    %90 = vector.shape_cast %89 : vector<1x8xi1> to vector<1x8xi1>
    %91 = vector.broadcast %90 : vector<1x8xi1> to vector<8x8xi1>
    %92 = vector.broadcast %cst_34 : f32 to vector<8x8xf32>
    %93 = arith.select %91, %87, %92 : vector<8x8xi1>, vector<8x8xf32>
    %cst_35 = arith.constant dense<0xFF800000> : vector<8xf32>
    %94 = vector.multi_reduction <maximumf>, %93, %cst_35 [1] : vector<8x8xf32> to vector<8xf32>
    %95 = vector.shape_cast %94 : vector<8xf32> to vector<8x1xf32>
    %96 = vector.broadcast %95 : vector<8x1xf32> to vector<8x8xf32>
    %97 = arith.subf %93, %96 : vector<8x8xf32>
    %98 = math.exp %97 : vector<8x8xf32>
    %cst_36 = arith.constant dense<0.000000e+00> : vector<8xf32>
    %99 = vector.multi_reduction <add>, %98, %cst_36 [1] : vector<8x8xf32> to vector<8xf32>
    %100 = vector.shape_cast %99 : vector<8xf32> to vector<8x1xf32>
    %101 = arith.truncf %98 : vector<8x8xf32> to vector<8x8xbf16>
    %102 = vector.extract_strided_slice %12 {offsets = [0, 24], sizes = [8, 8], strides = [1, 1]} : vector<8x32xbf16> to vector<8x8xbf16>
    %cst_37 = arith.constant dense<0.000000e+00> : vector<8x8xf32>
    %103 = tpu.matmul %101, %102, %cst_37 {dimension_numbers = #tpu.dot_dimension_numbers<[1], [0], [0], [1], [0, 0, 1, 1], [], []>} : vector<8x8xbf16>, vector<8x8xbf16>, vector<8x8xf32> -> vector<8x8xf32>
    %104 = tpu.reciprocal %100 {approx = true} : vector<8x1xf32> -> vector<8x1xf32>
    %105 = vector.broadcast %104 : vector<8x1xf32> to vector<8x8xf32>
    %106 = arith.mulf %103, %105 : vector<8x8xf32>
    %107 = arith.truncf %106 : vector<8x8xf32> to vector<8x8xbf16>
    %108 = tpu.concatenate %38, %61, %84, %107 in 1 : vector<8x8xbf16>, vector<8x8xbf16>, vector<8x8xbf16>, vector<8x8xbf16> -> vector<8x32xbf16>
    %c0_38 = arith.constant 0 : index
    %c0_39 = arith.constant 0 : index
    %109 = vector.load %arg11[%c0_38, %c0_39] : memref<32x32xbf16, #tpu.memory_space<vmem>>, vector<32x32xbf16>
    %cst_40 = arith.constant dense<0.000000e+00> : vector<8x32xf32>
    %110 = tpu.matmul %108, %109, %cst_40 {dimension_numbers = #tpu.dot_dimension_numbers<[1], [0], [0], [1], [0, 0, 1, 1], [], []>} : vector<8x32xbf16>, vector<32x32xbf16>, vector<8x32xf32> -> vector<8x32xf32>
    %c0_41 = arith.constant 0 : index
    %c0_42 = arith.constant 0 : index
    %111 = vector.load %arg12[%c0_41, %c0_42] : memref<1x32xf32, #tpu.memory_space<vmem>>, vector<1x32xf32>
    %112 = vector.broadcast %111 : vector<1x32xf32> to vector<8x32xf32>
    %113 = arith.addf %110, %112 : vector<8x32xf32>
    %114 = arith.extf %4 : vector<8x32xbf16> to vector<8x32xf32>
    %115 = arith.addf %114, %113 : vector<8x32xf32>
    %c0_43 = arith.constant 0 : index
    %c0_44 = arith.constant 0 : index
    %116 = vector.load %arg13[%c0_43, %c0_44] : memref<1x32xf32, #tpu.memory_space<vmem>>, vector<1x32xf32>
    %c0_45 = arith.constant 0 : index
    %c0_46 = arith.constant 0 : index
    %117 = vector.load %arg14[%c0_45, %c0_46] : memref<1x32xf32, #tpu.memory_space<vmem>>, vector<1x32xf32>
    %cst_47 = arith.constant dense<0.000000e+00> : vector<8xf32>
    %118 = vector.multi_reduction <add>, %115, %cst_47 [1] : vector<8x32xf32> to vector<8xf32>
    %119 = vector.shape_cast %118 : vector<8xf32> to vector<8x1xf32>
    %cst_48 = arith.constant 3.200000e+01 : f32
    %120 = vector.broadcast %cst_48 : f32 to vector<8x1xf32>
    %121 = arith.divf %119, %120 : vector<8x1xf32>
    %122 = vector.broadcast %121 : vector<8x1xf32> to vector<8x32xf32>
    %123 = arith.subf %115, %122 : vector<8x32xf32>
    %124 = arith.mulf %123, %123 : vector<8x32xf32>
    %cst_49 = arith.constant dense<0.000000e+00> : vector<8xf32>
    %125 = vector.multi_reduction <add>, %124, %cst_49 [1] : vector<8x32xf32> to vector<8xf32>
    %126 = vector.shape_cast %125 : vector<8xf32> to vector<8x1xf32>
    %cst_50 = arith.constant 3.200000e+01 : f32
    %127 = vector.broadcast %cst_50 : f32 to vector<8x1xf32>
    %128 = arith.divf %126, %127 : vector<8x1xf32>
    %129 = vector.broadcast %121 : vector<8x1xf32> to vector<8x32xf32>
    %130 = arith.subf %115, %129 : vector<8x32xf32>
    %cst_51 = arith.constant 9.99999974E-6 : f32
    %131 = vector.broadcast %cst_51 : f32 to vector<8x1xf32>
    %132 = arith.addf %128, %131 : vector<8x1xf32>
    %133 = math.rsqrt %132 : vector<8x1xf32>
    %134 = vector.broadcast %133 : vector<8x1xf32> to vector<8x32xf32>
    %135 = arith.mulf %130, %134 : vector<8x32xf32>
    %136 = vector.broadcast %116 : vector<1x32xf32> to vector<8x32xf32>
    %137 = arith.mulf %135, %136 : vector<8x32xf32>
    %138 = vector.broadcast %117 : vector<1x32xf32> to vector<8x32xf32>
    %139 = arith.addf %137, %138 : vector<8x32xf32>
    %140 = arith.truncf %139 : vector<8x32xf32> to vector<8x32xbf16>
    %c0_52 = arith.constant 0 : index
    %c0_53 = arith.constant 0 : index
    %c0_54 = arith.constant 0 : index
    %141 = vector.load %arg15[%c0_52, %c0_53, %c0_54] : memref<1x8x32xbf16, #tpu.memory_space<vmem>>, vector<1x8x32xbf16>
    %142 = vector.shape_cast %141 : vector<1x8x32xbf16> to vector<8x32xbf16>
    %143 = vector.shape_cast %140 : vector<8x32xbf16> to vector<1x8x32xbf16>
    tpu.vector_store %arg15[%c0_52, %c0_53, %c0_54], %143 {strides = array<i32>} : memref<1x8x32xbf16, #tpu.memory_space<vmem>>, vector<1x8x32xbf16>,
    return
  }
  func.func @transform_0(%arg0: i32, %arg1: i32) -> (i32, i32, i32) {
    %c0_i32 = arith.constant 0 : i32
    %c0_i32_0 = arith.constant 0 : i32
    return %arg0, %arg1, %c0_i32 : i32, i32, i32
  }
  func.func @transform_1(%arg0: i32, %arg1: i32) -> (i32, i32, i32) {
    %c0_i32 = arith.constant 0 : i32
    %c0_i32_0 = arith.constant 0 : i32
    %c0_i32_1 = arith.constant 0 : i32
    return %arg0, %c0_i32, %c0_i32_0 : i32, i32, i32
  }
  func.func @transform_2(%arg0: i32, %arg1: i32) -> (i32, i32, i32) {
    %c0_i32 = arith.constant 0 : i32
    %c0_i32_0 = arith.constant 0 : i32
    %c0_i32_1 = arith.constant 0 : i32
    return %arg0, %c0_i32, %c0_i32_0 : i32, i32, i32
  }
  func.func @transform_3(%arg0: i32, %arg1: i32) -> (i32, i32) {
    %c0_i32 = arith.constant 0 : i32
    %c0_i32_0 = arith.constant 0 : i32
    %c0_i32_1 = arith.constant 0 : i32
    return %c0_i32, %c0_i32_0 : i32, i32
  }
  func.func @transform_4(%arg0: i32, %arg1: i32) -> (i32, i32) {
    %c0_i32 = arith.constant 0 : i32
    %c0_i32_0 = arith.constant 0 : i32
    %c0_i32_1 = arith.constant 0 : i32
    return %c0_i32, %c0_i32_0 : i32, i32
  }
  func.func @transform_5(%arg0: i32, %arg1: i32) -> (i32, i32) {
    %c0_i32 = arith.constant 0 : i32
    %c0_i32_0 = arith.constant 0 : i32
    %c0_i32_1 = arith.constant 0 : i32
    return %c0_i32, %c0_i32_0 : i32, i32
  }
  func.func @transform_6(%arg0: i32, %arg1: i32) -> (i32, i32) {
    %c0_i32 = arith.constant 0 : i32
    %c0_i32_0 = arith.constant 0 : i32
    %c0_i32_1 = arith.constant 0 : i32
    return %c0_i32, %c0_i32_0 : i32, i32
  }
  func.func @transform_7(%arg0: i32, %arg1: i32) -> (i32, i32) {
    %c0_i32 = arith.constant 0 : i32
    %c0_i32_0 = arith.constant 0 : i32
    %c0_i32_1 = arith.constant 0 : i32
    return %c0_i32, %c0_i32_0 : i32, i32
  }
  func.func @transform_8(%arg0: i32, %arg1: i32) -> (i32, i32) {
    %c0_i32 = arith.constant 0 : i32
    %c0_i32_0 = arith.constant 0 : i32
    %c0_i32_1 = arith.constant 0 : i32
    return %c0_i32, %c0_i32_0 : i32, i32
  }
  func.func @transform_9(%arg0: i32, %arg1: i32) -> (i32, i32) {
    %c0_i32 = arith.constant 0 : i32
    %c0_i32_0 = arith.constant 0 : i32
    %c0_i32_1 = arith.constant 0 : i32
    return %c0_i32, %c0_i32_0 : i32, i32
  }
  func.func @transform_10(%arg0: i32, %arg1: i32) -> (i32, i32) {
    %c0_i32 = arith.constant 0 : i32
    %c0_i32_0 = arith.constant 0 : i32
    %c0_i32_1 = arith.constant 0 : i32
    return %c0_i32, %c0_i32_0 : i32, i32
  }
  func.func @transform_11(%arg0: i32, %arg1: i32) -> (i32, i32) {
    %c0_i32 = arith.constant 0 : i32
    %c0_i32_0 = arith.constant 0 : i32
    %c0_i32_1 = arith.constant 0 : i32
    return %c0_i32, %c0_i32_0 : i32, i32
  }
  func.func @transform_12(%arg0: i32, %arg1: i32) -> (i32, i32) {
    %c0_i32 = arith.constant 0 : i32
    %c0_i32_0 = arith.constant 0 : i32
    %c0_i32_1 = arith.constant 0 : i32
    return %c0_i32, %c0_i32_0 : i32, i32
  }
  func.func @transform_13(%arg0: i32, %arg1: i32) -> (i32, i32, i32) {
    %c0_i32 = arith.constant 0 : i32
    %c0_i32_0 = arith.constant 0 : i32
    return %arg0, %arg1, %c0_i32 : i32, i32, i32
  }
}

module attributes {stable_mosaic.version = 11 : i64} {
  func.func @kernel(%arg0: i32, %arg1: i32, %arg2: memref<16x32xbf16, #tpu.memory_space<vmem>>, %arg3: memref<32x64xbf16, #tpu.memory_space<vmem>>, %arg4: memref<1x64xf32, #tpu.memory_space<vmem>>, %arg5: memref<64x32xbf16, #tpu.memory_space<vmem>>, %arg6: memref<1x32xf32, #tpu.memory_space<vmem>>, %arg7: memref<1x32xf32, #tpu.memory_space<vmem>>, %arg8: memref<1x32xf32, #tpu.memory_space<vmem>>, %arg9: memref<16x32xbf16, #tpu.memory_space<vmem>>, %arg10: memref<16x32xf32, #tpu.memory_space<vmem>>) attributes {dimension_semantics = [#tpu.dimension_semantics<parallel>, #tpu.dimension_semantics<arbitrary>], iteration_bounds = array<i64: 1, 1>, scalar_prefetch = 0 : i64, scratch_operands = 1 : i64, tpu.core_type = #tpu.core_type<tc>, window_params = [{transform_indices = @transform_0, window_bounds = array<i64: 16, 32>}, {transform_indices = @transform_1, window_bounds = array<i64: 32, 64>}, {transform_indices = @transform_2, window_bounds = array<i64: 1, 64>}, {transform_indices = @transform_3, window_bounds = array<i64: 64, 32>}, {pipeline_mode = #tpu.pipeline_mode<synchronous>, transform_indices = @transform_4, window_bounds = array<i64: 1, 32>}, {pipeline_mode = #tpu.pipeline_mode<synchronous>, transform_indices = @transform_5, window_bounds = array<i64: 1, 32>}, {pipeline_mode = #tpu.pipeline_mode<synchronous>, transform_indices = @transform_6, window_bounds = array<i64: 1, 32>}, {transform_indices = @transform_7, window_bounds = array<i64: 16, 32>}]} {
    %c0_i32 = arith.constant 0 : i32
    %0 = arith.cmpi eq, %arg1, %c0_i32 : i32
    %1 = arith.extui %0 : i1 to i32
    %c0_i32_0 = arith.constant 0 : i32
    %2 = arith.cmpi ne, %1, %c0_i32_0 : i32
    scf.if %2 {
      %c0_16 = arith.constant 0 : index
      %c0_17 = arith.constant 0 : index
      %20 = vector.load %arg2[%c0_16, %c0_17] : memref<16x32xbf16, #tpu.memory_space<vmem>>, vector<16x32xbf16>
      %21 = arith.extf %20 : vector<16x32xbf16> to vector<16x32xf32>
      %c0_18 = arith.constant 0 : index
      %c0_19 = arith.constant 0 : index
      %22 = vector.load %arg6[%c0_18, %c0_19] : memref<1x32xf32, #tpu.memory_space<vmem>>, vector<1x32xf32>
      %23 = vector.broadcast %22 : vector<1x32xf32> to vector<16x32xf32>
      %24 = arith.addf %21, %23 : vector<16x32xf32>
      %c0_20 = arith.constant 0 : index
      %c0_21 = arith.constant 0 : index
      %25 = vector.load %arg10[%c0_20, %c0_21] : memref<16x32xf32, #tpu.memory_space<vmem>>, vector<16x32xf32>
      tpu.vector_store %arg10[%c0_20, %c0_21], %24 {strides = array<i32>} : memref<16x32xf32, #tpu.memory_space<vmem>>, vector<16x32xf32>,
    } else {
    }
    %c0 = arith.constant 0 : index
    %c0_1 = arith.constant 0 : index
    %3 = vector.load %arg2[%c0, %c0_1] : memref<16x32xbf16, #tpu.memory_space<vmem>>, vector<16x32xbf16>
    %c0_2 = arith.constant 0 : index
    %c0_3 = arith.constant 0 : index
    %4 = vector.load %arg3[%c0_2, %c0_3] : memref<32x64xbf16, #tpu.memory_space<vmem>>, vector<32x64xbf16>
    %cst = arith.constant dense<0.000000e+00> : vector<16x64xf32>
    %5 = tpu.matmul %3, %4, %cst {dimension_numbers = #tpu.dot_dimension_numbers<[1], [0], [0], [1], [0, 0, 1, 1], [], []>} : vector<16x32xbf16>, vector<32x64xbf16>, vector<16x64xf32> -> vector<16x64xf32>
    %c0_4 = arith.constant 0 : index
    %c0_5 = arith.constant 0 : index
    %6 = vector.load %arg4[%c0_4, %c0_5] : memref<1x64xf32, #tpu.memory_space<vmem>>, vector<1x64xf32>
    %7 = vector.broadcast %6 : vector<1x64xf32> to vector<16x64xf32>
    %8 = arith.addf %5, %7 : vector<16x64xf32>
    %cst_6 = arith.constant 0.000000e+00 : f32
    %9 = vector.broadcast %cst_6 : f32 to vector<16x64xf32>
    %10 = arith.maximumf %8, %9 : vector<16x64xf32>
    %c0_7 = arith.constant 0 : index
    %c0_8 = arith.constant 0 : index
    %11 = vector.load %arg10[%c0_7, %c0_8] : memref<16x32xf32, #tpu.memory_space<vmem>>, vector<16x32xf32>
    %12 = arith.truncf %10 : vector<16x64xf32> to vector<16x64xbf16>
    %c0_9 = arith.constant 0 : index
    %c0_10 = arith.constant 0 : index
    %13 = vector.load %arg5[%c0_9, %c0_10] : memref<64x32xbf16, #tpu.memory_space<vmem>>, vector<64x32xbf16>
    %cst_11 = arith.constant dense<0.000000e+00> : vector<16x32xf32>
    %14 = tpu.matmul %12, %13, %cst_11 {dimension_numbers = #tpu.dot_dimension_numbers<[1], [0], [0], [1], [0, 0, 1, 1], [], []>} : vector<16x64xbf16>, vector<64x32xbf16>, vector<16x32xf32> -> vector<16x32xf32>
    %15 = arith.addf %11, %14 : vector<16x32xf32>
    %c0_12 = arith.constant 0 : index
    %c0_13 = arith.constant 0 : index
    %16 = vector.load %arg10[%c0_12, %c0_13] : memref<16x32xf32, #tpu.memory_space<vmem>>, vector<16x32xf32>
    tpu.vector_store %arg10[%c0_12, %c0_13], %15 {strides = array<i32>} : memref<16x32xf32, #tpu.memory_space<vmem>>, vector<16x32xf32>,
    %c0_i32_14 = arith.constant 0 : i32
    %17 = arith.cmpi eq, %arg1, %c0_i32_14 : i32
    %18 = arith.extui %17 : i1 to i32
    %c0_i32_15 = arith.constant 0 : i32
    %19 = arith.cmpi ne, %18, %c0_i32_15 : i32
    scf.if %19 {
      %c0_16 = arith.constant 0 : index
      %c0_17 = arith.constant 0 : index
      %20 = vector.load %arg10[%c0_16, %c0_17] : memref<16x32xf32, #tpu.memory_space<vmem>>, vector<16x32xf32>
      %c0_18 = arith.constant 0 : index
      %c0_19 = arith.constant 0 : index
      %21 = vector.load %arg7[%c0_18, %c0_19] : memref<1x32xf32, #tpu.memory_space<vmem>>, vector<1x32xf32>
      %c0_20 = arith.constant 0 : index
      %c0_21 = arith.constant 0 : index
      %22 = vector.load %arg8[%c0_20, %c0_21] : memref<1x32xf32, #tpu.memory_space<vmem>>, vector<1x32xf32>
      %cst_22 = arith.constant dense<0.000000e+00> : vector<16xf32>
      %23 = vector.multi_reduction <add>, %20, %cst_22 [1] : vector<16x32xf32> to vector<16xf32>
      %24 = vector.shape_cast %23 : vector<16xf32> to vector<16x1xf32>
      %cst_23 = arith.constant 3.200000e+01 : f32
      %25 = vector.broadcast %cst_23 : f32 to vector<16x1xf32>
      %26 = arith.divf %24, %25 : vector<16x1xf32>
      %27 = vector.broadcast %26 : vector<16x1xf32> to vector<16x32xf32>
      %28 = arith.subf %20, %27 : vector<16x32xf32>
      %29 = arith.mulf %28, %28 : vector<16x32xf32>
      %cst_24 = arith.constant dense<0.000000e+00> : vector<16xf32>
      %30 = vector.multi_reduction <add>, %29, %cst_24 [1] : vector<16x32xf32> to vector<16xf32>
      %31 = vector.shape_cast %30 : vector<16xf32> to vector<16x1xf32>
      %cst_25 = arith.constant 3.200000e+01 : f32
      %32 = vector.broadcast %cst_25 : f32 to vector<16x1xf32>
      %33 = arith.divf %31, %32 : vector<16x1xf32>
      %34 = vector.broadcast %26 : vector<16x1xf32> to vector<16x32xf32>
      %35 = arith.subf %20, %34 : vector<16x32xf32>
      %cst_26 = arith.constant 9.99999974E-6 : f32
      %36 = vector.broadcast %cst_26 : f32 to vector<16x1xf32>
      %37 = arith.addf %33, %36 : vector<16x1xf32>
      %38 = math.rsqrt %37 : vector<16x1xf32>
      %39 = vector.broadcast %38 : vector<16x1xf32> to vector<16x32xf32>
      %40 = arith.mulf %35, %39 : vector<16x32xf32>
      %41 = vector.broadcast %21 : vector<1x32xf32> to vector<16x32xf32>
      %42 = arith.mulf %40, %41 : vector<16x32xf32>
      %43 = vector.broadcast %22 : vector<1x32xf32> to vector<16x32xf32>
      %44 = arith.addf %42, %43 : vector<16x32xf32>
      %45 = arith.truncf %44 : vector<16x32xf32> to vector<16x32xbf16>
      %c0_27 = arith.constant 0 : index
      %c0_28 = arith.constant 0 : index
      %46 = vector.load %arg9[%c0_27, %c0_28] : memref<16x32xbf16, #tpu.memory_space<vmem>>, vector<16x32xbf16>
      tpu.vector_store %arg9[%c0_27, %c0_28], %45 {strides = array<i32>} : memref<16x32xbf16, #tpu.memory_space<vmem>>, vector<16x32xbf16>,
    } else {
    }
    return
  }
  func.func @transform_0(%arg0: i32, %arg1: i32) -> (i32, i32) {
    %c0_i32 = arith.constant 0 : i32
    %c0_i32_0 = arith.constant 0 : i32
    return %arg0, %c0_i32 : i32, i32
  }
  func.func @transform_1(%arg0: i32, %arg1: i32) -> (i32, i32) {
    %c0_i32 = arith.constant 0 : i32
    %c0_i32_0 = arith.constant 0 : i32
    return %c0_i32, %arg1 : i32, i32
  }
  func.func @transform_2(%arg0: i32, %arg1: i32) -> (i32, i32) {
    %c0_i32 = arith.constant 0 : i32
    %c0_i32_0 = arith.constant 0 : i32
    return %c0_i32, %arg1 : i32, i32
  }
  func.func @transform_3(%arg0: i32, %arg1: i32) -> (i32, i32) {
    %c0_i32 = arith.constant 0 : i32
    %c0_i32_0 = arith.constant 0 : i32
    return %arg1, %c0_i32 : i32, i32
  }
  func.func @transform_4(%arg0: i32, %arg1: i32) -> (i32, i32) {
    %c0_i32 = arith.constant 0 : i32
    %c0_i32_0 = arith.constant 0 : i32
    %c0_i32_1 = arith.constant 0 : i32
    return %c0_i32, %c0_i32_0 : i32, i32
  }
  func.func @transform_5(%arg0: i32, %arg1: i32) -> (i32, i32) {
    %c0_i32 = arith.constant 0 : i32
    %c0_i32_0 = arith.constant 0 : i32
    %c0_i32_1 = arith.constant 0 : i32
    return %c0_i32, %c0_i32_0 : i32, i32
  }
  func.func @transform_6(%arg0: i32, %arg1: i32) -> (i32, i32) {
    %c0_i32 = arith.constant 0 : i32
    %c0_i32_0 = arith.constant 0 : i32
    %c0_i32_1 = arith.constant 0 : i32
    return %c0_i32, %c0_i32_0 : i32, i32
  }
  func.func @transform_7(%arg0: i32, %arg1: i32) -> (i32, i32) {
    %c0_i32 = arith.constant 0 : i32
    %c0_i32_0 = arith.constant 0 : i32
    return %arg0, %c0_i32 : i32, i32
  }
}

module attributes {stable_mosaic.version = 11 : i64} {
  func.func @kernel(%arg0: i32, %arg1: i32, %arg2: memref<1x8x32xbf16, #tpu.memory_space<vmem>>, %arg3: memref<1x8x32xbf16, #tpu.memory_space<vmem>>, %arg4: memref<1x8x8xi8, #tpu.memory_space<vmem>>, %arg5: memref<32x32xbf16, #tpu.memory_space<vmem>>, %arg6: memref<1x32xf32, #tpu.memory_space<vmem>>, %arg7: memref<32x32xbf16, #tpu.memory_space<vmem>>, %arg8: memref<1x32xf32, #tpu.memory_space<vmem>>, %arg9: memref<32x32xbf16, #tpu.memory_space<vmem>>, %arg10: memref<1x32xf32, #tpu.memory_space<vmem>>, %arg11: memref<32x32xbf16, #tpu.memory_space<vmem>>, %arg12: memref<1x32xf32, #tpu.memory_space<vmem>>, %arg13: memref<1x32xf32, #tpu.memory_space<vmem>>, %arg14: memref<1x32xf32, #tpu.memory_space<vmem>>, %arg15: memref<1x8x32xbf16, #tpu.memory_space<vmem>>, %arg16: memref<8x32xbf16, #tpu.memory_space<vmem>>, %arg17: memref<8x32xbf16, #tpu.memory_space<vmem>>) attributes {dimension_semantics = [#tpu.dimension_semantics<parallel>, #tpu.dimension_semantics<arbitrary>], iteration_bounds = array<i64: 2, 1>, scalar_prefetch = 0 : i64, scratch_operands = 2 : i64, tpu.core_type = #tpu.core_type<tc>, window_params = [{transform_indices = @transform_0, window_bounds = array<i64: 1, 8, 32>}, {transform_indices = @transform_1, window_bounds = array<i64: 1, 8, 32>}, {transform_indices = @transform_2, window_bounds = array<i64: 1, 8, 8>}, {pipeline_mode = #tpu.pipeline_mode<synchronous>, transform_indices = @transform_3, window_bounds = array<i64: 32, 32>}, {pipeline_mode = #tpu.pipeline_mode<synchronous>, transform_indices = @transform_4, window_bounds = array<i64: 1, 32>}, {pipeline_mode = #tpu.pipeline_mode<synchronous>, transform_indices = @transform_5, window_bounds = array<i64: 32, 32>}, {pipeline_mode = #tpu.pipeline_mode<synchronous>, transform_indices = @transform_6, window_bounds = array<i64: 1, 32>}, {pipeline_mode = #tpu.pipeline_mode<synchronous>, transform_indices = @transform_7, window_bounds = array<i64: 32, 32>}, {pipeline_mode = #tpu.pipeline_mode<synchronous>, transform_indices = @transform_8, window_bounds = array<i64: 1, 32>}, {pipeline_mode = #tpu.pipeline_mode<synchronous>, transform_indices = @transform_9, window_bounds = array<i64: 32, 32>}, {pipeline_mode = #tpu.pipeline_mode<synchronous>, transform_indices = @transform_10, window_bounds = array<i64: 1, 32>}, {pipeline_mode = #tpu.pipeline_mode<synchronous>, transform_indices = @transform_11, window_bounds = array<i64: 1, 32>}, {pipeline_mode = #tpu.pipeline_mode<synchronous>, transform_indices = @transform_12, window_bounds = array<i64: 1, 32>}, {transform_indices = @transform_13, window_bounds = array<i64: 1, 8, 32>}]} {
    %c0_i32 = arith.constant 0 : i32
    %0 = arith.cmpi eq, %arg1, %c0_i32 : i32
    %1 = arith.extui %0 : i1 to i32
    %c0_i32_0 = arith.constant 0 : i32
    %2 = arith.cmpi ne, %1, %c0_i32_0 : i32
    scf.if %2 {
      %c0_55 = arith.constant 0 : index
      %c0_56 = arith.constant 0 : index
      %c0_57 = arith.constant 0 : index
      %136 = vector.load %arg3[%c0_55, %c0_56, %c0_57] : memref<1x8x32xbf16, #tpu.memory_space<vmem>>, vector<1x8x32xbf16>
      %137 = vector.shape_cast %136 : vector<1x8x32xbf16> to vector<8x32xbf16>
      %c0_58 = arith.constant 0 : index
      %c0_59 = arith.constant 0 : index
      %138 = vector.load %arg7[%c0_58, %c0_59] : memref<32x32xbf16, #tpu.memory_space<vmem>>, vector<32x32xbf16>
      %cst_60 = arith.constant dense<0.000000e+00> : vector<8x32xf32>
      %139 = tpu.matmul %137, %138, %cst_60 {dimension_numbers = #tpu.dot_dimension_numbers<[1], [0], [0], [1], [0, 0, 1, 1], [], []>} : vector<8x32xbf16>, vector<32x32xbf16>, vector<8x32xf32> -> vector<8x32xf32>
      %c0_61 = arith.constant 0 : index
      %c0_62 = arith.constant 0 : index
      %140 = vector.load %arg8[%c0_61, %c0_62] : memref<1x32xf32, #tpu.memory_space<vmem>>, vector<1x32xf32>
      %141 = vector.broadcast %140 : vector<1x32xf32> to vector<8x32xf32>
      %142 = arith.addf %139, %141 : vector<8x32xf32>
      %143 = arith.truncf %142 : vector<8x32xf32> to vector<8x32xbf16>
      %c0_63 = arith.constant 0 : index
      %c0_64 = arith.constant 0 : index
      %144 = vector.load %arg16[%c0_63, %c0_64] : memref<8x32xbf16, #tpu.memory_space<vmem>>, vector<8x32xbf16>
      tpu.vector_store %arg16[%c0_63, %c0_64], %143 {strides = array<i32>} : memref<8x32xbf16, #tpu.memory_space<vmem>>, vector<8x32xbf16>,
      %c0_65 = arith.constant 0 : index
      %c0_66 = arith.constant 0 : index
      %145 = vector.load %arg9[%c0_65, %c0_66] : memref<32x32xbf16, #tpu.memory_space<vmem>>, vector<32x32xbf16>
      %cst_67 = arith.constant dense<0.000000e+00> : vector<8x32xf32>
      %146 = tpu.matmul %137, %145, %cst_67 {dimension_numbers = #tpu.dot_dimension_numbers<[1], [0], [0], [1], [0, 0, 1, 1], [], []>} : vector<8x32xbf16>, vector<32x32xbf16>, vector<8x32xf32> -> vector<8x32xf32>
      %c0_68 = arith.constant 0 : index
      %c0_69 = arith.constant 0 : index
      %147 = vector.load %arg10[%c0_68, %c0_69] : memref<1x32xf32, #tpu.memory_space<vmem>>, vector<1x32xf32>
      %148 = vector.broadcast %147 : vector<1x32xf32> to vector<8x32xf32>
      %149 = arith.addf %146, %148 : vector<8x32xf32>
      %150 = arith.truncf %149 : vector<8x32xf32> to vector<8x32xbf16>
      %c0_70 = arith.constant 0 : index
      %c0_71 = arith.constant 0 : index
      %151 = vector.load %arg17[%c0_70, %c0_71] : memref<8x32xbf16, #tpu.memory_space<vmem>>, vector<8x32xbf16>
      tpu.vector_store %arg17[%c0_70, %c0_71], %150 {strides = array<i32>} : memref<8x32xbf16, #tpu.memory_space<vmem>>, vector<8x32xbf16>,
    } else {
    }
    %c0 = arith.constant 0 : index
    %c0_1 = arith.constant 0 : index
    %c0_2 = arith.constant 0 : index
    %3 = vector.load %arg2[%c0, %c0_1, %c0_2] : memref<1x8x32xbf16, #tpu.memory_space<vmem>>, vector<1x8x32xbf16>
    %4 = vector.shape_cast %3 : vector<1x8x32xbf16> to vector<8x32xbf16>
    %c0_3 = arith.constant 0 : index
    %c0_4 = arith.constant 0 : index
    %5 = vector.load %arg5[%c0_3, %c0_4] : memref<32x32xbf16, #tpu.memory_space<vmem>>, vector<32x32xbf16>
    %cst = arith.constant dense<0.000000e+00> : vector<8x32xf32>
    %6 = tpu.matmul %4, %5, %cst {dimension_numbers = #tpu.dot_dimension_numbers<[1], [0], [0], [1], [0, 0, 1, 1], [], []>} : vector<8x32xbf16>, vector<32x32xbf16>, vector<8x32xf32> -> vector<8x32xf32>
    %c0_5 = arith.constant 0 : index
    %c0_6 = arith.constant 0 : index
    %7 = vector.load %arg6[%c0_5, %c0_6] : memref<1x32xf32, #tpu.memory_space<vmem>>, vector<1x32xf32>
    %8 = vector.broadcast %7 : vector<1x32xf32> to vector<8x32xf32>
    %9 = arith.addf %6, %8 : vector<8x32xf32>
    %10 = arith.truncf %9 : vector<8x32xf32> to vector<8x32xbf16>
    %c0_7 = arith.constant 0 : index
    %c0_8 = arith.constant 0 : index
    %11 = vector.load %arg16[%c0_7, %c0_8] : memref<8x32xbf16, #tpu.memory_space<vmem>>, vector<8x32xbf16>
    %c0_9 = arith.constant 0 : index
    %c0_10 = arith.constant 0 : index
    %12 = vector.load %arg17[%c0_9, %c0_10] : memref<8x32xbf16, #tpu.memory_space<vmem>>, vector<8x32xbf16>
    %c0_11 = arith.constant 0 : index
    %c0_12 = arith.constant 0 : index
    %c0_13 = arith.constant 0 : index
    %13 = vector.load %arg4[%c0_11, %c0_12, %c0_13] : memref<1x8x8xi8, #tpu.memory_space<vmem>>, vector<1x8x8xi8>
    %14 = vector.shape_cast %13 : vector<1x8x8xi8> to vector<8x8xi8>
    %15 = arith.sitofp %14 : vector<8x8xi8> to vector<8x8xf32>
    %16 = vector.extract_strided_slice %10 {offsets = [0, 0], sizes = [8, 8], strides = [1, 1]} : vector<8x32xbf16> to vector<8x8xbf16>
    %17 = vector.extract_strided_slice %11 {offsets = [0, 0], sizes = [8, 8], strides = [1, 1]} : vector<8x32xbf16> to vector<8x8xbf16>
    %cst_14 = arith.constant dense<0.000000e+00> : vector<8x8xf32>
    %18 = tpu.matmul %16, %17, %cst_14 {dimension_numbers = #tpu.dot_dimension_numbers<[1], [1], [0], [0], [0, 0, 1, 0], [], []>} : vector<8x8xbf16>, vector<8x8xbf16>, vector<8x8xf32> -> vector<8x8xf32>
    %cst_15 = arith.constant 0.000000e+00 : f32
    %19 = vector.broadcast %cst_15 : f32 to vector<8x8xf32>
    %20 = arith.cmpf ogt, %15, %19 : vector<8x8xf32>
    %cst_16 = arith.constant -1.000000e+09 : f32
    %21 = vector.broadcast %cst_16 : f32 to vector<8x8xf32>
    %22 = arith.select %20, %18, %21 : vector<8x8xi1>, vector<8x8xf32>
    %cst_17 = arith.constant dense<0xFF800000> : vector<8xf32>
    %23 = vector.multi_reduction <maximumf>, %22, %cst_17 [1] : vector<8x8xf32> to vector<8xf32>
    %24 = vector.shape_cast %23 : vector<8xf32> to vector<8x1xf32>
    %25 = vector.broadcast %24 : vector<8x1xf32> to vector<8x8xf32>
    %26 = arith.subf %22, %25 : vector<8x8xf32>
    %27 = math.exp %26 : vector<8x8xf32>
    %cst_18 = arith.constant dense<0.000000e+00> : vector<8xf32>
    %28 = vector.multi_reduction <add>, %27, %cst_18 [1] : vector<8x8xf32> to vector<8xf32>
    %29 = vector.shape_cast %28 : vector<8xf32> to vector<8x1xf32>
    %30 = arith.truncf %27 : vector<8x8xf32> to vector<8x8xbf16>
    %31 = vector.extract_strided_slice %12 {offsets = [0, 0], sizes = [8, 8], strides = [1, 1]} : vector<8x32xbf16> to vector<8x8xbf16>
    %cst_19 = arith.constant dense<0.000000e+00> : vector<8x8xf32>
    %32 = tpu.matmul %30, %31, %cst_19 {dimension_numbers = #tpu.dot_dimension_numbers<[1], [0], [0], [1], [0, 0, 1, 1], [], []>} : vector<8x8xbf16>, vector<8x8xbf16>, vector<8x8xf32> -> vector<8x8xf32>
    %33 = tpu.reciprocal %29 {approx = true} : vector<8x1xf32> -> vector<8x1xf32>
    %34 = vector.broadcast %33 : vector<8x1xf32> to vector<8x8xf32>
    %35 = arith.mulf %32, %34 : vector<8x8xf32>
    %36 = arith.truncf %35 : vector<8x8xf32> to vector<8x8xbf16>
    %37 = vector.extract_strided_slice %10 {offsets = [0, 8], sizes = [8, 8], strides = [1, 1]} : vector<8x32xbf16> to vector<8x8xbf16>
    %38 = vector.extract_strided_slice %11 {offsets = [0, 8], sizes = [8, 8], strides = [1, 1]} : vector<8x32xbf16> to vector<8x8xbf16>
    %cst_20 = arith.constant dense<0.000000e+00> : vector<8x8xf32>
    %39 = tpu.matmul %37, %38, %cst_20 {dimension_numbers = #tpu.dot_dimension_numbers<[1], [1], [0], [0], [0, 0, 1, 0], [], []>} : vector<8x8xbf16>, vector<8x8xbf16>, vector<8x8xf32> -> vector<8x8xf32>
    %cst_21 = arith.constant 0.000000e+00 : f32
    %40 = vector.broadcast %cst_21 : f32 to vector<8x8xf32>
    %41 = arith.cmpf ogt, %15, %40 : vector<8x8xf32>
    %cst_22 = arith.constant -1.000000e+09 : f32
    %42 = vector.broadcast %cst_22 : f32 to vector<8x8xf32>
    %43 = arith.select %41, %39, %42 : vector<8x8xi1>, vector<8x8xf32>
    %cst_23 = arith.constant dense<0xFF800000> : vector<8xf32>
    %44 = vector.multi_reduction <maximumf>, %43, %cst_23 [1] : vector<8x8xf32> to vector<8xf32>
    %45 = vector.shape_cast %44 : vector<8xf32> to vector<8x1xf32>
    %46 = vector.broadcast %45 : vector<8x1xf32> to vector<8x8xf32>
    %47 = arith.subf %43, %46 : vector<8x8xf32>
    %48 = math.exp %47 : vector<8x8xf32>
    %cst_24 = arith.constant dense<0.000000e+00> : vector<8xf32>
    %49 = vector.multi_reduction <add>, %48, %cst_24 [1] : vector<8x8xf32> to vector<8xf32>
    %50 = vector.shape_cast %49 : vector<8xf32> to vector<8x1xf32>
    %51 = arith.truncf %48 : vector<8x8xf32> to vector<8x8xbf16>
    %52 = vector.extract_strided_slice %12 {offsets = [0, 8], sizes = [8, 8], strides = [1, 1]} : vector<8x32xbf16> to vector<8x8xbf16>
    %cst_25 = arith.constant dense<0.000000e+00> : vector<8x8xf32>
    %53 = tpu.matmul %51, %52, %cst_25 {dimension_numbers = #tpu.dot_dimension_numbers<[1], [0], [0], [1], [0, 0, 1, 1], [], []>} : vector<8x8xbf16>, vector<8x8xbf16>, vector<8x8xf32> -> vector<8x8xf32>
    %54 = tpu.reciprocal %50 {approx = true} : vector<8x1xf32> -> vector<8x1xf32>
    %55 = vector.broadcast %54 : vector<8x1xf32> to vector<8x8xf32>
    %56 = arith.mulf %53, %55 : vector<8x8xf32>
    %57 = arith.truncf %56 : vector<8x8xf32> to vector<8x8xbf16>
    %58 = vector.extract_strided_slice %10 {offsets = [0, 16], sizes = [8, 8], strides = [1, 1]} : vector<8x32xbf16> to vector<8x8xbf16>
    %59 = vector.extract_strided_slice %11 {offsets = [0, 16], sizes = [8, 8], strides = [1, 1]} : vector<8x32xbf16> to vector<8x8xbf16>
    %cst_26 = arith.constant dense<0.000000e+00> : vector<8x8xf32>
    %60 = tpu.matmul %58, %59, %cst_26 {dimension_numbers = #tpu.dot_dimension_numbers<[1], [1], [0], [0], [0, 0, 1, 0], [], []>} : vector<8x8xbf16>, vector<8x8xbf16>, vector<8x8xf32> -> vector<8x8xf32>
    %cst_27 = arith.constant 0.000000e+00 : f32
    %61 = vector.broadcast %cst_27 : f32 to vector<8x8xf32>
    %62 = arith.cmpf ogt, %15, %61 : vector<8x8xf32>
    %cst_28 = arith.constant -1.000000e+09 : f32
    %63 = vector.broadcast %cst_28 : f32 to vector<8x8xf32>
    %64 = arith.select %62, %60, %63 : vector<8x8xi1>, vector<8x8xf32>
    %cst_29 = arith.constant dense<0xFF800000> : vector<8xf32>
    %65 = vector.multi_reduction <maximumf>, %64, %cst_29 [1] : vector<8x8xf32> to vector<8xf32>
    %66 = vector.shape_cast %65 : vector<8xf32> to vector<8x1xf32>
    %67 = vector.broadcast %66 : vector<8x1xf32> to vector<8x8xf32>
    %68 = arith.subf %64, %67 : vector<8x8xf32>
    %69 = math.exp %68 : vector<8x8xf32>
    %cst_30 = arith.constant dense<0.000000e+00> : vector<8xf32>
    %70 = vector.multi_reduction <add>, %69, %cst_30 [1] : vector<8x8xf32> to vector<8xf32>
    %71 = vector.shape_cast %70 : vector<8xf32> to vector<8x1xf32>
    %72 = arith.truncf %69 : vector<8x8xf32> to vector<8x8xbf16>
    %73 = vector.extract_strided_slice %12 {offsets = [0, 16], sizes = [8, 8], strides = [1, 1]} : vector<8x32xbf16> to vector<8x8xbf16>
    %cst_31 = arith.constant dense<0.000000e+00> : vector<8x8xf32>
    %74 = tpu.matmul %72, %73, %cst_31 {dimension_numbers = #tpu.dot_dimension_numbers<[1], [0], [0], [1], [0, 0, 1, 1], [], []>} : vector<8x8xbf16>, vector<8x8xbf16>, vector<8x8xf32> -> vector<8x8xf32>
    %75 = tpu.reciprocal %71 {approx = true} : vector<8x1xf32> -> vector<8x1xf32>
    %76 = vector.broadcast %75 : vector<8x1xf32> to vector<8x8xf32>
    %77 = arith.mulf %74, %76 : vector<8x8xf32>
    %78 = arith.truncf %77 : vector<8x8xf32> to vector<8x8xbf16>
    %79 = vector.extract_strided_slice %10 {offsets = [0, 24], sizes = [8, 8], strides = [1, 1]} : vector<8x32xbf16> to vector<8x8xbf16>
    %80 = vector.extract_strided_slice %11 {offsets = [0, 24], sizes = [8, 8], strides = [1, 1]} : vector<8x32xbf16> to vector<8x8xbf16>
    %cst_32 = arith.constant dense<0.000000e+00> : vector<8x8xf32>
    %81 = tpu.matmul %79, %80, %cst_32 {dimension_numbers = #tpu.dot_dimension_numbers<[1], [1], [0], [0], [0, 0, 1, 0], [], []>} : vector<8x8xbf16>, vector<8x8xbf16>, vector<8x8xf32> -> vector<8x8xf32>
    %cst_33 = arith.constant 0.000000e+00 : f32
    %82 = vector.broadcast %cst_33 : f32 to vector<8x8xf32>
    %83 = arith.cmpf ogt, %15, %82 : vector<8x8xf32>
    %cst_34 = arith.constant -1.000000e+09 : f32
    %84 = vector.broadcast %cst_34 : f32 to vector<8x8xf32>
    %85 = arith.select %83, %81, %84 : vector<8x8xi1>, vector<8x8xf32>
    %cst_35 = arith.constant dense<0xFF800000> : vector<8xf32>
    %86 = vector.multi_reduction <maximumf>, %85, %cst_35 [1] : vector<8x8xf32> to vector<8xf32>
    %87 = vector.shape_cast %86 : vector<8xf32> to vector<8x1xf32>
    %88 = vector.broadcast %87 : vector<8x1xf32> to vector<8x8xf32>
    %89 = arith.subf %85, %88 : vector<8x8xf32>
    %90 = math.exp %89 : vector<8x8xf32>
    %cst_36 = arith.constant dense<0.000000e+00> : vector<8xf32>
    %91 = vector.multi_reduction <add>, %90, %cst_36 [1] : vector<8x8xf32> to vector<8xf32>
    %92 = vector.shape_cast %91 : vector<8xf32> to vector<8x1xf32>
    %93 = arith.truncf %90 : vector<8x8xf32> to vector<8x8xbf16>
    %94 = vector.extract_strided_slice %12 {offsets = [0, 24], sizes = [8, 8], strides = [1, 1]} : vector<8x32xbf16> to vector<8x8xbf16>
    %cst_37 = arith.constant dense<0.000000e+00> : vector<8x8xf32>
    %95 = tpu.matmul %93, %94, %cst_37 {dimension_numbers = #tpu.dot_dimension_numbers<[1], [0], [0], [1], [0, 0, 1, 1], [], []>} : vector<8x8xbf16>, vector<8x8xbf16>, vector<8x8xf32> -> vector<8x8xf32>
    %96 = tpu.reciprocal %92 {approx = true} : vector<8x1xf32> -> vector<8x1xf32>
    %97 = vector.broadcast %96 : vector<8x1xf32> to vector<8x8xf32>
    %98 = arith.mulf %95, %97 : vector<8x8xf32>
    %99 = arith.truncf %98 : vector<8x8xf32> to vector<8x8xbf16>
    %100 = tpu.concatenate %36, %57, %78, %99 in 1 : vector<8x8xbf16>, vector<8x8xbf16>, vector<8x8xbf16>, vector<8x8xbf16> -> vector<8x32xbf16>
    %c0_38 = arith.constant 0 : index
    %c0_39 = arith.constant 0 : index
    %101 = vector.load %arg11[%c0_38, %c0_39] : memref<32x32xbf16, #tpu.memory_space<vmem>>, vector<32x32xbf16>
    %cst_40 = arith.constant dense<0.000000e+00> : vector<8x32xf32>
    %102 = tpu.matmul %100, %101, %cst_40 {dimension_numbers = #tpu.dot_dimension_numbers<[1], [0], [0], [1], [0, 0, 1, 1], [], []>} : vector<8x32xbf16>, vector<32x32xbf16>, vector<8x32xf32> -> vector<8x32xf32>
    %c0_41 = arith.constant 0 : index
    %c0_42 = arith.constant 0 : index
    %103 = vector.load %arg12[%c0_41, %c0_42] : memref<1x32xf32, #tpu.memory_space<vmem>>, vector<1x32xf32>
    %104 = vector.broadcast %103 : vector<1x32xf32> to vector<8x32xf32>
    %105 = arith.addf %102, %104 : vector<8x32xf32>
    %106 = arith.extf %4 : vector<8x32xbf16> to vector<8x32xf32>
    %107 = arith.addf %106, %105 : vector<8x32xf32>
    %c0_43 = arith.constant 0 : index
    %c0_44 = arith.constant 0 : index
    %108 = vector.load %arg13[%c0_43, %c0_44] : memref<1x32xf32, #tpu.memory_space<vmem>>, vector<1x32xf32>
    %c0_45 = arith.constant 0 : index
    %c0_46 = arith.constant 0 : index
    %109 = vector.load %arg14[%c0_45, %c0_46] : memref<1x32xf32, #tpu.memory_space<vmem>>, vector<1x32xf32>
    %cst_47 = arith.constant dense<0.000000e+00> : vector<8xf32>
    %110 = vector.multi_reduction <add>, %107, %cst_47 [1] : vector<8x32xf32> to vector<8xf32>
    %111 = vector.shape_cast %110 : vector<8xf32> to vector<8x1xf32>
    %cst_48 = arith.constant 3.200000e+01 : f32
    %112 = vector.broadcast %cst_48 : f32 to vector<8x1xf32>
    %113 = arith.divf %111, %112 : vector<8x1xf32>
    %114 = vector.broadcast %113 : vector<8x1xf32> to vector<8x32xf32>
    %115 = arith.subf %107, %114 : vector<8x32xf32>
    %116 = arith.mulf %115, %115 : vector<8x32xf32>
    %cst_49 = arith.constant dense<0.000000e+00> : vector<8xf32>
    %117 = vector.multi_reduction <add>, %116, %cst_49 [1] : vector<8x32xf32> to vector<8xf32>
    %118 = vector.shape_cast %117 : vector<8xf32> to vector<8x1xf32>
    %cst_50 = arith.constant 3.200000e+01 : f32
    %119 = vector.broadcast %cst_50 : f32 to vector<8x1xf32>
    %120 = arith.divf %118, %119 : vector<8x1xf32>
    %121 = vector.broadcast %113 : vector<8x1xf32> to vector<8x32xf32>
    %122 = arith.subf %107, %121 : vector<8x32xf32>
    %cst_51 = arith.constant 9.99999974E-6 : f32
    %123 = vector.broadcast %cst_51 : f32 to vector<8x1xf32>
    %124 = arith.addf %120, %123 : vector<8x1xf32>
    %125 = math.rsqrt %124 : vector<8x1xf32>
    %126 = vector.broadcast %125 : vector<8x1xf32> to vector<8x32xf32>
    %127 = arith.mulf %122, %126 : vector<8x32xf32>
    %128 = vector.broadcast %108 : vector<1x32xf32> to vector<8x32xf32>
    %129 = arith.mulf %127, %128 : vector<8x32xf32>
    %130 = vector.broadcast %109 : vector<1x32xf32> to vector<8x32xf32>
    %131 = arith.addf %129, %130 : vector<8x32xf32>
    %132 = arith.truncf %131 : vector<8x32xf32> to vector<8x32xbf16>
    %c0_52 = arith.constant 0 : index
    %c0_53 = arith.constant 0 : index
    %c0_54 = arith.constant 0 : index
    %133 = vector.load %arg15[%c0_52, %c0_53, %c0_54] : memref<1x8x32xbf16, #tpu.memory_space<vmem>>, vector<1x8x32xbf16>
    %134 = vector.shape_cast %133 : vector<1x8x32xbf16> to vector<8x32xbf16>
    %135 = vector.shape_cast %132 : vector<8x32xbf16> to vector<1x8x32xbf16>
    tpu.vector_store %arg15[%c0_52, %c0_53, %c0_54], %135 {strides = array<i32>} : memref<1x8x32xbf16, #tpu.memory_space<vmem>>, vector<1x8x32xbf16>,
    return
  }
  func.func @transform_0(%arg0: i32, %arg1: i32) -> (i32, i32, i32) {
    %c0_i32 = arith.constant 0 : i32
    %c0_i32_0 = arith.constant 0 : i32
    return %arg0, %arg1, %c0_i32 : i32, i32, i32
  }
  func.func @transform_1(%arg0: i32, %arg1: i32) -> (i32, i32, i32) {
    %c0_i32 = arith.constant 0 : i32
    %c0_i32_0 = arith.constant 0 : i32
    %c0_i32_1 = arith.constant 0 : i32
    return %arg0, %c0_i32, %c0_i32_0 : i32, i32, i32
  }
  func.func @transform_2(%arg0: i32, %arg1: i32) -> (i32, i32, i32) {
    %c0_i32 = arith.constant 0 : i32
    %c0_i32_0 = arith.constant 0 : i32
    return %arg0, %arg1, %c0_i32 : i32, i32, i32
  }
  func.func @transform_3(%arg0: i32, %arg1: i32) -> (i32, i32) {
    %c0_i32 = arith.constant 0 : i32
    %c0_i32_0 = arith.constant 0 : i32
    %c0_i32_1 = arith.constant 0 : i32
    return %c0_i32, %c0_i32_0 : i32, i32
  }
  func.func @transform_4(%arg0: i32, %arg1: i32) -> (i32, i32) {
    %c0_i32 = arith.constant 0 : i32
    %c0_i32_0 = arith.constant 0 : i32
    %c0_i32_1 = arith.constant 0 : i32
    return %c0_i32, %c0_i32_0 : i32, i32
  }
  func.func @transform_5(%arg0: i32, %arg1: i32) -> (i32, i32) {
    %c0_i32 = arith.constant 0 : i32
    %c0_i32_0 = arith.constant 0 : i32
    %c0_i32_1 = arith.constant 0 : i32
    return %c0_i32, %c0_i32_0 : i32, i32
  }
  func.func @transform_6(%arg0: i32, %arg1: i32) -> (i32, i32) {
    %c0_i32 = arith.constant 0 : i32
    %c0_i32_0 = arith.constant 0 : i32
    %c0_i32_1 = arith.constant 0 : i32
    return %c0_i32, %c0_i32_0 : i32, i32
  }
  func.func @transform_7(%arg0: i32, %arg1: i32) -> (i32, i32) {
    %c0_i32 = arith.constant 0 : i32
    %c0_i32_0 = arith.constant 0 : i32
    %c0_i32_1 = arith.constant 0 : i32
    return %c0_i32, %c0_i32_0 : i32, i32
  }
  func.func @transform_8(%arg0: i32, %arg1: i32) -> (i32, i32) {
    %c0_i32 = arith.constant 0 : i32
    %c0_i32_0 = arith.constant 0 : i32
    %c0_i32_1 = arith.constant 0 : i32
    return %c0_i32, %c0_i32_0 : i32, i32
  }
  func.func @transform_9(%arg0: i32, %arg1: i32) -> (i32, i32) {
    %c0_i32 = arith.constant 0 : i32
    %c0_i32_0 = arith.constant 0 : i32
    %c0_i32_1 = arith.constant 0 : i32
    return %c0_i32, %c0_i32_0 : i32, i32
  }
  func.func @transform_10(%arg0: i32, %arg1: i32) -> (i32, i32) {
    %c0_i32 = arith.constant 0 : i32
    %c0_i32_0 = arith.constant 0 : i32
    %c0_i32_1 = arith.constant 0 : i32
    return %c0_i32, %c0_i32_0 : i32, i32
  }
  func.func @transform_11(%arg0: i32, %arg1: i32) -> (i32, i32) {
    %c0_i32 = arith.constant 0 : i32
    %c0_i32_0 = arith.constant 0 : i32
    %c0_i32_1 = arith.constant 0 : i32
    return %c0_i32, %c0_i32_0 : i32, i32
  }
  func.func @transform_12(%arg0: i32, %arg1: i32) -> (i32, i32) {
    %c0_i32 = arith.constant 0 : i32
    %c0_i32_0 = arith.constant 0 : i32
    %c0_i32_1 = arith.constant 0 : i32
    return %c0_i32, %c0_i32_0 : i32, i32
  }
  func.func @transform_13(%arg0: i32, %arg1: i32) -> (i32, i32, i32) {
    %c0_i32 = arith.constant 0 : i32
    %c0_i32_0 = arith.constant 0 : i32
    return %arg0, %arg1, %c0_i32 : i32, i32, i32
  }
}

module attributes {stable_mosaic.version = 11 : i64} {
  func.func @kernel(%arg0: i32, %arg1: i32, %arg2: memref<16x32xbf16, #tpu.memory_space<vmem>>, %arg3: memref<32x64xbf16, #tpu.memory_space<vmem>>, %arg4: memref<1x64xf32, #tpu.memory_space<vmem>>, %arg5: memref<16x64xf32, #tpu.memory_space<vmem>>) attributes {dimension_semantics = [#tpu.dimension_semantics<parallel>, #tpu.dimension_semantics<parallel>], iteration_bounds = array<i64: 1, 1>, scalar_prefetch = 0 : i64, scratch_operands = 0 : i64, tpu.core_type = #tpu.core_type<tc>, window_params = [{transform_indices = @transform_0, window_bounds = array<i64: 16, 32>}, {transform_indices = @transform_1, window_bounds = array<i64: 32, 64>}, {transform_indices = @transform_2, window_bounds = array<i64: 1, 64>}, {transform_indices = @transform_3, window_bounds = array<i64: 16, 64>}]} {
    %c0 = arith.constant 0 : index
    %c0_0 = arith.constant 0 : index
    %0 = vector.load %arg2[%c0, %c0_0] : memref<16x32xbf16, #tpu.memory_space<vmem>>, vector<16x32xbf16>
    %c0_1 = arith.constant 0 : index
    %c0_2 = arith.constant 0 : index
    %1 = vector.load %arg3[%c0_1, %c0_2] : memref<32x64xbf16, #tpu.memory_space<vmem>>, vector<32x64xbf16>
    %cst = arith.constant dense<0.000000e+00> : vector<16x64xf32>
    %2 = tpu.matmul %0, %1, %cst {dimension_numbers = #tpu.dot_dimension_numbers<[1], [0], [0], [1], [0, 0, 1, 1], [], []>} : vector<16x32xbf16>, vector<32x64xbf16>, vector<16x64xf32> -> vector<16x64xf32>
    %c0_3 = arith.constant 0 : index
    %c0_4 = arith.constant 0 : index
    %3 = vector.load %arg4[%c0_3, %c0_4] : memref<1x64xf32, #tpu.memory_space<vmem>>, vector<1x64xf32>
    %4 = vector.broadcast %3 : vector<1x64xf32> to vector<16x64xf32>
    %5 = arith.addf %2, %4 : vector<16x64xf32>
    %c0_5 = arith.constant 0 : index
    %c0_6 = arith.constant 0 : index
    %6 = vector.load %arg5[%c0_5, %c0_6] : memref<16x64xf32, #tpu.memory_space<vmem>>, vector<16x64xf32>
    tpu.vector_store %arg5[%c0_5, %c0_6], %5 {strides = array<i32>} : memref<16x64xf32, #tpu.memory_space<vmem>>, vector<16x64xf32>,
    return
  }
  func.func @transform_0(%arg0: i32, %arg1: i32) -> (i32, i32) {
    %c0_i32 = arith.constant 0 : i32
    %c0_i32_0 = arith.constant 0 : i32
    return %arg1, %c0_i32 : i32, i32
  }
  func.func @transform_1(%arg0: i32, %arg1: i32) -> (i32, i32) {
    %c0_i32 = arith.constant 0 : i32
    %c0_i32_0 = arith.constant 0 : i32
    return %c0_i32, %arg0 : i32, i32
  }
  func.func @transform_2(%arg0: i32, %arg1: i32) -> (i32, i32) {
    %c0_i32 = arith.constant 0 : i32
    %c0_i32_0 = arith.constant 0 : i32
    return %c0_i32, %arg0 : i32, i32
  }
  func.func @transform_3(%arg0: i32, %arg1: i32) -> (i32, i32) {
    %c0_i32 = arith.constant 0 : i32
    return %arg1, %arg0 : i32, i32
  }
}

</mosaic_0001>

<llo_original>
// kernel: decoder_forward.9
$region0: #{decoder_forward.9}
  #allocation0 [shape = 'u32[]', space=smem, size = 0x4, offset = 0x4, fixed_abs, tag = 'smem constant byte address 0x4 - core index']
  #allocation1 [shape = 'u32[144,128]{1,0:T(1,128)}', space=vmem, size = 0x12000, scoped, tag = 'internal scratch']
  #allocation2 [shape = 'f32[16,32]{1,0:T(8,128)}', space=vmem, size = 0x2000, scoped, tag = 'scratch operand']
  %s0 = inlined_call_operand.vmem [shape: bf16[16,32], index: 0, kind: input, shape index: {}]
  %s1 = inlined_call_operand.vmem [shape: bf16[32,64], index: 1, kind: input, shape index: {}]
  %s2 = inlined_call_operand.vmem [shape: f32[1,64], index: 2, kind: input, shape index: {}]
  %s3 = inlined_call_operand.vmem [shape: bf16[64,32], index: 3, kind: input, shape index: {}]
  %s4 = inlined_call_operand.vmem [shape: f32[1,32], index: 4, kind: input, shape index: {}]
  %s5 = inlined_call_operand.vmem [shape: f32[1,32], index: 5, kind: input, shape index: {}]
  %s6 = inlined_call_operand.vmem [shape: f32[1,32], index: 6, kind: input, shape index: {}]
  %s7 = inlined_call_operand.vmem [shape: bf16[16,32], index: 7, kind: output, shape index: {}]
  %s8 = sld [smem:[#allocation0]]
  $region46: #{decoder_forward.9} parent=0
    _
  %s10 = ssub.s32 1, %s8
  %s11 = scalar_select 0, %s10, %s8
  // Predicated region
  $region2: #{decoder_forward.9} parent=0 // pred_check
    _
  $region3: #{decoder_forward.9} parent=0 // pred_check_branch
    %13 = sbr.rel (0) target = $region5
  $region4: #{decoder_forward.9} parent=0 // pred_region
    _
  $region5: #{decoder_forward.9} parent=0 // pred_fallthru
    _
  // Predicated region
  $region6: #{decoder_forward.9} parent=0 // pred_check
    _
  $region7: #{decoder_forward.9} parent=0 // pred_check_branch
    %15 = sbr.rel (0) target = $region9
  $region8: #{decoder_forward.9} parent=0 // pred_region
    _
  $region9: #{decoder_forward.9} parent=0 // pred_fallthru
    _
  // Predicated region
  $region10: #{decoder_forward.9} parent=0 // pred_check
    _
  $region11: #{decoder_forward.9} parent=0 // pred_check_branch
    %17 = sbr.rel (0) target = $region13
  $region12: #{decoder_forward.9} parent=0 // pred_region
    _
  $region13: #{decoder_forward.9} parent=0 // pred_fallthru
    _
  // Predicated region
  $region14: #{decoder_forward.9} parent=0 // pred_check
    _
  $region15: #{decoder_forward.9} parent=0 // pred_check_branch
    %19 = sbr.rel (0) target = $region17
  $region16: #{decoder_forward.9} parent=0 // pred_region
    _
  $region17: #{decoder_forward.9} parent=0 // pred_fallthru
    _
  // Predicated region
  $region18: #{decoder_forward.9} parent=0 // pred_check
    _
  $region19: #{decoder_forward.9} parent=0 // pred_check_branch
    %21 = sbr.rel (0) target = $region21
  $region20: #{decoder_forward.9} parent=0 // pred_region
    _
  $region21: #{decoder_forward.9} parent=0 // pred_fallthru
    _
  // Predicated region
  $region22: #{decoder_forward.9} parent=0 // pred_check
    _
  $region23: #{decoder_forward.9} parent=0 // pred_check_branch
    %23 = sbr.rel (0) target = $region25
  $region24: #{decoder_forward.9} parent=0 // pred_region
    _
  $region25: #{decoder_forward.9} parent=0 // pred_fallthru
    _
  // Predicated region
  $region26: #{decoder_forward.9} parent=0 // pred_check
    _
  $region27: #{decoder_forward.9} parent=0 // pred_check_branch
    %25 = sbr.rel (0) target = $region29
  $region28: #{decoder_forward.9} parent=0 // pred_region
    _
  $region29: #{decoder_forward.9} parent=0 // pred_fallthru
    _
  %p27 = scmp.eq.s32.totalorder 0, 0
  // Predicated region
  $region30: #{decoder_forward.9} parent=0 // pred_check
    %p28 = pneg %p27
  $region31: #{decoder_forward.9} parent=0 // pred_check_branch
    %30 = sbr.rel (%p28) target = $region33
  $region32: #{decoder_forward.9} parent=0 // pred_region
    %v31 = vld [vmem:[%s0] sm:$0xf]
    %v32 = vld [vmem:[%s0 + $0x4] sm:$0xf]
    %v33 = vunpack.c.l.bf16 %v31
    %v34 = vunpack.c.l.bf16 %v32
    %v35 = vld [vmem:[%s4] sm:$0x1]
    %v37 = vlaneseq
    %v38 = vshrl.u32 %v37, 7
    %v39 = vsub.s32 0, %v38
    %v40 = vrot.slane %v35, %v39
    %v42 = vadd.f32 %v33, %v40
    %v43 = vadd.f32 %v34, %v40
    %vm44 = vcmask 261120
    %45 = vst.msk [vmem:[#allocation2] sm:$0xff] %vm44, %v42
    %46 = vst.msk [vmem:[#allocation2 + $0x8] sm:$0xff] %vm44, %v43
  $region33: #{decoder_forward.9} parent=0 // pred_fallthru
    _
  %v47 = vld [vmem:[%s0] sm:$0xf]
  %v48 = vld [vmem:[%s0 + $0x4] sm:$0xf]
  %v49 = vld [vmem:[%s1] sm:$0xf]
  %v50 = vld [vmem:[%s1 + $0x4] sm:$0xf]
  %v51 = vld [vmem:[%s1 + $0x8] sm:$0xf]
  %v52 = vld [vmem:[%s1 + $0xc] sm:$0xf]
  %v53 = vld [vmem:[%s2] sm:$0x1]
  %v55 = vlaneseq
  %v56 = vshrl.u32 %v55, 7
  %v57 = vsub.s32 0, %v56
  %v58 = vrot.slane %v53, %v57
  %v62 = vunpack.c.l.b16 %v47
  %v63 = vunpack.c.l.b16 %v48
  %v64 = vpack.c.b16 %v63, %v62
  %v69 = vunpack.c.l.b16 %v49
  %v70 = vunpack.c.l.b16 %v50
  %v71 = vunpack.c.l.b16 %v51
  %v72 = vunpack.c.l.b16 %v52
  %v73 = vpack.c.b16 %v70, %v69
  %v74 = vpack.c.b16 %v72, %v71
  %vm77 = vcmask 261120
  %v79 = vsel %vm77, %v64, 0
  %81 = vmatprep.subr.bf16.mxu0 0
  %82 = vmatpush1.bf16.msra.mxu0 0
  %83 = vmatprep.subr.bf16.mxu0 0
  %84 = vmatpush1.bf16.msra.mxu0 0
  %85 = vmatprep.subr.bf16.mxu0 0
  %86 = vmatpush1.bf16.msra.mxu0 0
  %87 = vmatprep.subr.bf16.mxu0 0
  %88 = vmatpush1.bf16.msra.mxu0 0
  %89 = vmatprep.subr.bf16.mxu0 0
  %90 = vmatpush1.bf16.msra.mxu0 0
  %91 = vmatprep.subr.bf16.mxu0 0
  %92 = vmatpush1.bf16.msra.mxu0 0
  %93 = vmatprep.subr.bf16.mxu0 0
  %94 = vmatpush1.bf16.msra.mxu0 %v74
  %95 = vmatprep.subr.bf16.mxu0 0
  %96 = vmatpush1.bf16.msra.mxu0 %v73
  %97 = vmatprep.subr.bf16.mxu0 0
  %98 = vmatpush2.bf16.msra.mxu0 0
  %99 = vmatprep.subr.bf16.mxu0 0
  %100 = vmatpush2.bf16.msra.mxu0 0
  %101 = vmatprep.subr.bf16.mxu0 0
  %102 = vmatpush2.bf16.msra.mxu0 0
  %103 = vmatprep.subr.bf16.mxu0 0
  %104 = vmatpush2.bf16.msra.mxu0 0
  %105 = vmatprep.subr.bf16.mxu0 0
  %106 = vmatpush2.bf16.msra.mxu0 0
  %107 = vmatprep.subr.bf16.mxu0 0
  %108 = vmatpush2.bf16.msra.mxu0 0
  %109 = vmatprep.subr.bf16.mxu0 0
  %110 = vmatpush2.bf16.msra.mxu0 0
  %111 = vmatprep.subr.bf16.mxu0 0
  %112 = vmatpush2.bf16.msra.mxu0 0
  %113 = vmatprep.mubr.bf16.mxu0 0
  %114 = vmatmul.mubr.bf16.gmra.mxu0 %v79
  %v115 = vpop.f32.mrf.mxu0
  %v116 = vadd.f32 %v58, %v115
  %v117 = vpop.f32.mrf.mxu0
  %v118 = vpop.f32.mrf.mxu0
  %v119 = vadd.f32 %v58, %v118
  %v120 = vpop.f32.mrf.mxu0
  %121 = vdwg.mxu0
  %v122 = vmax.f32 %v116, 0.0
  %v123 = vmax.f32 %v119, 0.0
  %v124 = vld [vmem:[#allocation2] sm:$0xff]
  %v125 = vld [vmem:[#allocation2 + $0x8] sm:$0xff]
  %v126 = vpack.c.bf16 %v123, %v122
  %v127 = vld [vmem:[%s3] sm:$0xf]
  %v128 = vld [vmem:[%s3 + $0x4] sm:$0xf]
  %v129 = vld [vmem:[%s3 + $0x8] sm:$0xf]
  %v130 = vld [vmem:[%s3 + $0xc] sm:$0xf]
  %v131 = vld [vmem:[%s3 + $0x10] sm:$0xf]
  %v132 = vld [vmem:[%s3 + $0x14] sm:$0xf]
  %v133 = vld [vmem:[%s3 + $0x18] sm:$0xf]
  %v134 = vld [vmem:[%s3 + $0x1c] sm:$0xf]
  %v143 = vunpack.c.l.b16 %v127
  %v144 = vunpack.c.l.b16 %v128
  %v145 = vunpack.c.l.b16 %v129
  %v146 = vunpack.c.l.b16 %v130
  %v147 = vunpack.c.l.b16 %v131
  %v148 = vunpack.c.l.b16 %v132
  %v149 = vunpack.c.l.b16 %v133
  %v150 = vunpack.c.l.b16 %v134
  %v151 = vpack.c.b16 %v144, %v143
  %v152 = vpack.c.b16 %v146, %v145
  %v153 = vpack.c.b16 %v148, %v147
  %v154 = vpack.c.b16 %v150, %v149
  %vm159 = vcmask 523264
  %v161 = vsel %vm159, %v126, 0
  %163 = vmatprep.subr.bf16.mxu0 0
  %164 = vmatpush1.bf16.msra.mxu0 0
  %165 = vmatprep.subr.bf16.mxu0 0
  %166 = vmatpush1.bf16.msra.mxu0 0
  %167 = vmatprep.subr.bf16.mxu0 0
  %168 = vmatpush1.bf16.msra.mxu0 0
  %169 = vmatprep.subr.bf16.mxu0 0
  %170 = vmatpush1.bf16.msra.mxu0 0
  %171 = vmatprep.subr.bf16.mxu0 0
  %172 = vmatpush1.bf16.msra.mxu0 %v154
  %173 = vmatprep.subr.bf16.mxu0 0
  %174 = vmatpush1.bf16.msra.mxu0 %v153
  %175 = vmatprep.subr.bf16.mxu0 0
  %176 = vmatpush1.bf16.msra.mxu0 %v152
  %177 = vmatprep.subr.bf16.mxu0 0
  %178 = vmatpush1.bf16.msra.mxu0 %v151
  %179 = vmatprep.subr.bf16.mxu0 0
  %180 = vmatpush2.bf16.msra.mxu0 0
  %181 = vmatprep.subr.bf16.mxu0 0
  %182 = vmatpush2.bf16.msra.mxu0 0
  %183 = vmatprep.subr.bf16.mxu0 0
  %184 = vmatpush2.bf16.msra.mxu0 0
  %185 = vmatprep.subr.bf16.mxu0 0
  %186 = vmatpush2.bf16.msra.mxu0 0
  %187 = vmatprep.subr.bf16.mxu0 0
  %188 = vmatpush2.bf16.msra.mxu0 0
  %189 = vmatprep.subr.bf16.mxu0 0
  %190 = vmatpush2.bf16.msra.mxu0 0
  %191 = vmatprep.subr.bf16.mxu0 0
  %192 = vmatpush2.bf16.msra.mxu0 0
  %193 = vmatprep.subr.bf16.mxu0 0
  %194 = vmatpush2.bf16.msra.mxu0 0
  %195 = vmatprep.mubr.bf16.mxu0 0
  %196 = vmatmul.mubr.bf16.gmra.mxu0 %v161
  %v197 = vpop.f32.mrf.mxu0
  %v198 = vadd.f32 0.0, %v197
  %v199 = vpop.f32.mrf.mxu0
  %v200 = vpop.f32.mrf.mxu0
  %v201 = vadd.f32 0.0, %v200
  %v202 = vpop.f32.mrf.mxu0
  %203 = vdwg.mxu0
  %v204 = vadd.f32 %v124, %v198
  %v205 = vadd.f32 %v125, %v201
  %206 = vst.msk [vmem:[#allocation2] sm:$0xff] %vm77, %v204
  %207 = vst.msk [vmem:[#allocation2 + $0x8] sm:$0xff] %vm77, %v205
  // Predicated region
  $region34: #{decoder_forward.9} parent=0 // pred_check
    %p208 = pneg %p27
  $region35: #{decoder_forward.9} parent=0 // pred_check_branch
    %210 = sbr.rel (%p208) target = $region37
  $region36: #{decoder_forward.9} parent=0 // pred_region
    %v211 = vld [vmem:[#allocation2] sm:$0xff]
    %v212 = vld [vmem:[#allocation2 + $0x8] sm:$0xff]
    %v213 = vld [vmem:[%s5] sm:$0x1]
    %v214 = vld [vmem:[%s6] sm:$0x1]
    %v215 = vsel %vm77, %v211, 0.0
    %216 = vadd.xlane.f32.xlu0 %v215
    %v217 = vpop.xlane.xlu0 %216
    %v218 = vsel %vm77, %v212, 0.0
    %219 = vadd.xlane.f32.xlu0 %v218
    %v220 = vpop.xlane.xlu0 %219
    %v221 = vrcp.pop 32.0
    %v222 = vmul.f32 %v217, %v221
    %v223 = vmul.f32 %v220, %v221
    %v224 = vsub.f32 %v211, %v222
    %v225 = vsub.f32 %v212, %v223
    %v226 = vmul.f32 %v224, %v224
    %v227 = vmul.f32 %v225, %v225
    %v228 = vsel %vm77, %v226, 0.0
    %229 = vadd.xlane.f32.xlu0 %v228
    %v230 = vpop.xlane.xlu0 %229
    %v231 = vsel %vm77, %v227, 0.0
    %232 = vadd.xlane.f32.xlu0 %v231
    %v233 = vpop.xlane.xlu0 %232
    %v234 = vmul.f32 %v230, %v221
    %v235 = vmul.f32 %v233, %v221
    %v236 = vadd.f32 %v234, 1e-05
    %v237 = vadd.f32 %v235, 1e-05
    %v238 = vrsqrt.pop %v236
    %v239 = vrsqrt.pop %v237
    %v240 = vmul.f32 %v224, %v238
    %v241 = vmul.f32 %v225, %v239
    %v243 = vlaneseq
    %v244 = vshrl.u32 %v243, 7
    %v245 = vsub.s32 0, %v244
    %v246 = vrot.slane %v213, %v245
    %v248 = vmul.f32 %v240, %v246
    %v249 = vmul.f32 %v241, %v246
    %v251 = vlaneseq
    %v252 = vshrl.u32 %v251, 7
    %v253 = vsub.s32 0, %v252
    %v254 = vrot.slane %v214, %v253
    %v256 = vadd.f32 %v248, %v254
    %v257 = vadd.f32 %v249, %v254
    %v258 = vpack.c.bf16 %v257, %v256
    %v260 = vunpack.c.l.b16 %v258
    %v261 = vunpack.c.h.b16 %v258
    %v262 = vpack.c.b16 %v260, %v260
    %v263 = vpack.c.b16 %v261, %v261
    %vm266 = vcmask 257024
    %267 = vst.msk [vmem:[%s7] sm:$0xf] %vm266, %v262
    %268 = vst.msk [vmem:[%s7 + $0x4] sm:$0xf] %vm266, %v263
  $region37: #{decoder_forward.9} parent=0 // pred_fallthru
    _
  // Predicated region
  $region38: #{decoder_forward.9} parent=0 // pred_check
    _
  $region39: #{decoder_forward.9} parent=0 // pred_check_branch
    %270 = sbr.rel (0) target = $region41
  $region40: #{decoder_forward.9} parent=0 // pred_region
    _
  $region41: #{decoder_forward.9} parent=0 // pred_fallthru
    _
  // Predicated region
  $region42: #{decoder_forward.9} parent=0 // pred_check
    _
  $region43: #{decoder_forward.9} parent=0 // pred_check_branch
    %272 = sbr.rel (0) target = $region45
  $region44: #{decoder_forward.9} parent=0 // pred_region
    _
  $region45: #{decoder_forward.9} parent=0 // pred_fallthru
    _

// kernel: decoder_forward.13
$region0: #{decoder_forward.13}
  #allocation0 [shape = 'u32[]', space=smem, size = 0x4, offset = 0x4, fixed_abs, tag = 'smem constant byte address 0x4 - core index']
  #allocation1 [shape = 'u32[144,128]{1,0:T(1,128)}', space=vmem, size = 0x12000, scoped, tag = 'internal scratch']
  %s0 = inlined_call_operand.vmem [shape: bf16[16,32], index: 0, kind: input, shape index: {}]
  %s1 = inlined_call_operand.vmem [shape: bf16[32,64], index: 1, kind: input, shape index: {}]
  %s2 = inlined_call_operand.vmem [shape: f32[1,64], index: 2, kind: input, shape index: {}]
  %s3 = inlined_call_operand.hbm [shape: f32[16,64], index: 3, kind: output, shape index: {}]
  %s4 = sld [smem:[#allocation0]]
  $region22: #{decoder_forward.13} parent=0
    _
  %s6 = ssub.s32 1, %s4
  %s7 = scalar_select 0, %s6, %s4
  $region1: #{decoder_forward.13} parent=0
    #allocation2 [shape = 'u8[8192]{0}', space=vmem, size = 0x2000, scoped, tag = 'output window, operand 0, single buffered']
    #allocation3 [shape = 's32[1]{0}', space=sflag, size = 0x4, scoped, tag = 'scoped memory for decoder_forward.13']
    %8 = vsyncpa [#allocation3], 0
    // Predicated region
    $region2: #{decoder_forward.13} parent=1 // pred_check
      _
    $region3: #{decoder_forward.13} parent=1 // pred_check_branch
      %10 = sbr.rel (0) target = $region5
    $region4: #{decoder_forward.13} parent=1 // pred_region
      _
    $region5: #{decoder_forward.13} parent=1 // pred_fallthru
      _
    // Predicated region
    $region6: #{decoder_forward.13} parent=1 // pred_check
      _
    $region7: #{decoder_forward.13} parent=1 // pred_check_branch
      %12 = sbr.rel (0) target = $region9
    $region8: #{decoder_forward.13} parent=1 // pred_region
      _
    $region9: #{decoder_forward.13} parent=1 // pred_fallthru
      _
    // Predicated region
    $region10: #{decoder_forward.13} parent=1 // pred_check
      _
    $region11: #{decoder_forward.13} parent=1 // pred_check_branch
      %14 = sbr.rel (0) target = $region13
    $region12: #{decoder_forward.13} parent=1 // pred_region
      _
    $region13: #{decoder_forward.13} parent=1 // pred_fallthru
      _
    %v16 = vld [vmem:[%s0] sm:$0xf]
    %v17 = vld [vmem:[%s0 + $0x4] sm:$0xf]
    %v18 = vld [vmem:[%s1] sm:$0xf]
    %v19 = vld [vmem:[%s1 + $0x4] sm:$0xf]
    %v20 = vld [vmem:[%s1 + $0x8] sm:$0xf]
    %v21 = vld [vmem:[%s1 + $0xc] sm:$0xf]
    %v22 = vld [vmem:[%s2] sm:$0x1]
    %v24 = vlaneseq
    %v25 = vshrl.u32 %v24, 7
    %v26 = vsub.s32 0, %v25
    %v27 = vrot.slane %v22, %v26
    %v31 = vunpack.c.l.b16 %v16
    %v32 = vunpack.c.l.b16 %v17
    %v33 = vpack.c.b16 %v32, %v31
    %v38 = vunpack.c.l.b16 %v18
    %v39 = vunpack.c.l.b16 %v19
    %v40 = vunpack.c.l.b16 %v20
    %v41 = vunpack.c.l.b16 %v21
    %v42 = vpack.c.b16 %v39, %v38
    %v43 = vpack.c.b16 %v41, %v40
    %vm46 = vcmask 261120
    %v48 = vsel %vm46, %v33, 0
    %50 = vmatprep.subr.bf16.mxu0 0
    %51 = vmatpush1.bf16.msra.mxu0 0
    %52 = vmatprep.subr.bf16.mxu0 0
    %53 = vmatpush1.bf16.msra.mxu0 0
    %54 = vmatprep.subr.bf16.mxu0 0
    %55 = vmatpush1.bf16.msra.mxu0 0
    %56 = vmatprep.subr.bf16.mxu0 0
    %57 = vmatpush1.bf16.msra.mxu0 0
    %58 = vmatprep.subr.bf16.mxu0 0
    %59 = vmatpush1.bf16.msra.mxu0 0
    %60 = vmatprep.subr.bf16.mxu0 0
    %61 = vmatpush1.bf16.msra.mxu0 0
    %62 = vmatprep.subr.bf16.mxu0 0
    %63 = vmatpush1.bf16.msra.mxu0 %v43
    %64 = vmatprep.subr.bf16.mxu0 0
    %65 = vmatpush1.bf16.msra.mxu0 %v42
    %66 = vmatprep.subr.bf16.mxu0 0
    %67 = vmatpush2.bf16.msra.mxu0 0
    %68 = vmatprep.subr.bf16.mxu0 0
    %69 = vmatpush2.bf16.msra.mxu0 0
    %70 = vmatprep.subr.bf16.mxu0 0
    %71 = vmatpush2.bf16.msra.mxu0 0
    %72 = vmatprep.subr.bf16.mxu0 0
    %73 = vmatpush2.bf16.msra.mxu0 0
    %74 = vmatprep.subr.bf16.mxu0 0
    %75 = vmatpush2.bf16.msra.mxu0 0
    %76 = vmatprep.subr.bf16.mxu0 0
    %77 = vmatpush2.bf16.msra.mxu0 0
    %78 = vmatprep.subr.bf16.mxu0 0
    %79 = vmatpush2.bf16.msra.mxu0 0
    %80 = vmatprep.subr.bf16.mxu0 0
    %81 = vmatpush2.bf16.msra.mxu0 0
    %82 = vmatprep.mubr.bf16.mxu0 0
    %83 = vmatmul.mubr.bf16.gmra.mxu0 %v48
    %v84 = vpop.f32.mrf.mxu0
    %v85 = vadd.f32 %v27, %v84
    %v86 = vpop.f32.mrf.mxu0
    %v87 = vpop.f32.mrf.mxu0
    %v88 = vadd.f32 %v27, %v87
    %v89 = vpop.f32.mrf.mxu0
    %90 = vdwg.mxu0
    %vm91 = vcmask 523264
    %92 = vst.msk [vmem:[#allocation2] sm:$0xff] %vm91, %v85
    %93 = vst.msk [vmem:[#allocation2 + $0x8] sm:$0xff] %vm91, %v88
    // Predicated region
    $region14: #{decoder_forward.13} parent=1 // pred_check
      _
    $region15: #{decoder_forward.13} parent=1 // pred_check_branch
      %95 = sbr.rel (0) target = $region17
    $region16: #{decoder_forward.13} parent=1 // pred_region
      %s97 = ssub.s32 256, 256
      %98 = vsyncadd [#allocation3], %s97
      %s99 = sshll.u32 [#allocation2], 4
      %s100 = int_to_ptr.vmem [resolvable:$true] %s99
      %105 = dma.vmem_to_hbm [thread:$0]  %s100, 256, %s3, [#allocation3], 128, 128, 8
    $region17: #{decoder_forward.13} parent=1 // pred_fallthru
      _
    // Predicated region
    $region18: #{decoder_forward.13} parent=1 // pred_check
      _
    $region19: #{decoder_forward.13} parent=1 // pred_check_branch
      %107 = sbr.rel (0) target = $region21
    $region20: #{decoder_forward.13} parent=1 // pred_region
      %108 = dma.done [#allocation3], 256
    $region21: #{decoder_forward.13} parent=1 // pred_fallthru
      _
    %109 = vsyncpa [#allocation3], 1

// kernel: decoder_forward.7
$region0: #{decoder_forward.7}
  #allocation0 [shape = 'u32[]', space=smem, size = 0x4, offset = 0x4, fixed_abs, tag = 'smem constant byte address 0x4 - core index']
  #allocation1 [shape = 'u32[144,128]{1,0:T(1,128)}', space=vmem, size = 0x12000, scoped, tag = 'internal scratch']
  #allocation2 [shape = 'bf16[8,32]{1,0:T(8,128)(2,1)}', space=vmem, size = 0x800, scoped, tag = 'scratch operand']
  #allocation3 [shape = 'bf16[8,32]{1,0:T(8,128)(2,1)}', space=vmem, size = 0x800, scoped, tag = 'scratch operand']
  %s0 = inlined_call_operand.vmem [shape: bf16[2,8,32], index: 0, kind: input, shape index: {}, may-alias: {0,1}]
  %s1 = inlined_call_operand.vmem [shape: bf16[2,8,32], index: 1, kind: input, shape index: {}, may-alias: {0,1}]
  %s2 = inlined_call_operand.vmem [shape: s8[2,8,8], index: 2, kind: input, shape index: {}]
  %s3 = inlined_call_operand.vmem [shape: bf16[32,32], index: 3, kind: input, shape index: {}]
  %s4 = inlined_call_operand.vmem [shape: f32[1,32], index: 4, kind: input, shape index: {}]
  %s5 = inlined_call_operand.vmem [shape: bf16[32,32], index: 5, kind: input, shape index: {}]
  %s6 = inlined_call_operand.vmem [shape: f32[1,32], index: 6, kind: input, shape index: {}]
  %s7 = inlined_call_operand.vmem [shape: bf16[32,32], index: 7, kind: input, shape index: {}]
  %s8 = inlined_call_operand.vmem [shape: f32[1,32], index: 8, kind: input, shape index: {}]
  %s9 = inlined_call_operand.vmem [shape: bf16[32,32], index: 9, kind: input, shape index: {}]
  %s10 = inlined_call_operand.vmem [shape: f32[1,32], index: 10, kind: input, shape index: {}]
  %s11 = inlined_call_operand.vmem [shape: f32[1,32], index: 11, kind: input, shape index: {}]
  %s12 = inlined_call_operand.vmem [shape: f32[1,32], index: 12, kind: input, shape index: {}]
  %s13 = inlined_call_operand.vmem [shape: bf16[2,8,32], index: 13, kind: output, shape index: {}]
  %s14 = sld [smem:[#allocation0]]
  $region89: #{decoder_forward.7} parent=0
    _
  %s16 = ssub.s32 1, %s14
  %s17 = scalar_select 0, %s16, %s14
  loop: start=0, step=1, limit=4
  $region2: #{decoder_forward.7} parent=0 // loop_pre_header
    _
  $region3: #{decoder_forward.7} parent=0 // loop_header
    %s19 = sphi 0, %s23
    %p20 = scmp.ge.s32.totalorder %s19, 4
    %s26 = sphi 0, %s38
    %s27 = sphi 0, %s34
    %s28 = sphi 0, %s26
    %s29 = sphi 0, %s27
    %s30 = sphi 0, %s28
    %s31 = sphi 0, %s29
    %s43 = sphi 0, %s45
    %s46 = sphi 0, %s43
    %s47 = sphi 0, %s46
    %s63 = sphi 0, %s47
    %s69 = sphi 0, %s71
    %s72 = sphi 0, %s69
    %s73 = sphi 0, %s72
    %s89 = sphi 0, %s73
    %s97 = sphi 0, %s99
    %s100 = sphi 0, %s97
    %s101 = sphi 0, %s100
    %s117 = sphi 0, %s101
    %s121 = sphi 0, %s121
    %s123 = sphi 0, %s121
    %s124 = sphi 0, %s123
    %s138 = sphi 0, %s124
    %s142 = sphi 0, %s142
    %s144 = sphi 0, %s142
    %s145 = sphi 0, %s144
    %s159 = sphi 0, %s145
    %s163 = sphi 0, %s163
    %s165 = sphi 0, %s163
    %s166 = sphi 0, %s165
    %s180 = sphi 0, %s166
    %s184 = sphi 0, %s184
    %s186 = sphi 0, %s184
    %s187 = sphi 0, %s186
    %s201 = sphi 0, %s187
    %s205 = sphi 0, %s205
    %s207 = sphi 0, %s205
    %s208 = sphi 0, %s207
    %s222 = sphi 0, %s208
    %s226 = sphi 0, %s226
    %s228 = sphi 0, %s226
    %s229 = sphi 0, %s228
    %s243 = sphi 0, %s229
    %s247 = sphi 0, %s247
    %s249 = sphi 0, %s247
    %s250 = sphi 0, %s249
    %s264 = sphi 0, %s250
    %s268 = sphi 0, %s268
    %s270 = sphi 0, %s268
    %s271 = sphi 0, %s270
    %s285 = sphi 0, %s271
    %s289 = sphi 0, %s289
    %s291 = sphi 0, %s289
    %s292 = sphi 0, %s291
    %s306 = sphi 0, %s292
    %s310 = sphi 0, %s310
    %s312 = sphi 0, %s310
    %s313 = sphi 0, %s312
    %s327 = sphi 0, %s313
    %s335 = sphi 0, %s337
    %s338 = sphi 0, %s335
    %s339 = sphi 0, %s338
    %s355 = sphi 0, %s339
  $region4: #{decoder_forward.7} parent=0 // loop_header_branch
    %22 = sbr.rel (%p20) target = $region8
  $region5: #{decoder_forward.7} parent=0 // loop_body
    %s24 = ssub.s32 %s19, 1
    %s25 = ssub.s32 %s19, 2
    %s32 = sadd.s32 1, %s27
    %p33 = scmp.ge.s32.totalorder %s32, 1
    %s34 = scalar_select %p33, 0, %s32
    %s35 = sadd.s32 1, %s26
    %s36 = scalar_select %p33, %s35, %s26
    %p37 = scmp.ge.s32.totalorder %s36, 2
    %s38 = scalar_select %p37, 0, %s36
    %s39 = ssub.s32 %s26, %s38
    %s40 = ssub.s32 %s27, %s34
    %s41 = sor.u32 %s39, %s40
    %p42 = scmp.eq.s32.totalorder %s41, 0
    %s44 = sadd.s32 %s43, 1
    %s45 = scalar_select %p42, %s43, %s44
    %p48 = pneg %p42
    %p49 = scmp.eq.s32.totalorder %s19, 1
    %p50 = por %p48, %p49
    %p51 = scmp.ne.s32.totalorder %s43, %s46
    %p52 = scmp.eq.s32.totalorder %s19, 0
    %p53 = por %p51, %p52
    %p54 = scmp.ne.s32.totalorder %s43, %s46
    %p55 = scmp.eq.s32.totalorder %s24, 1
    %p56 = por %p54, %p55
    %p57 = scmp.ne.s32.totalorder %s46, %s47
    %p58 = scmp.eq.s32.totalorder %s24, 0
    %p59 = por %p57, %p58
    %p60 = scmp.ne.s32.totalorder %s46, %s47
    %p61 = scmp.eq.s32.totalorder %s25, 1
    %p62 = por %p60, %p61
    %p64 = scmp.ne.s32.totalorder %s47, %s63
    %p65 = scmp.eq.s32.totalorder %s25, 0
    %p66 = por %p64, %p65
    %s67 = ssub.s32 %s26, %s38
    %p68 = scmp.eq.s32.totalorder %s67, 0
    %s70 = sadd.s32 %s69, 1
    %s71 = scalar_select %p68, %s69, %s70
    %p74 = pneg %p68
    %p75 = scmp.eq.s32.totalorder %s19, 1
    %p76 = por %p74, %p75
    %p77 = scmp.ne.s32.totalorder %s69, %s72
    %p78 = scmp.eq.s32.totalorder %s19, 0
    %p79 = por %p77, %p78
    %p80 = scmp.ne.s32.totalorder %s69, %s72
    %p81 = scmp.eq.s32.totalorder %s24, 1
    %p82 = por %p80, %p81
    %p83 = scmp.ne.s32.totalorder %s72, %s73
    %p84 = scmp.eq.s32.totalorder %s24, 0
    %p85 = por %p83, %p84
    %p86 = scmp.ne.s32.totalorder %s72, %s73
    %p87 = scmp.eq.s32.totalorder %s25, 1
    %p88 = por %p86, %p87
    %p90 = scmp.ne.s32.totalorder %s73, %s89
    %p91 = scmp.eq.s32.totalorder %s25, 0
    %p92 = por %p90, %p91
    %s93 = ssub.s32 %s26, %s38
    %s94 = ssub.s32 %s27, %s34
    %s95 = sor.u32 %s93, %s94
    %p96 = scmp.eq.s32.totalorder %s95, 0
    %s98 = sadd.s32 %s97, 1
    %s99 = scalar_select %p96, %s97, %s98
    %p102 = pneg %p96
    %p103 = scmp.eq.s32.totalorder %s19, 1
    %p104 = por %p102, %p103
    %p105 = scmp.ne.s32.totalorder %s97, %s100
    %p106 = scmp.eq.s32.totalorder %s19, 0
    %p107 = por %p105, %p106
    %p108 = scmp.ne.s32.totalorder %s97, %s100
    %p109 = scmp.eq.s32.totalorder %s24, 1
    %p110 = por %p108, %p109
    %p111 = scmp.ne.s32.totalorder %s100, %s101
    %p112 = scmp.eq.s32.totalorder %s24, 0
    %p113 = por %p111, %p112
    %p114 = scmp.ne.s32.totalorder %s100, %s101
    %p115 = scmp.eq.s32.totalorder %s25, 1
    %p116 = por %p114, %p115
    %p118 = scmp.ne.s32.totalorder %s101, %s117
    %p119 = scmp.eq.s32.totalorder %s25, 0
    %p120 = por %p118, %p119
    %s122 = sadd.s32 %s121, 1
    %p125 = scmp.eq.s32.totalorder %s19, 1
    %p126 = scmp.ne.s32.totalorder %s121, %s123
    %p127 = scmp.eq.s32.totalorder %s19, 0
    %p128 = por %p126, %p127
    %p129 = scmp.ne.s32.totalorder %s121, %s123
    %p130 = scmp.eq.s32.totalorder %s24, 1
    %p131 = por %p129, %p130
    %p132 = scmp.ne.s32.totalorder %s123, %s124
    %p133 = scmp.eq.s32.totalorder %s24, 0
    %p134 = por %p132, %p133
    %p135 = scmp.ne.s32.totalorder %s123, %s124
    %p136 = scmp.eq.s32.totalorder %s25, 1
    %p137 = por %p135, %p136
    %p139 = scmp.ne.s32.totalorder %s124, %s138
    %p140 = scmp.eq.s32.totalorder %s25, 0
    %p141 = por %p139, %p140
    %s143 = sadd.s32 %s142, 1
    %p146 = scmp.eq.s32.totalorder %s19, 1
    %p147 = scmp.ne.s32.totalorder %s142, %s144
    %p148 = scmp.eq.s32.totalorder %s19, 0
    %p149 = por %p147, %p148
    %p150 = scmp.ne.s32.totalorder %s142, %s144
    %p151 = scmp.eq.s32.totalorder %s24, 1
    %p152 = por %p150, %p151
    %p153 = scmp.ne.s32.totalorder %s144, %s145
    %p154 = scmp.eq.s32.totalorder %s24, 0
    %p155 = por %p153, %p154
    %p156 = scmp.ne.s32.totalorder %s144, %s145
    %p157 = scmp.eq.s32.totalorder %s25, 1
    %p158 = por %p156, %p157
    %p160 = scmp.ne.s32.totalorder %s145, %s159
    %p161 = scmp.eq.s32.totalorder %s25, 0
    %p162 = por %p160, %p161
    %s164 = sadd.s32 %s163, 1
    %p167 = scmp.eq.s32.totalorder %s19, 1
    %p168 = scmp.ne.s32.totalorder %s163, %s165
    %p169 = scmp.eq.s32.totalorder %s19, 0
    %p170 = por %p168, %p169
    %p171 = scmp.ne.s32.totalorder %s163, %s165
    %p172 = scmp.eq.s32.totalorder %s24, 1
    %p173 = por %p171, %p172
    %p174 = scmp.ne.s32.totalorder %s165, %s166
    %p175 = scmp.eq.s32.totalorder %s24, 0
    %p176 = por %p174, %p175
    %p177 = scmp.ne.s32.totalorder %s165, %s166
    %p178 = scmp.eq.s32.totalorder %s25, 1
    %p179 = por %p177, %p178
    %p181 = scmp.ne.s32.totalorder %s166, %s180
    %p182 = scmp.eq.s32.totalorder %s25, 0
    %p183 = por %p181, %p182
    %s185 = sadd.s32 %s184, 1
    %p188 = scmp.eq.s32.totalorder %s19, 1
    %p189 = scmp.ne.s32.totalorder %s184, %s186
    %p190 = scmp.eq.s32.totalorder %s19, 0
    %p191 = por %p189, %p190
    %p192 = scmp.ne.s32.totalorder %s184, %s186
    %p193 = scmp.eq.s32.totalorder %s24, 1
    %p194 = por %p192, %p193
    %p195 = scmp.ne.s32.totalorder %s186, %s187
    %p196 = scmp.eq.s32.totalorder %s24, 0
    %p197 = por %p195, %p196
    %p198 = scmp.ne.s32.totalorder %s186, %s187
    %p199 = scmp.eq.s32.totalorder %s25, 1
    %p200 = por %p198, %p199
    %p202 = scmp.ne.s32.totalorder %s187, %s201
    %p203 = scmp.eq.s32.totalorder %s25, 0
    %p204 = por %p202, %p203
    %s206 = sadd.s32 %s205, 1
    %p209 = scmp.eq.s32.totalorder %s19, 1
    %p210 = scmp.ne.s32.totalorder %s205, %s207
    %p211 = scmp.eq.s32.totalorder %s19, 0
    %p212 = por %p210, %p211
    %p213 = scmp.ne.s32.totalorder %s205, %s207
    %p214 = scmp.eq.s32.totalorder %s24, 1
    %p215 = por %p213, %p214
    %p216 = scmp.ne.s32.totalorder %s207, %s208
    %p217 = scmp.eq.s32.totalorder %s24, 0
    %p218 = por %p216, %p217
    %p219 = scmp.ne.s32.totalorder %s207, %s208
    %p220 = scmp.eq.s32.totalorder %s25, 1
    %p221 = por %p219, %p220
    %p223 = scmp.ne.s32.totalorder %s208, %s222
    %p224 = scmp.eq.s32.totalorder %s25, 0
    %p225 = por %p223, %p224
    %s227 = sadd.s32 %s226, 1
    %p230 = scmp.eq.s32.totalorder %s19, 1
    %p231 = scmp.ne.s32.totalorder %s226, %s228
    %p232 = scmp.eq.s32.totalorder %s19, 0
    %p233 = por %p231, %p232
    %p234 = scmp.ne.s32.totalorder %s226, %s228
    %p235 = scmp.eq.s32.totalorder %s24, 1
    %p236 = por %p234, %p235
    %p237 = scmp.ne.s32.totalorder %s228, %s229
    %p238 = scmp.eq.s32.totalorder %s24, 0
    %p239 = por %p237, %p238
    %p240 = scmp.ne.s32.totalorder %s228, %s229
    %p241 = scmp.eq.s32.totalorder %s25, 1
    %p242 = por %p240, %p241
    %p244 = scmp.ne.s32.totalorder %s229, %s243
    %p245 = scmp.eq.s32.totalorder %s25, 0
    %p246 = por %p244, %p245
    %s248 = sadd.s32 %s247, 1
    %p251 = scmp.eq.s32.totalorder %s19, 1
    %p252 = scmp.ne.s32.totalorder %s247, %s249
    %p253 = scmp.eq.s32.totalorder %s19, 0
    %p254 = por %p252, %p253
    %p255 = scmp.ne.s32.totalorder %s247, %s249
    %p256 = scmp.eq.s32.totalorder %s24, 1
    %p257 = por %p255, %p256
    %p258 = scmp.ne.s32.totalorder %s249, %s250
    %p259 = scmp.eq.s32.totalorder %s24, 0
    %p260 = por %p258, %p259
    %p261 = scmp.ne.s32.totalorder %s249, %s250
    %p262 = scmp.eq.s32.totalorder %s25, 1
    %p263 = por %p261, %p262
    %p265 = scmp.ne.s32.totalorder %s250, %s264
    %p266 = scmp.eq.s32.totalorder %s25, 0
    %p267 = por %p265, %p266
    %s269 = sadd.s32 %s268, 1
    %p272 = scmp.eq.s32.totalorder %s19, 1
    %p273 = scmp.ne.s32.totalorder %s268, %s270
    %p274 = scmp.eq.s32.totalorder %s19, 0
    %p275 = por %p273, %p274
    %p276 = scmp.ne.s32.totalorder %s268, %s270
    %p277 = scmp.eq.s32.totalorder %s24, 1
    %p278 = por %p276, %p277
    %p279 = scmp.ne.s32.totalorder %s270, %s271
    %p280 = scmp.eq.s32.totalorder %s24, 0
    %p281 = por %p279, %p280
    %p282 = scmp.ne.s32.totalorder %s270, %s271
    %p283 = scmp.eq.s32.totalorder %s25, 1
    %p284 = por %p282, %p283
    %p286 = scmp.ne.s32.totalorder %s271, %s285
    %p287 = scmp.eq.s32.totalorder %s25, 0
    %p288 = por %p286, %p287
    %s290 = sadd.s32 %s289, 1
    %p293 = scmp.eq.s32.totalorder %s19, 1
    %p294 = scmp.ne.s32.totalorder %s289, %s291
    %p295 = scmp.eq.s32.totalorder %s19, 0
    %p296 = por %p294, %p295
    %p297 = scmp.ne.s32.totalorder %s289, %s291
    %p298 = scmp.eq.s32.totalorder %s24, 1
    %p299 = por %p297, %p298
    %p300 = scmp.ne.s32.totalorder %s291, %s292
    %p301 = scmp.eq.s32.totalorder %s24, 0
    %p302 = por %p300, %p301
    %p303 = scmp.ne.s32.totalorder %s291, %s292
    %p304 = scmp.eq.s32.totalorder %s25, 1
    %p305 = por %p303, %p304
    %p307 = scmp.ne.s32.totalorder %s292, %s306
    %p308 = scmp.eq.s32.totalorder %s25, 0
    %p309 = por %p307, %p308
    %s311 = sadd.s32 %s310, 1
    %p314 = scmp.eq.s32.totalorder %s19, 1
    %p315 = scmp.ne.s32.totalorder %s310, %s312
    %p316 = scmp.eq.s32.totalorder %s19, 0
    %p317 = por %p315, %p316
    %p318 = scmp.ne.s32.totalorder %s310, %s312
    %p319 = scmp.eq.s32.totalorder %s24, 1
    %p320 = por %p318, %p319
    %p321 = scmp.ne.s32.totalorder %s312, %s313
    %p322 = scmp.eq.s32.totalorder %s24, 0
    %p323 = por %p321, %p322
    %p324 = scmp.ne.s32.totalorder %s312, %s313
    %p325 = scmp.eq.s32.totalorder %s25, 1
    %p326 = por %p324, %p325
    %p328 = scmp.ne.s32.totalorder %s313, %s327
    %p329 = scmp.eq.s32.totalorder %s25, 0
    %p330 = por %p328, %p329
    %s331 = ssub.s32 %s26, %s38
    %s332 = ssub.s32 %s27, %s34
    %s333 = sor.u32 %s331, %s332
    %p334 = scmp.eq.s32.totalorder %s333, 0
    %s336 = sadd.s32 %s335, 1
    %s337 = scalar_select %p334, %s335, %s336
    %p340 = pneg %p334
    %p341 = scmp.eq.s32.totalorder %s19, 1
    %p342 = por %p340, %p341
    %p343 = scmp.ne.s32.totalorder %s335, %s338
    %p344 = scmp.eq.s32.totalorder %s19, 0
    %p345 = por %p343, %p344
    %p346 = scmp.ne.s32.totalorder %s335, %s338
    %p347 = scmp.eq.s32.totalorder %s24, 1
    %p348 = por %p346, %p347
    %p349 = scmp.ne.s32.totalorder %s338, %s339
    %p350 = scmp.eq.s32.totalorder %s24, 0
    %p351 = por %p349, %p350
    %p352 = scmp.ne.s32.totalorder %s338, %s339
    %p353 = scmp.eq.s32.totalorder %s25, 1
    %p354 = por %p352, %p353
    %p356 = scmp.ne.s32.totalorder %s339, %s355
    %p357 = scmp.eq.s32.totalorder %s25, 0
    %p358 = por %p356, %p357
    %p359 = scmp.le.s32.totalorder 1, %s19
    %p360 = scmp.lt.s32.totalorder %s19, 3
    %p361 = pnand %p359, %p360
    %p362 = pneg %p361
    // Predicated region
    $region9: #{decoder_forward.7} parent=5 // pred_check
      _
    $region10: #{decoder_forward.7} parent=5 // pred_check_branch
      %364 = sbr.rel (%p361) target = $region12
    $region11: #{decoder_forward.7} parent=5 // pred_region
      %s365 = ssub.s32 %s19, 1
      // Predicated region
      $region13: #{decoder_forward.7} parent=11 // pred_check
        %p366 = pneg %p134
      $region14: #{decoder_forward.7} parent=11 // pred_check_branch
        %368 = sbr.rel (%p366) target = $region16
      $region15: #{decoder_forward.7} parent=11 // pred_region
        _
      $region16: #{decoder_forward.7} parent=11 // pred_fallthru
        _
      // Predicated region
      $region17: #{decoder_forward.7} parent=11 // pred_check
        %p369 = pneg %p155
      $region18: #{decoder_forward.7} parent=11 // pred_check_branch
        %371 = sbr.rel (%p369) target = $region20
      $region19: #{decoder_forward.7} parent=11 // pred_region
        _
      $region20: #{decoder_forward.7} parent=11 // pred_fallthru
        _
      // Predicated region
      $region21: #{decoder_forward.7} parent=11 // pred_check
        %p372 = pneg %p176
      $region22: #{decoder_forward.7} parent=11 // pred_check_branch
        %374 = sbr.rel (%p372) target = $region24
      $region23: #{decoder_forward.7} parent=11 // pred_region
        _
      $region24: #{decoder_forward.7} parent=11 // pred_fallthru
        _
      // Predicated region
      $region25: #{decoder_forward.7} parent=11 // pred_check
        %p375 = pneg %p197
      $region26: #{decoder_forward.7} parent=11 // pred_check_branch
        %377 = sbr.rel (%p375) target = $region28
      $region27: #{decoder_forward.7} parent=11 // pred_region
        _
      $region28: #{decoder_forward.7} parent=11 // pred_fallthru
        _
      // Predicated region
      $region29: #{decoder_forward.7} parent=11 // pred_check
        %p378 = pneg %p218
      $region30: #{decoder_forward.7} parent=11 // pred_check_branch
        %380 = sbr.rel (%p378) target = $region32
      $region31: #{decoder_forward.7} parent=11 // pred_region
        _
      $region32: #{decoder_forward.7} parent=11 // pred_fallthru
        _
      // Predicated region
      $region33: #{decoder_forward.7} parent=11 // pred_check
        %p381 = pneg %p239
      $region34: #{decoder_forward.7} parent=11 // pred_check_branch
        %383 = sbr.rel (%p381) target = $region36
      $region35: #{decoder_forward.7} parent=11 // pred_region
        _
      $region36: #{decoder_forward.7} parent=11 // pred_fallthru
        _
      // Predicated region
      $region37: #{decoder_forward.7} parent=11 // pred_check
        %p384 = pneg %p260
      $region38: #{decoder_forward.7} parent=11 // pred_check_branch
        %386 = sbr.rel (%p384) target = $region40
      $region39: #{decoder_forward.7} parent=11 // pred_region
        _
      $region40: #{decoder_forward.7} parent=11 // pred_fallthru
        _
      // Predicated region
      $region41: #{decoder_forward.7} parent=11 // pred_check
        %p387 = pneg %p281
      $region42: #{decoder_forward.7} parent=11 // pred_check_branch
        %389 = sbr.rel (%p387) target = $region44
      $region43: #{decoder_forward.7} parent=11 // pred_region
        _
      $region44: #{decoder_forward.7} parent=11 // pred_fallthru
        _
      // Predicated region
      $region45: #{decoder_forward.7} parent=11 // pred_check
        %p390 = pneg %p302
      $region46: #{decoder_forward.7} parent=11 // pred_check_branch
        %392 = sbr.rel (%p390) target = $region48
      $region47: #{decoder_forward.7} parent=11 // pred_region
        _
      $region48: #{decoder_forward.7} parent=11 // pred_fallthru
        _
      // Predicated region
      $region49: #{decoder_forward.7} parent=11 // pred_check
        %p393 = pneg %p323
      $region50: #{decoder_forward.7} parent=11 // pred_check_branch
        %395 = sbr.rel (%p393) target = $region52
      $region51: #{decoder_forward.7} parent=11 // pred_region
        _
      $region52: #{decoder_forward.7} parent=11 // pred_fallthru
        _
    $region12: #{decoder_forward.7} parent=5 // pred_fallthru
      _
    %p396 = scmp.lt.s32.totalorder %s19, 2
    // Predicated region
    $region53: #{decoder_forward.7} parent=5 // pred_check
      %p397 = pneg %p396
    $region54: #{decoder_forward.7} parent=5 // pred_check_branch
      %399 = sbr.rel (%p397) target = $region56
    $region55: #{decoder_forward.7} parent=5 // pred_region
      // Predicated region
      $region57: #{decoder_forward.7} parent=55 // pred_check
        %p400 = pneg %p53
      $region58: #{decoder_forward.7} parent=55 // pred_check_branch
        %402 = sbr.rel (%p400) target = $region60
      $region59: #{decoder_forward.7} parent=55 // pred_region
        %p403 = scmp.lt.s32.totalorder %s26, 1
        %s404 = scalar_select %p403, %s26, 1
        %p405 = scmp.lt.s32.totalorder %s27, 0
        %s406 = scalar_select %p405, %s27, 0
        %s407 = sadd.s32 %s406, %s404
        %s408 = smul.addr %s407, 4
        %s409 = scalar_lea.vmem %s0, %s408
      $region60: #{decoder_forward.7} parent=55 // pred_fallthru
        _
      // Predicated region
      $region61: #{decoder_forward.7} parent=55 // pred_check
        %p410 = pneg %p79
      $region62: #{decoder_forward.7} parent=55 // pred_check_branch
        %412 = sbr.rel (%p410) target = $region64
      $region63: #{decoder_forward.7} parent=55 // pred_region
        %p413 = scmp.lt.s32.totalorder %s26, 1
        %s414 = scalar_select %p413, %s26, 1
        %s415 = smul.addr %s414, 4
        %s416 = scalar_lea.vmem %s1, %s415
      $region64: #{decoder_forward.7} parent=55 // pred_fallthru
        _
      // Predicated region
      $region65: #{decoder_forward.7} parent=55 // pred_check
        %p417 = pneg %p107
      $region66: #{decoder_forward.7} parent=55 // pred_check_branch
        %419 = sbr.rel (%p417) target = $region68
      $region67: #{decoder_forward.7} parent=55 // pred_region
        %p420 = scmp.lt.s32.totalorder %s26, 1
        %s421 = scalar_select %p420, %s26, 1
        %p422 = scmp.lt.s32.totalorder %s27, 0
        %s423 = scalar_select %p422, %s27, 0
        %s424 = sadd.s32 %s423, %s421
        %s425 = smul.addr %s424, 2
        %s426 = scalar_lea.vmem %s2, %s425
      $region68: #{decoder_forward.7} parent=55 // pred_fallthru
        _
    $region56: #{decoder_forward.7} parent=5 // pred_fallthru
      _
    %p427 = scmp.le.s32.totalorder 1, %s19
    %p428 = scmp.lt.s32.totalorder %s19, 3
    %p429 = pnand %p427, %p428
    %p430 = pneg %p429
    // Predicated region
    $region69: #{decoder_forward.7} parent=5 // pred_check
      _
    $region70: #{decoder_forward.7} parent=5 // pred_check_branch
      %432 = sbr.rel (%p429) target = $region72
    $region71: #{decoder_forward.7} parent=5 // pred_region
      %s433 = ssub.s32 %s19, 1
      %p434 = scmp.lt.s32.totalorder %s28, 1
      %s435 = scalar_select %p434, %s28, 1
      %p436 = scmp.lt.s32.totalorder %s29, 0
      %s437 = scalar_select %p436, %s29, 0
      %s438 = sadd.s32 %s437, %s435
      %s439 = smul.addr %s438, 4
      %s440 = scalar_lea.vmem %s0, %s439
      %p441 = pneg %p59
      %p442 = pneg %p56
      %p443 = scmp.lt.s32.totalorder %s28, 1
      %s444 = scalar_select %p443, %s28, 1
      %s445 = smul.addr %s444, 4
      %s446 = scalar_lea.vmem %s1, %s445
      %p447 = pneg %p85
      %p448 = pneg %p82
      %p449 = scmp.lt.s32.totalorder %s28, 1
      %s450 = scalar_select %p449, %s28, 1
      %p451 = scmp.lt.s32.totalorder %s29, 0
      %s452 = scalar_select %p451, %s29, 0
      %s453 = sadd.s32 %s452, %s450
      %s454 = smul.addr %s453, 2
      %s455 = scalar_lea.vmem %s2, %s454
      %p456 = pneg %p113
      %p457 = pneg %p110
      %p458 = pneg %p134
      %p459 = pneg %p131
      %p460 = pneg %p155
      %p461 = pneg %p152
      %p462 = pneg %p176
      %p463 = pneg %p173
      %p464 = pneg %p197
      %p465 = pneg %p194
      %p466 = pneg %p218
      %p467 = pneg %p215
      %p468 = pneg %p239
      %p469 = pneg %p236
      %p470 = pneg %p260
      %p471 = pneg %p257
      %p472 = pneg %p281
      %p473 = pneg %p278
      %p474 = pneg %p302
      %p475 = pneg %p299
      %p476 = pneg %p323
      %p477 = pneg %p320
      %p478 = pneg %p351
      %p479 = pneg %p348
      %p480 = scmp.lt.s32.totalorder %s28, 1
      %s481 = scalar_select %p480, %s28, 1
      %p482 = scmp.lt.s32.totalorder %s29, 0
      %s483 = scalar_select %p482, %s29, 0
      %s484 = sadd.s32 %s483, %s481
      %s485 = smul.addr %s484, 4
      %s486 = scalar_lea.vmem %s13, %s485
      %p487 = scmp.lt.s32.totalorder %s28, 1
      %s488 = scalar_select %p487, %s28, 1
      %p489 = scmp.lt.s32.totalorder %s29, 0
      %s490 = scalar_select %p489, %s29, 0
      %s491 = sadd.s32 %s490, %s488
      %s492 = smul.addr %s491, 4
      %s493 = scalar_lea.vmem %s0, %s492
      %p494 = scmp.lt.s32.totalorder %s28, 1
      %s495 = scalar_select %p494, %s28, 1
      %s496 = smul.addr %s495, 4
      %s497 = scalar_lea.vmem %s1, %s496
      %p498 = scmp.lt.s32.totalorder %s28, 1
      %s499 = scalar_select %p498, %s28, 1
      %p500 = scmp.lt.s32.totalorder %s29, 0
      %s501 = scalar_select %p500, %s29, 0
      %s502 = sadd.s32 %s501, %s499
      %s503 = smul.addr %s502, 2
      %s504 = scalar_lea.vmem %s2, %s503
      %p505 = scmp.lt.s32.totalorder %s28, 1
      %s506 = scalar_select %p505, %s28, 1
      %p507 = scmp.lt.s32.totalorder %s29, 0
      %s508 = scalar_select %p507, %s29, 0
      %s509 = sadd.s32 %s508, %s506
      %s510 = smul.addr %s509, 4
      %s511 = scalar_lea.vmem %s13, %s510
      %p513 = scmp.eq.s32.totalorder %s29, 0
      // Predicated region
      $region73: #{decoder_forward.7} parent=71 // pred_check
        %p514 = pneg %p513
      $region74: #{decoder_forward.7} parent=71 // pred_check_branch
        %516 = sbr.rel (%p514) target = $region76
      $region75: #{decoder_forward.7} parent=71 // pred_region
        %v517 = vld [vmem:[%s497] sm:$0xf]
        %v518 = vld [vmem:[%s5] sm:$0xf]
        %v519 = vld [vmem:[%s5 + $0x4] sm:$0xf]
        %v520 = vld [vmem:[%s5 + $0x8] sm:$0xf]
        %v521 = vld [vmem:[%s5 + $0xc] sm:$0xf]
        %v522 = vld [vmem:[%s6] sm:$0x1]
        %v524 = vlaneseq
        %v525 = vshrl.u32 %v524, 7
        %v526 = vsub.s32 0, %v525
        %v527 = vrot.slane %v522, %v526
        %v533 = vunpack.c.l.b16 %v518
        %v534 = vunpack.c.l.b16 %v519
        %v535 = vunpack.c.l.b16 %v520
        %v536 = vunpack.c.l.b16 %v521
        %v537 = vpack.c.b16 %v534, %v533
        %v538 = vpack.c.b16 %v536, %v535
        %vm541 = vcmask 261120
        %v543 = vsel %vm541, %v517, 0
        %545 = vmatprep.subr.bf16.mxu0 0
        %546 = vmatpush1.bf16.msra.mxu0 0
        %547 = vmatprep.subr.bf16.mxu0 0
        %548 = vmatpush1.bf16.msra.mxu0 0
        %549 = vmatprep.subr.bf16.mxu0 0
        %550 = vmatpush1.bf16.msra.mxu0 0
        %551 = vmatprep.subr.bf16.mxu0 0
        %552 = vmatpush1.bf16.msra.mxu0 0
        %553 = vmatprep.subr.bf16.mxu0 0
        %554 = vmatpush1.bf16.msra.mxu0 0
        %555 = vmatprep.subr.bf16.mxu0 0
        %556 = vmatpush1.bf16.msra.mxu0 0
        %557 = vmatprep.subr.bf16.mxu0 0
        %558 = vmatpush1.bf16.msra.mxu0 %v538
        %559 = vmatprep.subr.bf16.mxu0 0
        %560 = vmatpush1.bf16.msra.mxu0 %v537
        %561 = vmatprep.subr.bf16.mxu0 0
        %562 = vmatpush2.bf16.msra.mxu0 0
        %563 = vmatprep.subr.bf16.mxu0 0
        %564 = vmatpush2.bf16.msra.mxu0 0
        %565 = vmatprep.subr.bf16.mxu0 0
        %566 = vmatpush2.bf16.msra.mxu0 0
        %567 = vmatprep.subr.bf16.mxu0 0
        %568 = vmatpush2.bf16.msra.mxu0 0
        %569 = vmatprep.subr.bf16.mxu0 0
        %570 = vmatpush2.bf16.msra.mxu0 0
        %571 = vmatprep.subr.bf16.mxu0 0
        %572 = vmatpush2.bf16.msra.mxu0 0
        %573 = vmatprep.subr.bf16.mxu0 0
        %574 = vmatpush2.bf16.msra.mxu0 0
        %575 = vmatprep.subr.bf16.mxu0 0
        %576 = vmatpush2.bf16.msra.mxu0 0
        %577 = vmatprep.mubr.bf16.mxu0 0
        %578 = vmatmul.mubr.bf16.gmra.mxu0 %v543
        %v579 = vpop.f32.mrf.mxu0
        %v580 = vadd.f32 %v527, %v579
        %v581 = vpop.f32.mrf.mxu0
        %v582 = vpop.f32.mrf.mxu0
        %v583 = vpop.f32.mrf.mxu0
        %584 = vdwg.mxu0
        %v585 = vpack.c.bf16 %v580, %v580
        %vm586 = vcmask 257024
        %587 = vst.msk [vmem:[#allocation2] sm:$0xf] %vm586, %v585
        %v588 = vld [vmem:[%s7] sm:$0xf]
        %v589 = vld [vmem:[%s7 + $0x4] sm:$0xf]
        %v590 = vld [vmem:[%s7 + $0x8] sm:$0xf]
        %v591 = vld [vmem:[%s7 + $0xc] sm:$0xf]
        %v592 = vld [vmem:[%s8] sm:$0x1]
        %v594 = vlaneseq
        %v595 = vshrl.u32 %v594, 7
        %v596 = vsub.s32 0, %v595
        %v597 = vrot.slane %v592, %v596
        %v603 = vunpack.c.l.b16 %v588
        %v604 = vunpack.c.l.b16 %v589
        %v605 = vunpack.c.l.b16 %v590
        %v606 = vunpack.c.l.b16 %v591
        %v607 = vpack.c.b16 %v604, %v603
        %v608 = vpack.c.b16 %v606, %v605
        %611 = vmatprep.subr.bf16.mxu0 0
        %612 = vmatpush1.bf16.msra.mxu0 0
        %613 = vmatprep.subr.bf16.mxu0 0
        %614 = vmatpush1.bf16.msra.mxu0 0
        %615 = vmatprep.subr.bf16.mxu0 0
        %616 = vmatpush1.bf16.msra.mxu0 0
        %617 = vmatprep.subr.bf16.mxu0 0
        %618 = vmatpush1.bf16.msra.mxu0 0
        %619 = vmatprep.subr.bf16.mxu0 0
        %620 = vmatpush1.bf16.msra.mxu0 0
        %621 = vmatprep.subr.bf16.mxu0 0
        %622 = vmatpush1.bf16.msra.mxu0 0
        %623 = vmatprep.subr.bf16.mxu0 0
        %624 = vmatpush1.bf16.msra.mxu0 %v608
        %625 = vmatprep.subr.bf16.mxu0 0
        %626 = vmatpush1.bf16.msra.mxu0 %v607
        %627 = vmatprep.subr.bf16.mxu0 0
        %628 = vmatpush2.bf16.msra.mxu0 0
        %629 = vmatprep.subr.bf16.mxu0 0
        %630 = vmatpush2.bf16.msra.mxu0 0
        %631 = vmatprep.subr.bf16.mxu0 0
        %632 = vmatpush2.bf16.msra.mxu0 0
        %633 = vmatprep.subr.bf16.mxu0 0
        %634 = vmatpush2.bf16.msra.mxu0 0
        %635 = vmatprep.subr.bf16.mxu0 0
        %636 = vmatpush2.bf16.msra.mxu0 0
        %637 = vmatprep.subr.bf16.mxu0 0
        %638 = vmatpush2.bf16.msra.mxu0 0
        %639 = vmatprep.subr.bf16.mxu0 0
        %640 = vmatpush2.bf16.msra.mxu0 0
        %641 = vmatprep.subr.bf16.mxu0 0
        %642 = vmatpush2.bf16.msra.mxu0 0
        %643 = vmatprep.mubr.bf16.mxu0 0
        %644 = vmatmul.mubr.bf16.gmra.mxu0 %v543
        %v645 = vpop.f32.mrf.mxu0
        %v646 = vadd.f32 %v597, %v645
        %v647 = vpop.f32.mrf.mxu0
        %v648 = vpop.f32.mrf.mxu0
        %v649 = vpop.f32.mrf.mxu0
        %650 = vdwg.mxu0
        %v651 = vpack.c.bf16 %v646, %v646
        %652 = vst.msk [vmem:[#allocation3] sm:$0xf] %vm586, %v651
      $region76: #{decoder_forward.7} parent=71 // pred_fallthru
        _
      %v653 = vld [vmem:[%s493] sm:$0xf]
      %v654 = vld [vmem:[%s3] sm:$0xf]
      %v655 = vld [vmem:[%s3 + $0x4] sm:$0xf]
      %v656 = vld [vmem:[%s3 + $0x8] sm:$0xf]
      %v657 = vld [vmem:[%s3 + $0xc] sm:$0xf]
      %v658 = vld [vmem:[%s4] sm:$0x1]
      %v660 = vlaneseq
      %v661 = vshrl.u32 %v660, 7
      %v662 = vsub.s32 0, %v661
      %v663 = vrot.slane %v658, %v662
      %v669 = vunpack.c.l.b16 %v654
      %v670 = vunpack.c.l.b16 %v655
      %v671 = vunpack.c.l.b16 %v656
      %v672 = vunpack.c.l.b16 %v657
      %v673 = vpack.c.b16 %v670, %v669
      %v674 = vpack.c.b16 %v672, %v671
      %vm677 = vcmask 261120
      %v679 = vsel %vm677, %v653, 0
      %681 = vmatprep.subr.bf16.mxu0 0
      %682 = vmatpush1.bf16.msra.mxu0 0
      %683 = vmatprep.subr.bf16.mxu0 0
      %684 = vmatpush1.bf16.msra.mxu0 0
      %685 = vmatprep.subr.bf16.mxu0 0
      %686 = vmatpush1.bf16.msra.mxu0 0
      %687 = vmatprep.subr.bf16.mxu0 0
      %688 = vmatpush1.bf16.msra.mxu0 0
      %689 = vmatprep.subr.bf16.mxu0 0
      %690 = vmatpush1.bf16.msra.mxu0 0
      %691 = vmatprep.subr.bf16.mxu0 0
      %692 = vmatpush1.bf16.msra.mxu0 0
      %693 = vmatprep.subr.bf16.mxu0 0
      %694 = vmatpush1.bf16.msra.mxu0 %v674
      %695 = vmatprep.subr.bf16.mxu0 0
      %696 = vmatpush1.bf16.msra.mxu0 %v673
      %697 = vmatprep.subr.bf16.mxu0 0
      %698 = vmatpush2.bf16.msra.mxu0 0
      %699 = vmatprep.subr.bf16.mxu0 0
      %700 = vmatpush2.bf16.msra.mxu0 0
      %701 = vmatprep.subr.bf16.mxu0 0
      %702 = vmatpush2.bf16.msra.mxu0 0
      %703 = vmatprep.subr.bf16.mxu0 0
      %704 = vmatpush2.bf16.msra.mxu0 0
      %705 = vmatprep.subr.bf16.mxu0 0
      %706 = vmatpush2.bf16.msra.mxu0 0
      %707 = vmatprep.subr.bf16.mxu0 0
      %708 = vmatpush2.bf16.msra.mxu0 0
      %709 = vmatprep.subr.bf16.mxu0 0
      %710 = vmatpush2.bf16.msra.mxu0 0
      %711 = vmatprep.subr.bf16.mxu0 0
      %712 = vmatpush2.bf16.msra.mxu0 0
      %713 = vmatprep.mubr.bf16.mxu0 0
      %714 = vmatmul.mubr.bf16.gmra.mxu0 %v679
      %v715 = vpop.f32.mrf.mxu0
      %v716 = vadd.f32 %v663, %v715
      %v717 = vpop.f32.mrf.mxu0
      %v718 = vpop.f32.mrf.mxu0
      %v719 = vpop.f32.mrf.mxu0
      %720 = vdwg.mxu0
      %v721 = vpack.c.bf16 %v716, %v716
      %v722 = vld [vmem:[#allocation2] sm:$0xf]
      %v723 = vld [vmem:[#allocation3] sm:$0xf]
      %v724 = vld [vmem:[%s504] sm:$0x3]
      %v725 = vunpack.c.0.s8 %v724
      %v726 = vcvt.s32.f32 %v725
      %vm727 = vcmask 64512
      %v729 = vsel %vm727, %v721, 0
      %v732 = vsel %vm727, %v722, 0
      %734 = vmatprep.subr.bf16.mxu0 0
      %735 = vmatpush1.bf16.xpose.msra.mxu0 0
      %736 = vmatprep.subr.bf16.mxu0 0
      %737 = vmatpush1.bf16.xpose.msra.mxu0 0
      %738 = vmatprep.subr.bf16.mxu0 0
      %739 = vmatpush1.bf16.xpose.msra.mxu0 0
      %740 = vmatprep.subr.bf16.mxu0 0
      %741 = vmatpush1.bf16.xpose.msra.mxu0 0
      %742 = vmatprep.subr.bf16.mxu0 0
      %743 = vmatpush1.bf16.xpose.msra.mxu0 0
      %744 = vmatprep.subr.bf16.mxu0 0
      %745 = vmatpush1.bf16.xpose.msra.mxu0 0
      %746 = vmatprep.subr.bf16.mxu0 0
      %747 = vmatpush1.bf16.xpose.msra.mxu0 0
      %748 = vmatprep.subr.bf16.mxu0 0
      %749 = vmatpush1.bf16.xpose.msra.mxu0 %v732
      %750 = vmatprep.subr.bf16.mxu0 0
      %751 = vmatpush2.bf16.xpose.msra.mxu0 0
      %752 = vmatprep.subr.bf16.mxu0 0
      %753 = vmatpush2.bf16.xpose.msra.mxu0 0
      %754 = vmatprep.subr.bf16.mxu0 0
      %755 = vmatpush2.bf16.xpose.msra.mxu0 0
      %756 = vmatprep.subr.bf16.mxu0 0
      %757 = vmatpush2.bf16.xpose.msra.mxu0 0
      %758 = vmatprep.subr.bf16.mxu0 0
      %759 = vmatpush2.bf16.xpose.msra.mxu0 0
      %760 = vmatprep.subr.bf16.mxu0 0
      %761 = vmatpush2.bf16.xpose.msra.mxu0 0
      %762 = vmatprep.subr.bf16.mxu0 0
      %763 = vmatpush2.bf16.xpose.msra.mxu0 0
      %764 = vmatprep.subr.bf16.mxu0 0
      %765 = vmatpush2.bf16.xpose.msra.mxu0 0
      %766 = vmatprep.mubr.bf16.mxu0 0
      %767 = vmatmul.mubr.bf16.gmra.mxu0 %v729
      %v768 = vpop.f32.mrf.mxu0
      %v769 = vadd.f32 0.0, %v768
      %v770 = vpop.f32.mrf.mxu0
      %v771 = vpop.f32.mrf.mxu0
      %v772 = vpop.f32.mrf.mxu0
      %773 = vdwg.mxu0
      %vm774 = vcmp.gt.f32.partialorder %v726, 0.0
      %v775 = vsel %vm774, %v769, -1e+09
      %v776 = vsel %vm727, %v775, -inf
      %777 = vmax.xlane.f32.xlu0 %v776
      %v778 = vpop.xlane.xlu0 %777
      %v779 = vsub.f32 %v775, %v778
      %v780 = vmul.f32 %v779, 1.442695
      %v781 = vpow.pop %v780
      %v782 = vsel %vm727, %v781, 0.0
      %783 = vadd.xlane.f32.xlu0 %v782
      %v784 = vpop.xlane.xlu0 %783
      %v785 = vpack.c.bf16 %v781, %v781
      %v787 = vsel %vm727, %v785, 0
      %vm789 = vcmask 1043456
      %v791 = vsel %vm789, %v723, 0
      %793 = vmatprep.subr.bf16.mxu0 0
      %794 = vmatpush1.bf16.msra.mxu0 0
      %795 = vmatprep.subr.bf16.mxu0 0
      %796 = vmatpush1.bf16.msra.mxu0 0
      %797 = vmatprep.subr.bf16.mxu0 0
      %798 = vmatpush1.bf16.msra.mxu0 0
      %799 = vmatprep.subr.bf16.mxu0 0
      %800 = vmatpush1.bf16.msra.mxu0 0
      %801 = vmatprep.subr.bf16.mxu0 0
      %802 = vmatpush1.bf16.msra.mxu0 0
      %803 = vmatprep.subr.bf16.mxu0 0
      %804 = vmatpush1.bf16.msra.mxu0 0
      %805 = vmatprep.subr.bf16.mxu0 0
      %806 = vmatpush1.bf16.msra.mxu0 0
      %807 = vmatprep.subr.bf16.mxu0 0
      %808 = vmatpush1.bf16.msra.mxu0 %v791
      %809 = vmatprep.subr.bf16.mxu0 0
      %810 = vmatpush2.bf16.msra.mxu0 0
      %811 = vmatprep.subr.bf16.mxu0 0
      %812 = vmatpush2.bf16.msra.mxu0 0
      %813 = vmatprep.subr.bf16.mxu0 0
      %814 = vmatpush2.bf16.msra.mxu0 0
      %815 = vmatprep.subr.bf16.mxu0 0
      %816 = vmatpush2.bf16.msra.mxu0 0
      %817 = vmatprep.subr.bf16.mxu0 0
      %818 = vmatpush2.bf16.msra.mxu0 0
      %819 = vmatprep.subr.bf16.mxu0 0
      %820 = vmatpush2.bf16.msra.mxu0 0
      %821 = vmatprep.subr.bf16.mxu0 0
      %822 = vmatpush2.bf16.msra.mxu0 0
      %823 = vmatprep.subr.bf16.mxu0 0
      %824 = vmatpush2.bf16.msra.mxu0 0
      %825 = vmatprep.mubr.bf16.mxu0 0
      %826 = vmatmul.mubr.bf16.gmra.mxu0 %v787
      %v827 = vpop.f32.mrf.mxu0
      %v828 = vadd.f32 0.0, %v827
      %v829 = vpop.f32.mrf.mxu0
      %v830 = vpop.f32.mrf.mxu0
      %v831 = vpop.f32.mrf.mxu0
      %832 = vdwg.mxu0
      %v833 = vrcp.pop %v784
      %v834 = vmul.f32 %v828, %v833
      %v835 = vpack.c.bf16 %v834, %v834
      %837 = vrot.lane.b32.xlu0 %v721, 120
      %v838 = vpop.permute.xlu0 %837
      %v840 = vunpack.c.l.b16 %v722
      %v841 = vpack.c.b16 %v840, %v840
      %842 = vrot.lane.b32.xlu0 %v841, 120
      %v843 = vpop.permute.xlu0 %842
      %v845 = vsel %vm727, %v838, 0
      %v848 = vsel %vm727, %v843, 0
      %850 = vmatprep.subr.bf16.mxu0 0
      %851 = vmatpush1.bf16.xpose.msra.mxu0 0
      %852 = vmatprep.subr.bf16.mxu0 0
      %853 = vmatpush1.bf16.xpose.msra.mxu0 0
      %854 = vmatprep.subr.bf16.mxu0 0
      %855 = vmatpush1.bf16.xpose.msra.mxu0 0
      %856 = vmatprep.subr.bf16.mxu0 0
      %857 = vmatpush1.bf16.xpose.msra.mxu0 0
      %858 = vmatprep.subr.bf16.mxu0 0
      %859 = vmatpush1.bf16.xpose.msra.mxu0 0
      %860 = vmatprep.subr.bf16.mxu0 0
      %861 = vmatpush1.bf16.xpose.msra.mxu0 0
      %862 = vmatprep.subr.bf16.mxu0 0
      %863 = vmatpush1.bf16.xpose.msra.mxu0 0
      %864 = vmatprep.subr.bf16.mxu0 0
      %865 = vmatpush1.bf16.xpose.msra.mxu0 %v848
      %866 = vmatprep.subr.bf16.mxu0 0
      %867 = vmatpush2.bf16.xpose.msra.mxu0 0
      %868 = vmatprep.subr.bf16.mxu0 0
      %869 = vmatpush2.bf16.xpose.msra.mxu0 0
      %870 = vmatprep.subr.bf16.mxu0 0
      %871 = vmatpush2.bf16.xpose.msra.mxu0 0
      %872 = vmatprep.subr.bf16.mxu0 0
      %873 = vmatpush2.bf16.xpose.msra.mxu0 0
      %874 = vmatprep.subr.bf16.mxu0 0
      %875 = vmatpush2.bf16.xpose.msra.mxu0 0
      %876 = vmatprep.subr.bf16.mxu0 0
      %877 = vmatpush2.bf16.xpose.msra.mxu0 0
      %878 = vmatprep.subr.bf16.mxu0 0
      %879 = vmatpush2.bf16.xpose.msra.mxu0 0
      %880 = vmatprep.subr.bf16.mxu0 0
      %881 = vmatpush2.bf16.xpose.msra.mxu0 0
      %882 = vmatprep.mubr.bf16.mxu0 0
      %883 = vmatmul.mubr.bf16.gmra.mxu0 %v845
      %v884 = vpop.f32.mrf.mxu0
      %v885 = vadd.f32 0.0, %v884
      %v886 = vpop.f32.mrf.mxu0
      %v887 = vpop.f32.mrf.mxu0
      %v888 = vpop.f32.mrf.mxu0
      %889 = vdwg.mxu0
      %v890 = vsel %vm774, %v885, -1e+09
      %v891 = vsel %vm727, %v890, -inf
      %892 = vmax.xlane.f32.xlu0 %v891
      %v893 = vpop.xlane.xlu0 %892
      %v894 = vsub.f32 %v890, %v893
      %v895 = vmul.f32 %v894, 1.442695
      %v896 = vpow.pop %v895
      %v897 = vsel %vm727, %v896, 0.0
      %898 = vadd.xlane.f32.xlu0 %v897
      %v899 = vpop.xlane.xlu0 %898
      %v900 = vpack.c.bf16 %v896, %v896
      %v902 = vunpack.c.l.b16 %v723
      %v903 = vpack.c.b16 %v902, %v902
      %904 = vrot.lane.b32.xlu0 %v903, 120
      %v905 = vpop.permute.xlu0 %904
      %v907 = vsel %vm727, %v900, 0
      %v910 = vsel %vm789, %v905, 0
      %912 = vmatprep.subr.bf16.mxu0 0
      %913 = vmatpush1.bf16.msra.mxu0 0
      %914 = vmatprep.subr.bf16.mxu0 0
      %915 = vmatpush1.bf16.msra.mxu0 0
      %916 = vmatprep.subr.bf16.mxu0 0
      %917 = vmatpush1.bf16.msra.mxu0 0
      %918 = vmatprep.subr.bf16.mxu0 0
      %919 = vmatpush1.bf16.msra.mxu0 0
      %920 = vmatprep.subr.bf16.mxu0 0
      %921 = vmatpush1.bf16.msra.mxu0 0
      %922 = vmatprep.subr.bf16.mxu0 0
      %923 = vmatpush1.bf16.msra.mxu0 0
      %924 = vmatprep.subr.bf16.mxu0 0
      %925 = vmatpush1.bf16.msra.mxu0 0
      %926 = vmatprep.subr.bf16.mxu0 0
      %927 = vmatpush1.bf16.msra.mxu0 %v910
      %928 = vmatprep.subr.bf16.mxu0 0
      %929 = vmatpush2.bf16.msra.mxu0 0
      %930 = vmatprep.subr.bf16.mxu0 0
      %931 = vmatpush2.bf16.msra.mxu0 0
      %932 = vmatprep.subr.bf16.mxu0 0
      %933 = vmatpush2.bf16.msra.mxu0 0
      %934 = vmatprep.subr.bf16.mxu0 0
      %935 = vmatpush2.bf16.msra.mxu0 0
      %936 = vmatprep.subr.bf16.mxu0 0
      %937 = vmatpush2.bf16.msra.mxu0 0
      %938 = vmatprep.subr.bf16.mxu0 0
      %939 = vmatpush2.bf16.msra.mxu0 0
      %940 = vmatprep.subr.bf16.mxu0 0
      %941 = vmatpush2.bf16.msra.mxu0 0
      %942 = vmatprep.subr.bf16.mxu0 0
      %943 = vmatpush2.bf16.msra.mxu0 0
      %944 = vmatprep.mubr.bf16.mxu0 0
      %945 = vmatmul.mubr.bf16.gmra.mxu0 %v907
      %v946 = vpop.f32.mrf.mxu0
      %v947 = vadd.f32 0.0, %v946
      %v948 = vpop.f32.mrf.mxu0
      %v949 = vpop.f32.mrf.mxu0
      %v950 = vpop.f32.mrf.mxu0
      %951 = vdwg.mxu0
      %v952 = vrcp.pop %v899
      %v953 = vmul.f32 %v947, %v952
      %v954 = vpack.c.bf16 %v953, %v953
      %955 = vrot.lane.b32.xlu0 %v721, 112
      %v956 = vpop.permute.xlu0 %955
      %957 = vrot.lane.b32.xlu0 %v841, 112
      %v958 = vpop.permute.xlu0 %957
      %v960 = vsel %vm727, %v956, 0
      %v963 = vsel %vm727, %v958, 0
      %965 = vmatprep.subr.bf16.mxu0 0
      %966 = vmatpush1.bf16.xpose.msra.mxu0 0
      %967 = vmatprep.subr.bf16.mxu0 0
      %968 = vmatpush1.bf16.xpose.msra.mxu0 0
      %969 = vmatprep.subr.bf16.mxu0 0
      %970 = vmatpush1.bf16.xpose.msra.mxu0 0
      %971 = vmatprep.subr.bf16.mxu0 0
      %972 = vmatpush1.bf16.xpose.msra.mxu0 0
      %973 = vmatprep.subr.bf16.mxu0 0
      %974 = vmatpush1.bf16.xpose.msra.mxu0 0
      %975 = vmatprep.subr.bf16.mxu0 0
      %976 = vmatpush1.bf16.xpose.msra.mxu0 0
      %977 = vmatprep.subr.bf16.mxu0 0
      %978 = vmatpush1.bf16.xpose.msra.mxu0 0
      %979 = vmatprep.subr.bf16.mxu0 0
      %980 = vmatpush1.bf16.xpose.msra.mxu0 %v963
      %981 = vmatprep.subr.bf16.mxu0 0
      %982 = vmatpush2.bf16.xpose.msra.mxu0 0
      %983 = vmatprep.subr.bf16.mxu0 0
      %984 = vmatpush2.bf16.xpose.msra.mxu0 0
      %985 = vmatprep.subr.bf16.mxu0 0
      %986 = vmatpush2.bf16.xpose.msra.mxu0 0
      %987 = vmatprep.subr.bf16.mxu0 0
      %988 = vmatpush2.bf16.xpose.msra.mxu0 0
      %989 = vmatprep.subr.bf16.mxu0 0
      %990 = vmatpush2.bf16.xpose.msra.mxu0 0
      %991 = vmatprep.subr.bf16.mxu0 0
      %992 = vmatpush2.bf16.xpose.msra.mxu0 0
      %993 = vmatprep.subr.bf16.mxu0 0
      %994 = vmatpush2.bf16.xpose.msra.mxu0 0
      %995 = vmatprep.subr.bf16.mxu0 0
      %996 = vmatpush2.bf16.xpose.msra.mxu0 0
      %997 = vmatprep.mubr.bf16.mxu0 0
      %998 = vmatmul.mubr.bf16.gmra.mxu0 %v960
      %v999 = vpop.f32.mrf.mxu0
      %v1000 = vadd.f32 0.0, %v999
      %v1001 = vpop.f32.mrf.mxu0
      %v1002 = vpop.f32.mrf.mxu0
      %v1003 = vpop.f32.mrf.mxu0
      %1004 = vdwg.mxu0
      %v1005 = vsel %vm774, %v1000, -1e+09
      %v1006 = vsel %vm727, %v1005, -inf
      %1007 = vmax.xlane.f32.xlu0 %v1006
      %v1008 = vpop.xlane.xlu0 %1007
      %v1009 = vsub.f32 %v1005, %v1008
      %v1010 = vmul.f32 %v1009, 1.442695
      %v1011 = vpow.pop %v1010
      %v1012 = vsel %vm727, %v1011, 0.0
      %1013 = vadd.xlane.f32.xlu0 %v1012
      %v1014 = vpop.xlane.xlu0 %1013
      %v1015 = vpack.c.bf16 %v1011, %v1011
      %1016 = vrot.lane.b32.xlu0 %v903, 112
      %v1017 = vpop.permute.xlu0 %1016
      %v1019 = vsel %vm727, %v1015, 0
      %v1022 = vsel %vm789, %v1017, 0
      %1024 = vmatprep.subr.bf16.mxu0 0
      %1025 = vmatpush1.bf16.msra.mxu0 0
      %1026 = vmatprep.subr.bf16.mxu0 0
      %1027 = vmatpush1.bf16.msra.mxu0 0
      %1028 = vmatprep.subr.bf16.mxu0 0
      %1029 = vmatpush1.bf16.msra.mxu0 0
      %1030 = vmatprep.subr.bf16.mxu0 0
      %1031 = vmatpush1.bf16.msra.mxu0 0
      %1032 = vmatprep.subr.bf16.mxu0 0
      %1033 = vmatpush1.bf16.msra.mxu0 0
      %1034 = vmatprep.subr.bf16.mxu0 0
      %1035 = vmatpush1.bf16.msra.mxu0 0
      %1036 = vmatprep.subr.bf16.mxu0 0
      %1037 = vmatpush1.bf16.msra.mxu0 0
      %1038 = vmatprep.subr.bf16.mxu0 0
      %1039 = vmatpush1.bf16.msra.mxu0 %v1022
      %1040 = vmatprep.subr.bf16.mxu0 0
      %1041 = vmatpush2.bf16.msra.mxu0 0
      %1042 = vmatprep.subr.bf16.mxu0 0
      %1043 = vmatpush2.bf16.msra.mxu0 0
      %1044 = vmatprep.subr.bf16.mxu0 0
      %1045 = vmatpush2.bf16.msra.mxu0 0
      %1046 = vmatprep.subr.bf16.mxu0 0
      %1047 = vmatpush2.bf16.msra.mxu0 0
      %1048 = vmatprep.subr.bf16.mxu0 0
      %1049 = vmatpush2.bf16.msra.mxu0 0
      %1050 = vmatprep.subr.bf16.mxu0 0
      %1051 = vmatpush2.bf16.msra.mxu0 0
      %1052 = vmatprep.subr.bf16.mxu0 0
      %1053 = vmatpush2.bf16.msra.mxu0 0
      %1054 = vmatprep.subr.bf16.mxu0 0
      %1055 = vmatpush2.bf16.msra.mxu0 0
      %1056 = vmatprep.mubr.bf16.mxu0 0
      %1057 = vmatmul.mubr.bf16.gmra.mxu0 %v1019
      %v1058 = vpop.f32.mrf.mxu0
      %v1059 = vadd.f32 0.0, %v1058
      %v1060 = vpop.f32.mrf.mxu0
      %v1061 = vpop.f32.mrf.mxu0
      %v1062 = vpop.f32.mrf.mxu0
      %1063 = vdwg.mxu0
      %v1064 = vrcp.pop %v1014
      %v1065 = vmul.f32 %v1059, %v1064
      %v1066 = vpack.c.bf16 %v1065, %v1065
      %1067 = vrot.lane.b32.xlu0 %v721, 104
      %v1068 = vpop.permute.xlu0 %1067
      %1069 = vrot.lane.b32.xlu0 %v841, 104
      %v1070 = vpop.permute.xlu0 %1069
      %v1072 = vsel %vm727, %v1068, 0
      %v1075 = vsel %vm727, %v1070, 0
      %1077 = vmatprep.subr.bf16.mxu0 0
      %1078 = vmatpush1.bf16.xpose.msra.mxu0 0
      %1079 = vmatprep.subr.bf16.mxu0 0
      %1080 = vmatpush1.bf16.xpose.msra.mxu0 0
      %1081 = vmatprep.subr.bf16.mxu0 0
      %1082 = vmatpush1.bf16.xpose.msra.mxu0 0
      %1083 = vmatprep.subr.bf16.mxu0 0
      %1084 = vmatpush1.bf16.xpose.msra.mxu0 0
      %1085 = vmatprep.subr.bf16.mxu0 0
      %1086 = vmatpush1.bf16.xpose.msra.mxu0 0
      %1087 = vmatprep.subr.bf16.mxu0 0
      %1088 = vmatpush1.bf16.xpose.msra.mxu0 0
      %1089 = vmatprep.subr.bf16.mxu0 0
      %1090 = vmatpush1.bf16.xpose.msra.mxu0 0
      %1091 = vmatprep.subr.bf16.mxu0 0
      %1092 = vmatpush1.bf16.xpose.msra.mxu0 %v1075
      %1093 = vmatprep.subr.bf16.mxu0 0
      %1094 = vmatpush2.bf16.xpose.msra.mxu0 0
      %1095 = vmatprep.subr.bf16.mxu0 0
      %1096 = vmatpush2.bf16.xpose.msra.mxu0 0
      %1097 = vmatprep.subr.bf16.mxu0 0
      %1098 = vmatpush2.bf16.xpose.msra.mxu0 0
      %1099 = vmatprep.subr.bf16.mxu0 0
      %1100 = vmatpush2.bf16.xpose.msra.mxu0 0
      %1101 = vmatprep.subr.bf16.mxu0 0
      %1102 = vmatpush2.bf16.xpose.msra.mxu0 0
      %1103 = vmatprep.subr.bf16.mxu0 0
      %1104 = vmatpush2.bf16.xpose.msra.mxu0 0
      %1105 = vmatprep.subr.bf16.mxu0 0
      %1106 = vmatpush2.bf16.xpose.msra.mxu0 0
      %1107 = vmatprep.subr.bf16.mxu0 0
      %1108 = vmatpush2.bf16.xpose.msra.mxu0 0
      %1109 = vmatprep.mubr.bf16.mxu0 0
      %1110 = vmatmul.mubr.bf16.gmra.mxu0 %v1072
      %v1111 = vpop.f32.mrf.mxu0
      %v1112 = vadd.f32 0.0, %v1111
      %v1113 = vpop.f32.mrf.mxu0
      %v1114 = vpop.f32.mrf.mxu0
      %v1115 = vpop.f32.mrf.mxu0
      %1116 = vdwg.mxu0
      %v1117 = vsel %vm774, %v1112, -1e+09
      %v1118 = vsel %vm727, %v1117, -inf
      %1119 = vmax.xlane.f32.xlu0 %v1118
      %v1120 = vpop.xlane.xlu0 %1119
      %v1121 = vsub.f32 %v1117, %v1120
      %v1122 = vmul.f32 %v1121, 1.442695
      %v1123 = vpow.pop %v1122
      %v1124 = vsel %vm727, %v1123, 0.0
      %1125 = vadd.xlane.f32.xlu0 %v1124
      %v1126 = vpop.xlane.xlu0 %1125
      %v1127 = vpack.c.bf16 %v1123, %v1123
      %1128 = vrot.lane.b32.xlu0 %v903, 104
      %v1129 = vpop.permute.xlu0 %1128
      %v1131 = vsel %vm727, %v1127, 0
      %v1134 = vsel %vm789, %v1129, 0
      %1136 = vmatprep.subr.bf16.mxu0 0
      %1137 = vmatpush1.bf16.msra.mxu0 0
      %1138 = vmatprep.subr.bf16.mxu0 0
      %1139 = vmatpush1.bf16.msra.mxu0 0
      %1140 = vmatprep.subr.bf16.mxu0 0
      %1141 = vmatpush1.bf16.msra.mxu0 0
      %1142 = vmatprep.subr.bf16.mxu0 0
      %1143 = vmatpush1.bf16.msra.mxu0 0
      %1144 = vmatprep.subr.bf16.mxu0 0
      %1145 = vmatpush1.bf16.msra.mxu0 0
      %1146 = vmatprep.subr.bf16.mxu0 0
      %1147 = vmatpush1.bf16.msra.mxu0 0
      %1148 = vmatprep.subr.bf16.mxu0 0
      %1149 = vmatpush1.bf16.msra.mxu0 0
      %1150 = vmatprep.subr.bf16.mxu0 0
      %1151 = vmatpush1.bf16.msra.mxu0 %v1134
      %1152 = vmatprep.subr.bf16.mxu0 0
      %1153 = vmatpush2.bf16.msra.mxu0 0
      %1154 = vmatprep.subr.bf16.mxu0 0
      %1155 = vmatpush2.bf16.msra.mxu0 0
      %1156 = vmatprep.subr.bf16.mxu0 0
      %1157 = vmatpush2.bf16.msra.mxu0 0
      %1158 = vmatprep.subr.bf16.mxu0 0
      %1159 = vmatpush2.bf16.msra.mxu0 0
      %1160 = vmatprep.subr.bf16.mxu0 0
      %1161 = vmatpush2.bf16.msra.mxu0 0
      %1162 = vmatprep.subr.bf16.mxu0 0
      %1163 = vmatpush2.bf16.msra.mxu0 0
      %1164 = vmatprep.subr.bf16.mxu0 0
      %1165 = vmatpush2.bf16.msra.mxu0 0
      %1166 = vmatprep.subr.bf16.mxu0 0
      %1167 = vmatpush2.bf16.msra.mxu0 0
      %1168 = vmatprep.mubr.bf16.mxu0 0
      %1169 = vmatmul.mubr.bf16.gmra.mxu0 %v1131
      %v1170 = vpop.f32.mrf.mxu0
      %v1171 = vadd.f32 0.0, %v1170
      %v1172 = vpop.f32.mrf.mxu0
      %v1173 = vpop.f32.mrf.mxu0
      %v1174 = vpop.f32.mrf.mxu0
      %1175 = vdwg.mxu0
      %v1176 = vrcp.pop %v1126
      %v1177 = vmul.f32 %v1171, %v1176
      %v1178 = vpack.c.bf16 %v1177, %v1177
      %1180 = vrot.lane.b32.xlu0 %v954, 8
      %v1181 = vpop.permute.xlu0 %1180
      %1183 = vrot.lane.b32.xlu0 %v1066, 16
      %v1184 = vpop.permute.xlu0 %1183
      %1186 = vrot.lane.b32.xlu0 %v1178, 24
      %v1187 = vpop.permute.xlu0 %1186
      %v1190 = vsel %vm727, %v835, %v1181
      %vm1191 = vcmask 130048
      %v1193 = vsel %vm1191, %v1190, %v1184
      %vm1194 = vcmask 195584
      %v1196 = vsel %vm1194, %v1193, %v1187
      %v1197 = vld [vmem:[%s9] sm:$0xf]
      %v1198 = vld [vmem:[%s9 + $0x4] sm:$0xf]
      %v1199 = vld [vmem:[%s9 + $0x8] sm:$0xf]
      %v1200 = vld [vmem:[%s9 + $0xc] sm:$0xf]
      %v1201 = vld [vmem:[%s10] sm:$0x1]
      %v1203 = vlaneseq
      %v1204 = vshrl.u32 %v1203, 7
      %v1205 = vsub.s32 0, %v1204
      %v1206 = vrot.slane %v1201, %v1205
      %v1212 = vunpack.c.l.b16 %v1197
      %v1213 = vunpack.c.l.b16 %v1198
      %v1214 = vunpack.c.l.b16 %v1199
      %v1215 = vunpack.c.l.b16 %v1200
      %v1216 = vpack.c.b16 %v1213, %v1212
      %v1217 = vpack.c.b16 %v1215, %v1214
      %v1220 = vsel %vm677, %v1196, 0
      %1222 = vmatprep.subr.bf16.mxu0 0
      %1223 = vmatpush1.bf16.msra.mxu0 0
      %1224 = vmatprep.subr.bf16.mxu0 0
      %1225 = vmatpush1.bf16.msra.mxu0 0
      %1226 = vmatprep.subr.bf16.mxu0 0
      %1227 = vmatpush1.bf16.msra.mxu0 0
      %1228 = vmatprep.subr.bf16.mxu0 0
      %1229 = vmatpush1.bf16.msra.mxu0 0
      %1230 = vmatprep.subr.bf16.mxu0 0
      %1231 = vmatpush1.bf16.msra.mxu0 0
      %1232 = vmatprep.subr.bf16.mxu0 0
      %1233 = vmatpush1.bf16.msra.mxu0 0
      %1234 = vmatprep.subr.bf16.mxu0 0
      %1235 = vmatpush1.bf16.msra.mxu0 %v1217
      %1236 = vmatprep.subr.bf16.mxu0 0
      %1237 = vmatpush1.bf16.msra.mxu0 %v1216
      %1238 = vmatprep.subr.bf16.mxu0 0
      %1239 = vmatpush2.bf16.msra.mxu0 0
      %1240 = vmatprep.subr.bf16.mxu0 0
      %1241 = vmatpush2.bf16.msra.mxu0 0
      %1242 = vmatprep.subr.bf16.mxu0 0
      %1243 = vmatpush2.bf16.msra.mxu0 0
      %1244 = vmatprep.subr.bf16.mxu0 0
      %1245 = vmatpush2.bf16.msra.mxu0 0
      %1246 = vmatprep.subr.bf16.mxu0 0
      %1247 = vmatpush2.bf16.msra.mxu0 0
      %1248 = vmatprep.subr.bf16.mxu0 0
      %1249 = vmatpush2.bf16.msra.mxu0 0
      %1250 = vmatprep.subr.bf16.mxu0 0
      %1251 = vmatpush2.bf16.msra.mxu0 0
      %1252 = vmatprep.subr.bf16.mxu0 0
      %1253 = vmatpush2.bf16.msra.mxu0 0
      %1254 = vmatprep.mubr.bf16.mxu0 0
      %1255 = vmatmul.mubr.bf16.gmra.mxu0 %v1220
      %v1256 = vpop.f32.mrf.mxu0
      %v1257 = vadd.f32 %v1206, %v1256
      %v1258 = vpop.f32.mrf.mxu0
      %v1259 = vpop.f32.mrf.mxu0
      %v1260 = vpop.f32.mrf.mxu0
      %1261 = vdwg.mxu0
      %v1262 = vunpack.c.l.bf16 %v653
      %v1263 = vadd.f32 %v1262, %v1257
      %v1264 = vld [vmem:[%s11] sm:$0x1]
      %v1265 = vld [vmem:[%s12] sm:$0x1]
      %v1266 = vsel %vm677, %v1263, 0.0
      %1267 = vadd.xlane.f32.xlu0 %v1266
      %v1268 = vpop.xlane.xlu0 %1267
      %v1269 = vrcp.pop 32.0
      %v1270 = vmul.f32 %v1268, %v1269
      %v1271 = vsub.f32 %v1263, %v1270
      %v1272 = vmul.f32 %v1271, %v1271
      %v1273 = vsel %vm677, %v1272, 0.0
      %1274 = vadd.xlane.f32.xlu0 %v1273
      %v1275 = vpop.xlane.xlu0 %1274
      %v1276 = vmul.f32 %v1275, %v1269
      %v1277 = vadd.f32 %v1276, 1e-05
      %v1278 = vrsqrt.pop %v1277
      %v1279 = vmul.f32 %v1271, %v1278
      %v1281 = vlaneseq
      %v1282 = vshrl.u32 %v1281, 7
      %v1283 = vsub.s32 0, %v1282
      %v1284 = vrot.slane %v1264, %v1283
      %v1286 = vmul.f32 %v1279, %v1284
      %v1288 = vlaneseq
      %v1289 = vshrl.u32 %v1288, 7
      %v1290 = vsub.s32 0, %v1289
      %v1291 = vrot.slane %v1265, %v1290
      %v1293 = vadd.f32 %v1286, %v1291
      %v1294 = vpack.c.bf16 %v1293, %v1293
      %vm1295 = vcmask 257024
      %1296 = vst.msk [vmem:[%s511] sm:$0xf] %vm1295, %v1294
      %p1297 = scmp.lt.s32.totalorder %s28, 1
      %s1298 = scalar_select %p1297, %s28, 1
      %p1299 = scmp.lt.s32.totalorder %s29, 0
      %s1300 = scalar_select %p1299, %s29, 0
      %s1301 = sadd.s32 %s1300, %s1298
      %s1302 = smul.addr %s1301, 4
      %s1303 = scalar_lea.vmem %s13, %s1302
      // Predicated region
      $region77: #{decoder_forward.7} parent=71 // pred_check
        %p1304 = pneg %p348
      $region78: #{decoder_forward.7} parent=71 // pred_check_branch
        %1306 = sbr.rel (%p1304) target = $region80
      $region79: #{decoder_forward.7} parent=71 // pred_region
        _
      $region80: #{decoder_forward.7} parent=71 // pred_fallthru
        _
    $region72: #{decoder_forward.7} parent=5 // pred_fallthru
      _
    %p1307 = scmp.le.s32.totalorder 2, %s19
    // Predicated region
    $region81: #{decoder_forward.7} parent=5 // pred_check
      %p1308 = pneg %p1307
    $region82: #{decoder_forward.7} parent=5 // pred_check_branch
      %1310 = sbr.rel (%p1308) target = $region84
    $region83: #{decoder_forward.7} parent=5 // pred_region
      %s1311 = ssub.s32 %s19, 2
      // Predicated region
      $region85: #{decoder_forward.7} parent=83 // pred_check
        %p1312 = pneg %p354
      $region86: #{decoder_forward.7} parent=83 // pred_check_branch
        %1314 = sbr.rel (%p1312) target = $region88
      $region87: #{decoder_forward.7} parent=83 // pred_region
        %p1315 = scmp.lt.s32.totalorder %s30, 1
        %s1316 = scalar_select %p1315, %s30, 1
        %p1317 = scmp.lt.s32.totalorder %s31, 0
        %s1318 = scalar_select %p1317, %s31, 0
        %s1319 = sadd.s32 %s1318, %s1316
        %s1320 = smul.addr %s1319, 4
        %s1321 = scalar_lea.vmem %s13, %s1320
      $region88: #{decoder_forward.7} parent=83 // pred_fallthru
        _
    $region84: #{decoder_forward.7} parent=5 // pred_fallthru
      _
  $region6: #{decoder_forward.7} parent=0 // loop_footer
    %s23 = sadd.s32 1, %s19
  $region7: #{decoder_forward.7} parent=0 // loop_footer_branch
    %18 = sbr.rel target = $region3
  $region8: #{decoder_forward.7} parent=0 // loop_exit
    _

// kernel: decoder_forward.8
$region0: #{decoder_forward.8}
  #allocation0 [shape = 'u32[]', space=smem, size = 0x4, offset = 0x4, fixed_abs, tag = 'smem constant byte address 0x4 - core index']
  #allocation1 [shape = 'u32[144,128]{1,0:T(1,128)}', space=vmem, size = 0x12000, scoped, tag = 'internal scratch']
  #allocation2 [shape = 'bf16[8,32]{1,0:T(8,128)(2,1)}', space=vmem, size = 0x800, scoped, tag = 'scratch operand']
  #allocation3 [shape = 'bf16[8,32]{1,0:T(8,128)(2,1)}', space=vmem, size = 0x800, scoped, tag = 'scratch operand']
  %s0 = inlined_call_operand.vmem [shape: bf16[2,8,32], index: 0, kind: input, shape index: {}]
  %s1 = inlined_call_operand.vmem [shape: bf16[2,8,32], index: 1, kind: input, shape index: {}]
  %s2 = inlined_call_operand.vmem [shape: s8[2,1,8], index: 2, kind: input, shape index: {}]
  %s3 = inlined_call_operand.vmem [shape: bf16[32,32], index: 3, kind: input, shape index: {}]
  %s4 = inlined_call_operand.vmem [shape: f32[1,32], index: 4, kind: input, shape index: {}]
  %s5 = inlined_call_operand.vmem [shape: bf16[32,32], index: 5, kind: input, shape index: {}]
  %s6 = inlined_call_operand.vmem [shape: f32[1,32], index: 6, kind: input, shape index: {}]
  %s7 = inlined_call_operand.vmem [shape: bf16[32,32], index: 7, kind: input, shape index: {}]
  %s8 = inlined_call_operand.vmem [shape: f32[1,32], index: 8, kind: input, shape index: {}]
  %s9 = inlined_call_operand.vmem [shape: bf16[32,32], index: 9, kind: input, shape index: {}]
  %s10 = inlined_call_operand.vmem [shape: f32[1,32], index: 10, kind: input, shape index: {}]
  %s11 = inlined_call_operand.vmem [shape: f32[1,32], index: 11, kind: input, shape index: {}]
  %s12 = inlined_call_operand.vmem [shape: f32[1,32], index: 12, kind: input, shape index: {}]
  %s13 = inlined_call_operand.vmem [shape: bf16[2,8,32], index: 13, kind: output, shape index: {}]
  %s14 = sld [smem:[#allocation0]]
  $region89: #{decoder_forward.8} parent=0
    _
  %s16 = ssub.s32 1, %s14
  %s17 = scalar_select 0, %s16, %s14
  loop: start=0, step=1, limit=4
  $region2: #{decoder_forward.8} parent=0 // loop_pre_header
    _
  $region3: #{decoder_forward.8} parent=0 // loop_header
    %s19 = sphi 0, %s23
    %p20 = scmp.ge.s32.totalorder %s19, 4
    %s26 = sphi 0, %s38
    %s27 = sphi 0, %s34
    %s28 = sphi 0, %s26
    %s29 = sphi 0, %s27
    %s30 = sphi 0, %s28
    %s31 = sphi 0, %s29
    %s43 = sphi 0, %s45
    %s46 = sphi 0, %s43
    %s47 = sphi 0, %s46
    %s63 = sphi 0, %s47
    %s69 = sphi 0, %s71
    %s72 = sphi 0, %s69
    %s73 = sphi 0, %s72
    %s89 = sphi 0, %s73
    %s95 = sphi 0, %s97
    %s98 = sphi 0, %s95
    %s99 = sphi 0, %s98
    %s115 = sphi 0, %s99
    %s119 = sphi 0, %s119
    %s121 = sphi 0, %s119
    %s122 = sphi 0, %s121
    %s136 = sphi 0, %s122
    %s140 = sphi 0, %s140
    %s142 = sphi 0, %s140
    %s143 = sphi 0, %s142
    %s157 = sphi 0, %s143
    %s161 = sphi 0, %s161
    %s163 = sphi 0, %s161
    %s164 = sphi 0, %s163
    %s178 = sphi 0, %s164
    %s182 = sphi 0, %s182
    %s184 = sphi 0, %s182
    %s185 = sphi 0, %s184
    %s199 = sphi 0, %s185
    %s203 = sphi 0, %s203
    %s205 = sphi 0, %s203
    %s206 = sphi 0, %s205
    %s220 = sphi 0, %s206
    %s224 = sphi 0, %s224
    %s226 = sphi 0, %s224
    %s227 = sphi 0, %s226
    %s241 = sphi 0, %s227
    %s245 = sphi 0, %s245
    %s247 = sphi 0, %s245
    %s248 = sphi 0, %s247
    %s262 = sphi 0, %s248
    %s266 = sphi 0, %s266
    %s268 = sphi 0, %s266
    %s269 = sphi 0, %s268
    %s283 = sphi 0, %s269
    %s287 = sphi 0, %s287
    %s289 = sphi 0, %s287
    %s290 = sphi 0, %s289
    %s304 = sphi 0, %s290
    %s308 = sphi 0, %s308
    %s310 = sphi 0, %s308
    %s311 = sphi 0, %s310
    %s325 = sphi 0, %s311
    %s333 = sphi 0, %s335
    %s336 = sphi 0, %s333
    %s337 = sphi 0, %s336
    %s353 = sphi 0, %s337
  $region4: #{decoder_forward.8} parent=0 // loop_header_branch
    %22 = sbr.rel (%p20) target = $region8
  $region5: #{decoder_forward.8} parent=0 // loop_body
    %s24 = ssub.s32 %s19, 1
    %s25 = ssub.s32 %s19, 2
    %s32 = sadd.s32 1, %s27
    %p33 = scmp.ge.s32.totalorder %s32, 1
    %s34 = scalar_select %p33, 0, %s32
    %s35 = sadd.s32 1, %s26
    %s36 = scalar_select %p33, %s35, %s26
    %p37 = scmp.ge.s32.totalorder %s36, 2
    %s38 = scalar_select %p37, 0, %s36
    %s39 = ssub.s32 %s26, %s38
    %s40 = ssub.s32 %s27, %s34
    %s41 = sor.u32 %s39, %s40
    %p42 = scmp.eq.s32.totalorder %s41, 0
    %s44 = sadd.s32 %s43, 1
    %s45 = scalar_select %p42, %s43, %s44
    %p48 = pneg %p42
    %p49 = scmp.eq.s32.totalorder %s19, 1
    %p50 = por %p48, %p49
    %p51 = scmp.ne.s32.totalorder %s43, %s46
    %p52 = scmp.eq.s32.totalorder %s19, 0
    %p53 = por %p51, %p52
    %p54 = scmp.ne.s32.totalorder %s43, %s46
    %p55 = scmp.eq.s32.totalorder %s24, 1
    %p56 = por %p54, %p55
    %p57 = scmp.ne.s32.totalorder %s46, %s47
    %p58 = scmp.eq.s32.totalorder %s24, 0
    %p59 = por %p57, %p58
    %p60 = scmp.ne.s32.totalorder %s46, %s47
    %p61 = scmp.eq.s32.totalorder %s25, 1
    %p62 = por %p60, %p61
    %p64 = scmp.ne.s32.totalorder %s47, %s63
    %p65 = scmp.eq.s32.totalorder %s25, 0
    %p66 = por %p64, %p65
    %s67 = ssub.s32 %s26, %s38
    %p68 = scmp.eq.s32.totalorder %s67, 0
    %s70 = sadd.s32 %s69, 1
    %s71 = scalar_select %p68, %s69, %s70
    %p74 = pneg %p68
    %p75 = scmp.eq.s32.totalorder %s19, 1
    %p76 = por %p74, %p75
    %p77 = scmp.ne.s32.totalorder %s69, %s72
    %p78 = scmp.eq.s32.totalorder %s19, 0
    %p79 = por %p77, %p78
    %p80 = scmp.ne.s32.totalorder %s69, %s72
    %p81 = scmp.eq.s32.totalorder %s24, 1
    %p82 = por %p80, %p81
    %p83 = scmp.ne.s32.totalorder %s72, %s73
    %p84 = scmp.eq.s32.totalorder %s24, 0
    %p85 = por %p83, %p84
    %p86 = scmp.ne.s32.totalorder %s72, %s73
    %p87 = scmp.eq.s32.totalorder %s25, 1
    %p88 = por %p86, %p87
    %p90 = scmp.ne.s32.totalorder %s73, %s89
    %p91 = scmp.eq.s32.totalorder %s25, 0
    %p92 = por %p90, %p91
    %s93 = ssub.s32 %s26, %s38
    %p94 = scmp.eq.s32.totalorder %s93, 0
    %s96 = sadd.s32 %s95, 1
    %s97 = scalar_select %p94, %s95, %s96
    %p100 = pneg %p94
    %p101 = scmp.eq.s32.totalorder %s19, 1
    %p102 = por %p100, %p101
    %p103 = scmp.ne.s32.totalorder %s95, %s98
    %p104 = scmp.eq.s32.totalorder %s19, 0
    %p105 = por %p103, %p104
    %p106 = scmp.ne.s32.totalorder %s95, %s98
    %p107 = scmp.eq.s32.totalorder %s24, 1
    %p108 = por %p106, %p107
    %p109 = scmp.ne.s32.totalorder %s98, %s99
    %p110 = scmp.eq.s32.totalorder %s24, 0
    %p111 = por %p109, %p110
    %p112 = scmp.ne.s32.totalorder %s98, %s99
    %p113 = scmp.eq.s32.totalorder %s25, 1
    %p114 = por %p112, %p113
    %p116 = scmp.ne.s32.totalorder %s99, %s115
    %p117 = scmp.eq.s32.totalorder %s25, 0
    %p118 = por %p116, %p117
    %s120 = sadd.s32 %s119, 1
    %p123 = scmp.eq.s32.totalorder %s19, 1
    %p124 = scmp.ne.s32.totalorder %s119, %s121
    %p125 = scmp.eq.s32.totalorder %s19, 0
    %p126 = por %p124, %p125
    %p127 = scmp.ne.s32.totalorder %s119, %s121
    %p128 = scmp.eq.s32.totalorder %s24, 1
    %p129 = por %p127, %p128
    %p130 = scmp.ne.s32.totalorder %s121, %s122
    %p131 = scmp.eq.s32.totalorder %s24, 0
    %p132 = por %p130, %p131
    %p133 = scmp.ne.s32.totalorder %s121, %s122
    %p134 = scmp.eq.s32.totalorder %s25, 1
    %p135 = por %p133, %p134
    %p137 = scmp.ne.s32.totalorder %s122, %s136
    %p138 = scmp.eq.s32.totalorder %s25, 0
    %p139 = por %p137, %p138
    %s141 = sadd.s32 %s140, 1
    %p144 = scmp.eq.s32.totalorder %s19, 1
    %p145 = scmp.ne.s32.totalorder %s140, %s142
    %p146 = scmp.eq.s32.totalorder %s19, 0
    %p147 = por %p145, %p146
    %p148 = scmp.ne.s32.totalorder %s140, %s142
    %p149 = scmp.eq.s32.totalorder %s24, 1
    %p150 = por %p148, %p149
    %p151 = scmp.ne.s32.totalorder %s142, %s143
    %p152 = scmp.eq.s32.totalorder %s24, 0
    %p153 = por %p151, %p152
    %p154 = scmp.ne.s32.totalorder %s142, %s143
    %p155 = scmp.eq.s32.totalorder %s25, 1
    %p156 = por %p154, %p155
    %p158 = scmp.ne.s32.totalorder %s143, %s157
    %p159 = scmp.eq.s32.totalorder %s25, 0
    %p160 = por %p158, %p159
    %s162 = sadd.s32 %s161, 1
    %p165 = scmp.eq.s32.totalorder %s19, 1
    %p166 = scmp.ne.s32.totalorder %s161, %s163
    %p167 = scmp.eq.s32.totalorder %s19, 0
    %p168 = por %p166, %p167
    %p169 = scmp.ne.s32.totalorder %s161, %s163
    %p170 = scmp.eq.s32.totalorder %s24, 1
    %p171 = por %p169, %p170
    %p172 = scmp.ne.s32.totalorder %s163, %s164
    %p173 = scmp.eq.s32.totalorder %s24, 0
    %p174 = por %p172, %p173
    %p175 = scmp.ne.s32.totalorder %s163, %s164
    %p176 = scmp.eq.s32.totalorder %s25, 1
    %p177 = por %p175, %p176
    %p179 = scmp.ne.s32.totalorder %s164, %s178
    %p180 = scmp.eq.s32.totalorder %s25, 0
    %p181 = por %p179, %p180
    %s183 = sadd.s32 %s182, 1
    %p186 = scmp.eq.s32.totalorder %s19, 1
    %p187 = scmp.ne.s32.totalorder %s182, %s184
    %p188 = scmp.eq.s32.totalorder %s19, 0
    %p189 = por %p187, %p188
    %p190 = scmp.ne.s32.totalorder %s182, %s184
    %p191 = scmp.eq.s32.totalorder %s24, 1
    %p192 = por %p190, %p191
    %p193 = scmp.ne.s32.totalorder %s184, %s185
    %p194 = scmp.eq.s32.totalorder %s24, 0
    %p195 = por %p193, %p194
    %p196 = scmp.ne.s32.totalorder %s184, %s185
    %p197 = scmp.eq.s32.totalorder %s25, 1
    %p198 = por %p196, %p197
    %p200 = scmp.ne.s32.totalorder %s185, %s199
    %p201 = scmp.eq.s32.totalorder %s25, 0
    %p202 = por %p200, %p201
    %s204 = sadd.s32 %s203, 1
    %p207 = scmp.eq.s32.totalorder %s19, 1
    %p208 = scmp.ne.s32.totalorder %s203, %s205
    %p209 = scmp.eq.s32.totalorder %s19, 0
    %p210 = por %p208, %p209
    %p211 = scmp.ne.s32.totalorder %s203, %s205
    %p212 = scmp.eq.s32.totalorder %s24, 1
    %p213 = por %p211, %p212
    %p214 = scmp.ne.s32.totalorder %s205, %s206
    %p215 = scmp.eq.s32.totalorder %s24, 0
    %p216 = por %p214, %p215
    %p217 = scmp.ne.s32.totalorder %s205, %s206
    %p218 = scmp.eq.s32.totalorder %s25, 1
    %p219 = por %p217, %p218
    %p221 = scmp.ne.s32.totalorder %s206, %s220
    %p222 = scmp.eq.s32.totalorder %s25, 0
    %p223 = por %p221, %p222
    %s225 = sadd.s32 %s224, 1
    %p228 = scmp.eq.s32.totalorder %s19, 1
    %p229 = scmp.ne.s32.totalorder %s224, %s226
    %p230 = scmp.eq.s32.totalorder %s19, 0
    %p231 = por %p229, %p230
    %p232 = scmp.ne.s32.totalorder %s224, %s226
    %p233 = scmp.eq.s32.totalorder %s24, 1
    %p234 = por %p232, %p233
    %p235 = scmp.ne.s32.totalorder %s226, %s227
    %p236 = scmp.eq.s32.totalorder %s24, 0
    %p237 = por %p235, %p236
    %p238 = scmp.ne.s32.totalorder %s226, %s227
    %p239 = scmp.eq.s32.totalorder %s25, 1
    %p240 = por %p238, %p239
    %p242 = scmp.ne.s32.totalorder %s227, %s241
    %p243 = scmp.eq.s32.totalorder %s25, 0
    %p244 = por %p242, %p243
    %s246 = sadd.s32 %s245, 1
    %p249 = scmp.eq.s32.totalorder %s19, 1
    %p250 = scmp.ne.s32.totalorder %s245, %s247
    %p251 = scmp.eq.s32.totalorder %s19, 0
    %p252 = por %p250, %p251
    %p253 = scmp.ne.s32.totalorder %s245, %s247
    %p254 = scmp.eq.s32.totalorder %s24, 1
    %p255 = por %p253, %p254
    %p256 = scmp.ne.s32.totalorder %s247, %s248
    %p257 = scmp.eq.s32.totalorder %s24, 0
    %p258 = por %p256, %p257
    %p259 = scmp.ne.s32.totalorder %s247, %s248
    %p260 = scmp.eq.s32.totalorder %s25, 1
    %p261 = por %p259, %p260
    %p263 = scmp.ne.s32.totalorder %s248, %s262
    %p264 = scmp.eq.s32.totalorder %s25, 0
    %p265 = por %p263, %p264
    %s267 = sadd.s32 %s266, 1
    %p270 = scmp.eq.s32.totalorder %s19, 1
    %p271 = scmp.ne.s32.totalorder %s266, %s268
    %p272 = scmp.eq.s32.totalorder %s19, 0
    %p273 = por %p271, %p272
    %p274 = scmp.ne.s32.totalorder %s266, %s268
    %p275 = scmp.eq.s32.totalorder %s24, 1
    %p276 = por %p274, %p275
    %p277 = scmp.ne.s32.totalorder %s268, %s269
    %p278 = scmp.eq.s32.totalorder %s24, 0
    %p279 = por %p277, %p278
    %p280 = scmp.ne.s32.totalorder %s268, %s269
    %p281 = scmp.eq.s32.totalorder %s25, 1
    %p282 = por %p280, %p281
    %p284 = scmp.ne.s32.totalorder %s269, %s283
    %p285 = scmp.eq.s32.totalorder %s25, 0
    %p286 = por %p284, %p285
    %s288 = sadd.s32 %s287, 1
    %p291 = scmp.eq.s32.totalorder %s19, 1
    %p292 = scmp.ne.s32.totalorder %s287, %s289
    %p293 = scmp.eq.s32.totalorder %s19, 0
    %p294 = por %p292, %p293
    %p295 = scmp.ne.s32.totalorder %s287, %s289
    %p296 = scmp.eq.s32.totalorder %s24, 1
    %p297 = por %p295, %p296
    %p298 = scmp.ne.s32.totalorder %s289, %s290
    %p299 = scmp.eq.s32.totalorder %s24, 0
    %p300 = por %p298, %p299
    %p301 = scmp.ne.s32.totalorder %s289, %s290
    %p302 = scmp.eq.s32.totalorder %s25, 1
    %p303 = por %p301, %p302
    %p305 = scmp.ne.s32.totalorder %s290, %s304
    %p306 = scmp.eq.s32.totalorder %s25, 0
    %p307 = por %p305, %p306
    %s309 = sadd.s32 %s308, 1
    %p312 = scmp.eq.s32.totalorder %s19, 1
    %p313 = scmp.ne.s32.totalorder %s308, %s310
    %p314 = scmp.eq.s32.totalorder %s19, 0
    %p315 = por %p313, %p314
    %p316 = scmp.ne.s32.totalorder %s308, %s310
    %p317 = scmp.eq.s32.totalorder %s24, 1
    %p318 = por %p316, %p317
    %p319 = scmp.ne.s32.totalorder %s310, %s311
    %p320 = scmp.eq.s32.totalorder %s24, 0
    %p321 = por %p319, %p320
    %p322 = scmp.ne.s32.totalorder %s310, %s311
    %p323 = scmp.eq.s32.totalorder %s25, 1
    %p324 = por %p322, %p323
    %p326 = scmp.ne.s32.totalorder %s311, %s325
    %p327 = scmp.eq.s32.totalorder %s25, 0
    %p328 = por %p326, %p327
    %s329 = ssub.s32 %s26, %s38
    %s330 = ssub.s32 %s27, %s34
    %s331 = sor.u32 %s329, %s330
    %p332 = scmp.eq.s32.totalorder %s331, 0
    %s334 = sadd.s32 %s333, 1
    %s335 = scalar_select %p332, %s333, %s334
    %p338 = pneg %p332
    %p339 = scmp.eq.s32.totalorder %s19, 1
    %p340 = por %p338, %p339
    %p341 = scmp.ne.s32.totalorder %s333, %s336
    %p342 = scmp.eq.s32.totalorder %s19, 0
    %p343 = por %p341, %p342
    %p344 = scmp.ne.s32.totalorder %s333, %s336
    %p345 = scmp.eq.s32.totalorder %s24, 1
    %p346 = por %p344, %p345
    %p347 = scmp.ne.s32.totalorder %s336, %s337
    %p348 = scmp.eq.s32.totalorder %s24, 0
    %p349 = por %p347, %p348
    %p350 = scmp.ne.s32.totalorder %s336, %s337
    %p351 = scmp.eq.s32.totalorder %s25, 1
    %p352 = por %p350, %p351
    %p354 = scmp.ne.s32.totalorder %s337, %s353
    %p355 = scmp.eq.s32.totalorder %s25, 0
    %p356 = por %p354, %p355
    %p357 = scmp.le.s32.totalorder 1, %s19
    %p358 = scmp.lt.s32.totalorder %s19, 3
    %p359 = pnand %p357, %p358
    %p360 = pneg %p359
    // Predicated region
    $region9: #{decoder_forward.8} parent=5 // pred_check
      _
    $region10: #{decoder_forward.8} parent=5 // pred_check_branch
      %362 = sbr.rel (%p359) target = $region12
    $region11: #{decoder_forward.8} parent=5 // pred_region
      %s363 = ssub.s32 %s19, 1
      // Predicated region
      $region13: #{decoder_forward.8} parent=11 // pred_check
        %p364 = pneg %p132
      $region14: #{decoder_forward.8} parent=11 // pred_check_branch
        %366 = sbr.rel (%p364) target = $region16
      $region15: #{decoder_forward.8} parent=11 // pred_region
        _
      $region16: #{decoder_forward.8} parent=11 // pred_fallthru
        _
      // Predicated region
      $region17: #{decoder_forward.8} parent=11 // pred_check
        %p367 = pneg %p153
      $region18: #{decoder_forward.8} parent=11 // pred_check_branch
        %369 = sbr.rel (%p367) target = $region20
      $region19: #{decoder_forward.8} parent=11 // pred_region
        _
      $region20: #{decoder_forward.8} parent=11 // pred_fallthru
        _
      // Predicated region
      $region21: #{decoder_forward.8} parent=11 // pred_check
        %p370 = pneg %p174
      $region22: #{decoder_forward.8} parent=11 // pred_check_branch
        %372 = sbr.rel (%p370) target = $region24
      $region23: #{decoder_forward.8} parent=11 // pred_region
        _
      $region24: #{decoder_forward.8} parent=11 // pred_fallthru
        _
      // Predicated region
      $region25: #{decoder_forward.8} parent=11 // pred_check
        %p373 = pneg %p195
      $region26: #{decoder_forward.8} parent=11 // pred_check_branch
        %375 = sbr.rel (%p373) target = $region28
      $region27: #{decoder_forward.8} parent=11 // pred_region
        _
      $region28: #{decoder_forward.8} parent=11 // pred_fallthru
        _
      // Predicated region
      $region29: #{decoder_forward.8} parent=11 // pred_check
        %p376 = pneg %p216
      $region30: #{decoder_forward.8} parent=11 // pred_check_branch
        %378 = sbr.rel (%p376) target = $region32
      $region31: #{decoder_forward.8} parent=11 // pred_region
        _
      $region32: #{decoder_forward.8} parent=11 // pred_fallthru
        _
      // Predicated region
      $region33: #{decoder_forward.8} parent=11 // pred_check
        %p379 = pneg %p237
      $region34: #{decoder_forward.8} parent=11 // pred_check_branch
        %381 = sbr.rel (%p379) target = $region36
      $region35: #{decoder_forward.8} parent=11 // pred_region
        _
      $region36: #{decoder_forward.8} parent=11 // pred_fallthru
        _
      // Predicated region
      $region37: #{decoder_forward.8} parent=11 // pred_check
        %p382 = pneg %p258
      $region38: #{decoder_forward.8} parent=11 // pred_check_branch
        %384 = sbr.rel (%p382) target = $region40
      $region39: #{decoder_forward.8} parent=11 // pred_region
        _
      $region40: #{decoder_forward.8} parent=11 // pred_fallthru
        _
      // Predicated region
      $region41: #{decoder_forward.8} parent=11 // pred_check
        %p385 = pneg %p279
      $region42: #{decoder_forward.8} parent=11 // pred_check_branch
        %387 = sbr.rel (%p385) target = $region44
      $region43: #{decoder_forward.8} parent=11 // pred_region
        _
      $region44: #{decoder_forward.8} parent=11 // pred_fallthru
        _
      // Predicated region
      $region45: #{decoder_forward.8} parent=11 // pred_check
        %p388 = pneg %p300
      $region46: #{decoder_forward.8} parent=11 // pred_check_branch
        %390 = sbr.rel (%p388) target = $region48
      $region47: #{decoder_forward.8} parent=11 // pred_region
        _
      $region48: #{decoder_forward.8} parent=11 // pred_fallthru
        _
      // Predicated region
      $region49: #{decoder_forward.8} parent=11 // pred_check
        %p391 = pneg %p321
      $region50: #{decoder_forward.8} parent=11 // pred_check_branch
        %393 = sbr.rel (%p391) target = $region52
      $region51: #{decoder_forward.8} parent=11 // pred_region
        _
      $region52: #{decoder_forward.8} parent=11 // pred_fallthru
        _
    $region12: #{decoder_forward.8} parent=5 // pred_fallthru
      _
    %p394 = scmp.lt.s32.totalorder %s19, 2
    // Predicated region
    $region53: #{decoder_forward.8} parent=5 // pred_check
      %p395 = pneg %p394
    $region54: #{decoder_forward.8} parent=5 // pred_check_branch
      %397 = sbr.rel (%p395) target = $region56
    $region55: #{decoder_forward.8} parent=5 // pred_region
      // Predicated region
      $region57: #{decoder_forward.8} parent=55 // pred_check
        %p398 = pneg %p53
      $region58: #{decoder_forward.8} parent=55 // pred_check_branch
        %400 = sbr.rel (%p398) target = $region60
      $region59: #{decoder_forward.8} parent=55 // pred_region
        %p401 = scmp.lt.s32.totalorder %s26, 1
        %s402 = scalar_select %p401, %s26, 1
        %p403 = scmp.lt.s32.totalorder %s27, 0
        %s404 = scalar_select %p403, %s27, 0
        %s405 = sadd.s32 %s404, %s402
        %s406 = smul.addr %s405, 4
        %s407 = scalar_lea.vmem %s0, %s406
      $region60: #{decoder_forward.8} parent=55 // pred_fallthru
        _
      // Predicated region
      $region61: #{decoder_forward.8} parent=55 // pred_check
        %p408 = pneg %p79
      $region62: #{decoder_forward.8} parent=55 // pred_check_branch
        %410 = sbr.rel (%p408) target = $region64
      $region63: #{decoder_forward.8} parent=55 // pred_region
        %p411 = scmp.lt.s32.totalorder %s26, 1
        %s412 = scalar_select %p411, %s26, 1
        %s413 = smul.addr %s412, 4
        %s414 = scalar_lea.vmem %s1, %s413
      $region64: #{decoder_forward.8} parent=55 // pred_fallthru
        _
      // Predicated region
      $region65: #{decoder_forward.8} parent=55 // pred_check
        %p415 = pneg %p105
      $region66: #{decoder_forward.8} parent=55 // pred_check_branch
        %417 = sbr.rel (%p415) target = $region68
      $region67: #{decoder_forward.8} parent=55 // pred_region
        %p418 = scmp.lt.s32.totalorder %s26, 1
        %s419 = scalar_select %p418, %s26, 1
        %s420 = scalar_lea.vmem %s2, %s419
      $region68: #{decoder_forward.8} parent=55 // pred_fallthru
        _
    $region56: #{decoder_forward.8} parent=5 // pred_fallthru
      _
    %p421 = scmp.le.s32.totalorder 1, %s19
    %p422 = scmp.lt.s32.totalorder %s19, 3
    %p423 = pnand %p421, %p422
    %p424 = pneg %p423
    // Predicated region
    $region69: #{decoder_forward.8} parent=5 // pred_check
      _
    $region70: #{decoder_forward.8} parent=5 // pred_check_branch
      %426 = sbr.rel (%p423) target = $region72
    $region71: #{decoder_forward.8} parent=5 // pred_region
      %s427 = ssub.s32 %s19, 1
      %p428 = scmp.lt.s32.totalorder %s28, 1
      %s429 = scalar_select %p428, %s28, 1
      %p430 = scmp.lt.s32.totalorder %s29, 0
      %s431 = scalar_select %p430, %s29, 0
      %s432 = sadd.s32 %s431, %s429
      %s433 = smul.addr %s432, 4
      %s434 = scalar_lea.vmem %s0, %s433
      %p435 = pneg %p59
      %p436 = pneg %p56
      %p437 = scmp.lt.s32.totalorder %s28, 1
      %s438 = scalar_select %p437, %s28, 1
      %s439 = smul.addr %s438, 4
      %s440 = scalar_lea.vmem %s1, %s439
      %p441 = pneg %p85
      %p442 = pneg %p82
      %p443 = scmp.lt.s32.totalorder %s28, 1
      %s444 = scalar_select %p443, %s28, 1
      %s445 = scalar_lea.vmem %s2, %s444
      %p446 = pneg %p111
      %p447 = pneg %p108
      %p448 = pneg %p132
      %p449 = pneg %p129
      %p450 = pneg %p153
      %p451 = pneg %p150
      %p452 = pneg %p174
      %p453 = pneg %p171
      %p454 = pneg %p195
      %p455 = pneg %p192
      %p456 = pneg %p216
      %p457 = pneg %p213
      %p458 = pneg %p237
      %p459 = pneg %p234
      %p460 = pneg %p258
      %p461 = pneg %p255
      %p462 = pneg %p279
      %p463 = pneg %p276
      %p464 = pneg %p300
      %p465 = pneg %p297
      %p466 = pneg %p321
      %p467 = pneg %p318
      %p468 = pneg %p349
      %p469 = pneg %p346
      %p470 = scmp.lt.s32.totalorder %s28, 1
      %s471 = scalar_select %p470, %s28, 1
      %p472 = scmp.lt.s32.totalorder %s29, 0
      %s473 = scalar_select %p472, %s29, 0
      %s474 = sadd.s32 %s473, %s471
      %s475 = smul.addr %s474, 4
      %s476 = scalar_lea.vmem %s13, %s475
      %p477 = scmp.lt.s32.totalorder %s28, 1
      %s478 = scalar_select %p477, %s28, 1
      %p479 = scmp.lt.s32.totalorder %s29, 0
      %s480 = scalar_select %p479, %s29, 0
      %s481 = sadd.s32 %s480, %s478
      %s482 = smul.addr %s481, 4
      %s483 = scalar_lea.vmem %s0, %s482
      %p484 = scmp.lt.s32.totalorder %s28, 1
      %s485 = scalar_select %p484, %s28, 1
      %s486 = smul.addr %s485, 4
      %s487 = scalar_lea.vmem %s1, %s486
      %p488 = scmp.lt.s32.totalorder %s28, 1
      %s489 = scalar_select %p488, %s28, 1
      %s490 = scalar_lea.vmem %s2, %s489
      %p491 = scmp.lt.s32.totalorder %s28, 1
      %s492 = scalar_select %p491, %s28, 1
      %p493 = scmp.lt.s32.totalorder %s29, 0
      %s494 = scalar_select %p493, %s29, 0
      %s495 = sadd.s32 %s494, %s492
      %s496 = smul.addr %s495, 4
      %s497 = scalar_lea.vmem %s13, %s496
      %p499 = scmp.eq.s32.totalorder %s29, 0
      // Predicated region
      $region73: #{decoder_forward.8} parent=71 // pred_check
        %p500 = pneg %p499
      $region74: #{decoder_forward.8} parent=71 // pred_check_branch
        %502 = sbr.rel (%p500) target = $region76
      $region75: #{decoder_forward.8} parent=71 // pred_region
        %v503 = vld [vmem:[%s487] sm:$0xf]
        %v504 = vld [vmem:[%s5] sm:$0xf]
        %v505 = vld [vmem:[%s5 + $0x4] sm:$0xf]
        %v506 = vld [vmem:[%s5 + $0x8] sm:$0xf]
        %v507 = vld [vmem:[%s5 + $0xc] sm:$0xf]
        %v508 = vld [vmem:[%s6] sm:$0x1]
        %v510 = vlaneseq
        %v511 = vshrl.u32 %v510, 7
        %v512 = vsub.s32 0, %v511
        %v513 = vrot.slane %v508, %v512
        %v519 = vunpack.c.l.b16 %v504
        %v520 = vunpack.c.l.b16 %v505
        %v521 = vunpack.c.l.b16 %v506
        %v522 = vunpack.c.l.b16 %v507
        %v523 = vpack.c.b16 %v520, %v519
        %v524 = vpack.c.b16 %v522, %v521
        %vm527 = vcmask 261120
        %v529 = vsel %vm527, %v503, 0
        %531 = vmatprep.subr.bf16.mxu0 0
        %532 = vmatpush1.bf16.msra.mxu0 0
        %533 = vmatprep.subr.bf16.mxu0 0
        %534 = vmatpush1.bf16.msra.mxu0 0
        %535 = vmatprep.subr.bf16.mxu0 0
        %536 = vmatpush1.bf16.msra.mxu0 0
        %537 = vmatprep.subr.bf16.mxu0 0
        %538 = vmatpush1.bf16.msra.mxu0 0
        %539 = vmatprep.subr.bf16.mxu0 0
        %540 = vmatpush1.bf16.msra.mxu0 0
        %541 = vmatprep.subr.bf16.mxu0 0
        %542 = vmatpush1.bf16.msra.mxu0 0
        %543 = vmatprep.subr.bf16.mxu0 0
        %544 = vmatpush1.bf16.msra.mxu0 %v524
        %545 = vmatprep.subr.bf16.mxu0 0
        %546 = vmatpush1.bf16.msra.mxu0 %v523
        %547 = vmatprep.subr.bf16.mxu0 0
        %548 = vmatpush2.bf16.msra.mxu0 0
        %549 = vmatprep.subr.bf16.mxu0 0
        %550 = vmatpush2.bf16.msra.mxu0 0
        %551 = vmatprep.subr.bf16.mxu0 0
        %552 = vmatpush2.bf16.msra.mxu0 0
        %553 = vmatprep.subr.bf16.mxu0 0
        %554 = vmatpush2.bf16.msra.mxu0 0
        %555 = vmatprep.subr.bf16.mxu0 0
        %556 = vmatpush2.bf16.msra.mxu0 0
        %557 = vmatprep.subr.bf16.mxu0 0
        %558 = vmatpush2.bf16.msra.mxu0 0
        %559 = vmatprep.subr.bf16.mxu0 0
        %560 = vmatpush2.bf16.msra.mxu0 0
        %561 = vmatprep.subr.bf16.mxu0 0
        %562 = vmatpush2.bf16.msra.mxu0 0
        %563 = vmatprep.mubr.bf16.mxu0 0
        %564 = vmatmul.mubr.bf16.gmra.mxu0 %v529
        %v565 = vpop.f32.mrf.mxu0
        %v566 = vadd.f32 %v513, %v565
        %v567 = vpop.f32.mrf.mxu0
        %v568 = vpop.f32.mrf.mxu0
        %v569 = vpop.f32.mrf.mxu0
        %570 = vdwg.mxu0
        %v571 = vpack.c.bf16 %v566, %v566
        %vm572 = vcmask 257024
        %573 = vst.msk [vmem:[#allocation2] sm:$0xf] %vm572, %v571
        %v574 = vld [vmem:[%s7] sm:$0xf]
        %v575 = vld [vmem:[%s7 + $0x4] sm:$0xf]
        %v576 = vld [vmem:[%s7 + $0x8] sm:$0xf]
        %v577 = vld [vmem:[%s7 + $0xc] sm:$0xf]
        %v578 = vld [vmem:[%s8] sm:$0x1]
        %v580 = vlaneseq
        %v581 = vshrl.u32 %v580, 7
        %v582 = vsub.s32 0, %v581
        %v583 = vrot.slane %v578, %v582
        %v589 = vunpack.c.l.b16 %v574
        %v590 = vunpack.c.l.b16 %v575
        %v591 = vunpack.c.l.b16 %v576
        %v592 = vunpack.c.l.b16 %v577
        %v593 = vpack.c.b16 %v590, %v589
        %v594 = vpack.c.b16 %v592, %v591
        %597 = vmatprep.subr.bf16.mxu0 0
        %598 = vmatpush1.bf16.msra.mxu0 0
        %599 = vmatprep.subr.bf16.mxu0 0
        %600 = vmatpush1.bf16.msra.mxu0 0
        %601 = vmatprep.subr.bf16.mxu0 0
        %602 = vmatpush1.bf16.msra.mxu0 0
        %603 = vmatprep.subr.bf16.mxu0 0
        %604 = vmatpush1.bf16.msra.mxu0 0
        %605 = vmatprep.subr.bf16.mxu0 0
        %606 = vmatpush1.bf16.msra.mxu0 0
        %607 = vmatprep.subr.bf16.mxu0 0
        %608 = vmatpush1.bf16.msra.mxu0 0
        %609 = vmatprep.subr.bf16.mxu0 0
        %610 = vmatpush1.bf16.msra.mxu0 %v594
        %611 = vmatprep.subr.bf16.mxu0 0
        %612 = vmatpush1.bf16.msra.mxu0 %v593
        %613 = vmatprep.subr.bf16.mxu0 0
        %614 = vmatpush2.bf16.msra.mxu0 0
        %615 = vmatprep.subr.bf16.mxu0 0
        %616 = vmatpush2.bf16.msra.mxu0 0
        %617 = vmatprep.subr.bf16.mxu0 0
        %618 = vmatpush2.bf16.msra.mxu0 0
        %619 = vmatprep.subr.bf16.mxu0 0
        %620 = vmatpush2.bf16.msra.mxu0 0
        %621 = vmatprep.subr.bf16.mxu0 0
        %622 = vmatpush2.bf16.msra.mxu0 0
        %623 = vmatprep.subr.bf16.mxu0 0
        %624 = vmatpush2.bf16.msra.mxu0 0
        %625 = vmatprep.subr.bf16.mxu0 0
        %626 = vmatpush2.bf16.msra.mxu0 0
        %627 = vmatprep.subr.bf16.mxu0 0
        %628 = vmatpush2.bf16.msra.mxu0 0
        %629 = vmatprep.mubr.bf16.mxu0 0
        %630 = vmatmul.mubr.bf16.gmra.mxu0 %v529
        %v631 = vpop.f32.mrf.mxu0
        %v632 = vadd.f32 %v583, %v631
        %v633 = vpop.f32.mrf.mxu0
        %v634 = vpop.f32.mrf.mxu0
        %v635 = vpop.f32.mrf.mxu0
        %636 = vdwg.mxu0
        %v637 = vpack.c.bf16 %v632, %v632
        %638 = vst.msk [vmem:[#allocation3] sm:$0xf] %vm572, %v637
      $region76: #{decoder_forward.8} parent=71 // pred_fallthru
        _
      %v639 = vld [vmem:[%s483] sm:$0xf]
      %v640 = vld [vmem:[%s3] sm:$0xf]
      %v641 = vld [vmem:[%s3 + $0x4] sm:$0xf]
      %v642 = vld [vmem:[%s3 + $0x8] sm:$0xf]
      %v643 = vld [vmem:[%s3 + $0xc] sm:$0xf]
      %v644 = vld [vmem:[%s4] sm:$0x1]
      %v646 = vlaneseq
      %v647 = vshrl.u32 %v646, 7
      %v648 = vsub.s32 0, %v647
      %v649 = vrot.slane %v644, %v648
      %v655 = vunpack.c.l.b16 %v640
      %v656 = vunpack.c.l.b16 %v641
      %v657 = vunpack.c.l.b16 %v642
      %v658 = vunpack.c.l.b16 %v643
      %v659 = vpack.c.b16 %v656, %v655
      %v660 = vpack.c.b16 %v658, %v657
      %vm663 = vcmask 261120
      %v665 = vsel %vm663, %v639, 0
      %667 = vmatprep.subr.bf16.mxu0 0
      %668 = vmatpush1.bf16.msra.mxu0 0
      %669 = vmatprep.subr.bf16.mxu0 0
      %670 = vmatpush1.bf16.msra.mxu0 0
      %671 = vmatprep.subr.bf16.mxu0 0
      %672 = vmatpush1.bf16.msra.mxu0 0
      %673 = vmatprep.subr.bf16.mxu0 0
      %674 = vmatpush1.bf16.msra.mxu0 0
      %675 = vmatprep.subr.bf16.mxu0 0
      %676 = vmatpush1.bf16.msra.mxu0 0
      %677 = vmatprep.subr.bf16.mxu0 0
      %678 = vmatpush1.bf16.msra.mxu0 0
      %679 = vmatprep.subr.bf16.mxu0 0
      %680 = vmatpush1.bf16.msra.mxu0 %v660
      %681 = vmatprep.subr.bf16.mxu0 0
      %682 = vmatpush1.bf16.msra.mxu0 %v659
      %683 = vmatprep.subr.bf16.mxu0 0
      %684 = vmatpush2.bf16.msra.mxu0 0
      %685 = vmatprep.subr.bf16.mxu0 0
      %686 = vmatpush2.bf16.msra.mxu0 0
      %687 = vmatprep.subr.bf16.mxu0 0
      %688 = vmatpush2.bf16.msra.mxu0 0
      %689 = vmatprep.subr.bf16.mxu0 0
      %690 = vmatpush2.bf16.msra.mxu0 0
      %691 = vmatprep.subr.bf16.mxu0 0
      %692 = vmatpush2.bf16.msra.mxu0 0
      %693 = vmatprep.subr.bf16.mxu0 0
      %694 = vmatpush2.bf16.msra.mxu0 0
      %695 = vmatprep.subr.bf16.mxu0 0
      %696 = vmatpush2.bf16.msra.mxu0 0
      %697 = vmatprep.subr.bf16.mxu0 0
      %698 = vmatpush2.bf16.msra.mxu0 0
      %699 = vmatprep.mubr.bf16.mxu0 0
      %700 = vmatmul.mubr.bf16.gmra.mxu0 %v665
      %v701 = vpop.f32.mrf.mxu0
      %v702 = vadd.f32 %v649, %v701
      %v703 = vpop.f32.mrf.mxu0
      %v704 = vpop.f32.mrf.mxu0
      %v705 = vpop.f32.mrf.mxu0
      %706 = vdwg.mxu0
      %v707 = vpack.c.bf16 %v702, %v702
      %v708 = vld [vmem:[#allocation2] sm:$0xf]
      %v709 = vld [vmem:[#allocation3] sm:$0xf]
      %v710 = vld [vmem:[%s490] sm:$0x1]
      %v711 = vunpack.c.0.s8 %v710
      %v712 = vcvt.s32.f32 %v711
      %vm713 = vcmask 64512
      %v715 = vsel %vm713, %v707, 0
      %v718 = vsel %vm713, %v708, 0
      %720 = vmatprep.subr.bf16.mxu0 0
      %721 = vmatpush1.bf16.xpose.msra.mxu0 0
      %722 = vmatprep.subr.bf16.mxu0 0
      %723 = vmatpush1.bf16.xpose.msra.mxu0 0
      %724 = vmatprep.subr.bf16.mxu0 0
      %725 = vmatpush1.bf16.xpose.msra.mxu0 0
      %726 = vmatprep.subr.bf16.mxu0 0
      %727 = vmatpush1.bf16.xpose.msra.mxu0 0
      %728 = vmatprep.subr.bf16.mxu0 0
      %729 = vmatpush1.bf16.xpose.msra.mxu0 0
      %730 = vmatprep.subr.bf16.mxu0 0
      %731 = vmatpush1.bf16.xpose.msra.mxu0 0
      %732 = vmatprep.subr.bf16.mxu0 0
      %733 = vmatpush1.bf16.xpose.msra.mxu0 0
      %734 = vmatprep.subr.bf16.mxu0 0
      %735 = vmatpush1.bf16.xpose.msra.mxu0 %v718
      %736 = vmatprep.subr.bf16.mxu0 0
      %737 = vmatpush2.bf16.xpose.msra.mxu0 0
      %738 = vmatprep.subr.bf16.mxu0 0
      %739 = vmatpush2.bf16.xpose.msra.mxu0 0
      %740 = vmatprep.subr.bf16.mxu0 0
      %741 = vmatpush2.bf16.xpose.msra.mxu0 0
      %742 = vmatprep.subr.bf16.mxu0 0
      %743 = vmatpush2.bf16.xpose.msra.mxu0 0
      %744 = vmatprep.subr.bf16.mxu0 0
      %745 = vmatpush2.bf16.xpose.msra.mxu0 0
      %746 = vmatprep.subr.bf16.mxu0 0
      %747 = vmatpush2.bf16.xpose.msra.mxu0 0
      %748 = vmatprep.subr.bf16.mxu0 0
      %749 = vmatpush2.bf16.xpose.msra.mxu0 0
      %750 = vmatprep.subr.bf16.mxu0 0
      %751 = vmatpush2.bf16.xpose.msra.mxu0 0
      %752 = vmatprep.mubr.bf16.mxu0 0
      %753 = vmatmul.mubr.bf16.gmra.mxu0 %v715
      %v754 = vpop.f32.mrf.mxu0
      %v755 = vadd.f32 0.0, %v754
      %v756 = vpop.f32.mrf.mxu0
      %v757 = vpop.f32.mrf.mxu0
      %v758 = vpop.f32.mrf.mxu0
      %759 = vdwg.mxu0
      %vm760 = vcmp.gt.f32.partialorder %v712, 0.0
      %v761 = vsel %vm760, 1, 0
      %v762 = vlaneseq
      %v763 = vshrl.u32 %v762, 7
      %v764 = vsub.s32 0, %v763
      %v765 = vrot.slane %v761, %v764
      %vm766 = vcmp.eq.s32.totalorder %v765, 1
      %v767 = vsel %vm766, %v755, -1e+09
      %v768 = vsel %vm713, %v767, -inf
      %769 = vmax.xlane.f32.xlu0 %v768
      %v770 = vpop.xlane.xlu0 %769
      %v771 = vsub.f32 %v767, %v770
      %v772 = vmul.f32 %v771, 1.442695
      %v773 = vpow.pop %v772
      %v774 = vsel %vm713, %v773, 0.0
      %775 = vadd.xlane.f32.xlu0 %v774
      %v776 = vpop.xlane.xlu0 %775
      %v777 = vpack.c.bf16 %v773, %v773
      %v779 = vsel %vm713, %v777, 0
      %vm781 = vcmask 1043456
      %v783 = vsel %vm781, %v709, 0
      %785 = vmatprep.subr.bf16.mxu0 0
      %786 = vmatpush1.bf16.msra.mxu0 0
      %787 = vmatprep.subr.bf16.mxu0 0
      %788 = vmatpush1.bf16.msra.mxu0 0
      %789 = vmatprep.subr.bf16.mxu0 0
      %790 = vmatpush1.bf16.msra.mxu0 0
      %791 = vmatprep.subr.bf16.mxu0 0
      %792 = vmatpush1.bf16.msra.mxu0 0
      %793 = vmatprep.subr.bf16.mxu0 0
      %794 = vmatpush1.bf16.msra.mxu0 0
      %795 = vmatprep.subr.bf16.mxu0 0
      %796 = vmatpush1.bf16.msra.mxu0 0
      %797 = vmatprep.subr.bf16.mxu0 0
      %798 = vmatpush1.bf16.msra.mxu0 0
      %799 = vmatprep.subr.bf16.mxu0 0
      %800 = vmatpush1.bf16.msra.mxu0 %v783
      %801 = vmatprep.subr.bf16.mxu0 0
      %802 = vmatpush2.bf16.msra.mxu0 0
      %803 = vmatprep.subr.bf16.mxu0 0
      %804 = vmatpush2.bf16.msra.mxu0 0
      %805 = vmatprep.subr.bf16.mxu0 0
      %806 = vmatpush2.bf16.msra.mxu0 0
      %807 = vmatprep.subr.bf16.mxu0 0
      %808 = vmatpush2.bf16.msra.mxu0 0
      %809 = vmatprep.subr.bf16.mxu0 0
      %810 = vmatpush2.bf16.msra.mxu0 0
      %811 = vmatprep.subr.bf16.mxu0 0
      %812 = vmatpush2.bf16.msra.mxu0 0
      %813 = vmatprep.subr.bf16.mxu0 0
      %814 = vmatpush2.bf16.msra.mxu0 0
      %815 = vmatprep.subr.bf16.mxu0 0
      %816 = vmatpush2.bf16.msra.mxu0 0
      %817 = vmatprep.mubr.bf16.mxu0 0
      %818 = vmatmul.mubr.bf16.gmra.mxu0 %v779
      %v819 = vpop.f32.mrf.mxu0
      %v820 = vadd.f32 0.0, %v819
      %v821 = vpop.f32.mrf.mxu0
      %v822 = vpop.f32.mrf.mxu0
      %v823 = vpop.f32.mrf.mxu0
      %824 = vdwg.mxu0
      %v825 = vrcp.pop %v776
      %v826 = vmul.f32 %v820, %v825
      %v827 = vpack.c.bf16 %v826, %v826
      %829 = vrot.lane.b32.xlu0 %v707, 120
      %v830 = vpop.permute.xlu0 %829
      %v832 = vunpack.c.l.b16 %v708
      %v833 = vpack.c.b16 %v832, %v832
      %834 = vrot.lane.b32.xlu0 %v833, 120
      %v835 = vpop.permute.xlu0 %834
      %v837 = vsel %vm713, %v830, 0
      %v840 = vsel %vm713, %v835, 0
      %842 = vmatprep.subr.bf16.mxu0 0
      %843 = vmatpush1.bf16.xpose.msra.mxu0 0
      %844 = vmatprep.subr.bf16.mxu0 0
      %845 = vmatpush1.bf16.xpose.msra.mxu0 0
      %846 = vmatprep.subr.bf16.mxu0 0
      %847 = vmatpush1.bf16.xpose.msra.mxu0 0
      %848 = vmatprep.subr.bf16.mxu0 0
      %849 = vmatpush1.bf16.xpose.msra.mxu0 0
      %850 = vmatprep.subr.bf16.mxu0 0
      %851 = vmatpush1.bf16.xpose.msra.mxu0 0
      %852 = vmatprep.subr.bf16.mxu0 0
      %853 = vmatpush1.bf16.xpose.msra.mxu0 0
      %854 = vmatprep.subr.bf16.mxu0 0
      %855 = vmatpush1.bf16.xpose.msra.mxu0 0
      %856 = vmatprep.subr.bf16.mxu0 0
      %857 = vmatpush1.bf16.xpose.msra.mxu0 %v840
      %858 = vmatprep.subr.bf16.mxu0 0
      %859 = vmatpush2.bf16.xpose.msra.mxu0 0
      %860 = vmatprep.subr.bf16.mxu0 0
      %861 = vmatpush2.bf16.xpose.msra.mxu0 0
      %862 = vmatprep.subr.bf16.mxu0 0
      %863 = vmatpush2.bf16.xpose.msra.mxu0 0
      %864 = vmatprep.subr.bf16.mxu0 0
      %865 = vmatpush2.bf16.xpose.msra.mxu0 0
      %866 = vmatprep.subr.bf16.mxu0 0
      %867 = vmatpush2.bf16.xpose.msra.mxu0 0
      %868 = vmatprep.subr.bf16.mxu0 0
      %869 = vmatpush2.bf16.xpose.msra.mxu0 0
      %870 = vmatprep.subr.bf16.mxu0 0
      %871 = vmatpush2.bf16.xpose.msra.mxu0 0
      %872 = vmatprep.subr.bf16.mxu0 0
      %873 = vmatpush2.bf16.xpose.msra.mxu0 0
      %874 = vmatprep.mubr.bf16.mxu0 0
      %875 = vmatmul.mubr.bf16.gmra.mxu0 %v837
      %v876 = vpop.f32.mrf.mxu0
      %v877 = vadd.f32 0.0, %v876
      %v878 = vpop.f32.mrf.mxu0
      %v879 = vpop.f32.mrf.mxu0
      %v880 = vpop.f32.mrf.mxu0
      %881 = vdwg.mxu0
      %v882 = vsel %vm766, %v877, -1e+09
      %v883 = vsel %vm713, %v882, -inf
      %884 = vmax.xlane.f32.xlu0 %v883
      %v885 = vpop.xlane.xlu0 %884
      %v886 = vsub.f32 %v882, %v885
      %v887 = vmul.f32 %v886, 1.442695
      %v888 = vpow.pop %v887
      %v889 = vsel %vm713, %v888, 0.0
      %890 = vadd.xlane.f32.xlu0 %v889
      %v891 = vpop.xlane.xlu0 %890
      %v892 = vpack.c.bf16 %v888, %v888
      %v894 = vunpack.c.l.b16 %v709
      %v895 = vpack.c.b16 %v894, %v894
      %896 = vrot.lane.b32.xlu0 %v895, 120
      %v897 = vpop.permute.xlu0 %896
      %v899 = vsel %vm713, %v892, 0
      %v902 = vsel %vm781, %v897, 0
      %904 = vmatprep.subr.bf16.mxu0 0
      %905 = vmatpush1.bf16.msra.mxu0 0
      %906 = vmatprep.subr.bf16.mxu0 0
      %907 = vmatpush1.bf16.msra.mxu0 0
      %908 = vmatprep.subr.bf16.mxu0 0
      %909 = vmatpush1.bf16.msra.mxu0 0
      %910 = vmatprep.subr.bf16.mxu0 0
      %911 = vmatpush1.bf16.msra.mxu0 0
      %912 = vmatprep.subr.bf16.mxu0 0
      %913 = vmatpush1.bf16.msra.mxu0 0
      %914 = vmatprep.subr.bf16.mxu0 0
      %915 = vmatpush1.bf16.msra.mxu0 0
      %916 = vmatprep.subr.bf16.mxu0 0
      %917 = vmatpush1.bf16.msra.mxu0 0
      %918 = vmatprep.subr.bf16.mxu0 0
      %919 = vmatpush1.bf16.msra.mxu0 %v902
      %920 = vmatprep.subr.bf16.mxu0 0
      %921 = vmatpush2.bf16.msra.mxu0 0
      %922 = vmatprep.subr.bf16.mxu0 0
      %923 = vmatpush2.bf16.msra.mxu0 0
      %924 = vmatprep.subr.bf16.mxu0 0
      %925 = vmatpush2.bf16.msra.mxu0 0
      %926 = vmatprep.subr.bf16.mxu0 0
      %927 = vmatpush2.bf16.msra.mxu0 0
      %928 = vmatprep.subr.bf16.mxu0 0
      %929 = vmatpush2.bf16.msra.mxu0 0
      %930 = vmatprep.subr.bf16.mxu0 0
      %931 = vmatpush2.bf16.msra.mxu0 0
      %932 = vmatprep.subr.bf16.mxu0 0
      %933 = vmatpush2.bf16.msra.mxu0 0
      %934 = vmatprep.subr.bf16.mxu0 0
      %935 = vmatpush2.bf16.msra.mxu0 0
      %936 = vmatprep.mubr.bf16.mxu0 0
      %937 = vmatmul.mubr.bf16.gmra.mxu0 %v899
      %v938 = vpop.f32.mrf.mxu0
      %v939 = vadd.f32 0.0, %v938
      %v940 = vpop.f32.mrf.mxu0
      %v941 = vpop.f32.mrf.mxu0
      %v942 = vpop.f32.mrf.mxu0
      %943 = vdwg.mxu0
      %v944 = vrcp.pop %v891
      %v945 = vmul.f32 %v939, %v944
      %v946 = vpack.c.bf16 %v945, %v945
      %947 = vrot.lane.b32.xlu0 %v707, 112
      %v948 = vpop.permute.xlu0 %947
      %949 = vrot.lane.b32.xlu0 %v833, 112
      %v950 = vpop.permute.xlu0 %949
      %v952 = vsel %vm713, %v948, 0
      %v955 = vsel %vm713, %v950, 0
      %957 = vmatprep.subr.bf16.mxu0 0
      %958 = vmatpush1.bf16.xpose.msra.mxu0 0
      %959 = vmatprep.subr.bf16.mxu0 0
      %960 = vmatpush1.bf16.xpose.msra.mxu0 0
      %961 = vmatprep.subr.bf16.mxu0 0
      %962 = vmatpush1.bf16.xpose.msra.mxu0 0
      %963 = vmatprep.subr.bf16.mxu0 0
      %964 = vmatpush1.bf16.xpose.msra.mxu0 0
      %965 = vmatprep.subr.bf16.mxu0 0
      %966 = vmatpush1.bf16.xpose.msra.mxu0 0
      %967 = vmatprep.subr.bf16.mxu0 0
      %968 = vmatpush1.bf16.xpose.msra.mxu0 0
      %969 = vmatprep.subr.bf16.mxu0 0
      %970 = vmatpush1.bf16.xpose.msra.mxu0 0
      %971 = vmatprep.subr.bf16.mxu0 0
      %972 = vmatpush1.bf16.xpose.msra.mxu0 %v955
      %973 = vmatprep.subr.bf16.mxu0 0
      %974 = vmatpush2.bf16.xpose.msra.mxu0 0
      %975 = vmatprep.subr.bf16.mxu0 0
      %976 = vmatpush2.bf16.xpose.msra.mxu0 0
      %977 = vmatprep.subr.bf16.mxu0 0
      %978 = vmatpush2.bf16.xpose.msra.mxu0 0
      %979 = vmatprep.subr.bf16.mxu0 0
      %980 = vmatpush2.bf16.xpose.msra.mxu0 0
      %981 = vmatprep.subr.bf16.mxu0 0
      %982 = vmatpush2.bf16.xpose.msra.mxu0 0
      %983 = vmatprep.subr.bf16.mxu0 0
      %984 = vmatpush2.bf16.xpose.msra.mxu0 0
      %985 = vmatprep.subr.bf16.mxu0 0
      %986 = vmatpush2.bf16.xpose.msra.mxu0 0
      %987 = vmatprep.subr.bf16.mxu0 0
      %988 = vmatpush2.bf16.xpose.msra.mxu0 0
      %989 = vmatprep.mubr.bf16.mxu0 0
      %990 = vmatmul.mubr.bf16.gmra.mxu0 %v952
      %v991 = vpop.f32.mrf.mxu0
      %v992 = vadd.f32 0.0, %v991
      %v993 = vpop.f32.mrf.mxu0
      %v994 = vpop.f32.mrf.mxu0
      %v995 = vpop.f32.mrf.mxu0
      %996 = vdwg.mxu0
      %v997 = vsel %vm766, %v992, -1e+09
      %v998 = vsel %vm713, %v997, -inf
      %999 = vmax.xlane.f32.xlu0 %v998
      %v1000 = vpop.xlane.xlu0 %999
      %v1001 = vsub.f32 %v997, %v1000
      %v1002 = vmul.f32 %v1001, 1.442695
      %v1003 = vpow.pop %v1002
      %v1004 = vsel %vm713, %v1003, 0.0
      %1005 = vadd.xlane.f32.xlu0 %v1004
      %v1006 = vpop.xlane.xlu0 %1005
      %v1007 = vpack.c.bf16 %v1003, %v1003
      %1008 = vrot.lane.b32.xlu0 %v895, 112
      %v1009 = vpop.permute.xlu0 %1008
      %v1011 = vsel %vm713, %v1007, 0
      %v1014 = vsel %vm781, %v1009, 0
      %1016 = vmatprep.subr.bf16.mxu0 0
      %1017 = vmatpush1.bf16.msra.mxu0 0
      %1018 = vmatprep.subr.bf16.mxu0 0
      %1019 = vmatpush1.bf16.msra.mxu0 0
      %1020 = vmatprep.subr.bf16.mxu0 0
      %1021 = vmatpush1.bf16.msra.mxu0 0
      %1022 = vmatprep.subr.bf16.mxu0 0
      %1023 = vmatpush1.bf16.msra.mxu0 0
      %1024 = vmatprep.subr.bf16.mxu0 0
      %1025 = vmatpush1.bf16.msra.mxu0 0
      %1026 = vmatprep.subr.bf16.mxu0 0
      %1027 = vmatpush1.bf16.msra.mxu0 0
      %1028 = vmatprep.subr.bf16.mxu0 0
      %1029 = vmatpush1.bf16.msra.mxu0 0
      %1030 = vmatprep.subr.bf16.mxu0 0
      %1031 = vmatpush1.bf16.msra.mxu0 %v1014
      %1032 = vmatprep.subr.bf16.mxu0 0
      %1033 = vmatpush2.bf16.msra.mxu0 0
      %1034 = vmatprep.subr.bf16.mxu0 0
      %1035 = vmatpush2.bf16.msra.mxu0 0
      %1036 = vmatprep.subr.bf16.mxu0 0
      %1037 = vmatpush2.bf16.msra.mxu0 0
      %1038 = vmatprep.subr.bf16.mxu0 0
      %1039 = vmatpush2.bf16.msra.mxu0 0
      %1040 = vmatprep.subr.bf16.mxu0 0
      %1041 = vmatpush2.bf16.msra.mxu0 0
      %1042 = vmatprep.subr.bf16.mxu0 0
      %1043 = vmatpush2.bf16.msra.mxu0 0
      %1044 = vmatprep.subr.bf16.mxu0 0
      %1045 = vmatpush2.bf16.msra.mxu0 0
      %1046 = vmatprep.subr.bf16.mxu0 0
      %1047 = vmatpush2.bf16.msra.mxu0 0
      %1048 = vmatprep.mubr.bf16.mxu0 0
      %1049 = vmatmul.mubr.bf16.gmra.mxu0 %v1011
      %v1050 = vpop.f32.mrf.mxu0
      %v1051 = vadd.f32 0.0, %v1050
      %v1052 = vpop.f32.mrf.mxu0
      %v1053 = vpop.f32.mrf.mxu0
      %v1054 = vpop.f32.mrf.mxu0
      %1055 = vdwg.mxu0
      %v1056 = vrcp.pop %v1006
      %v1057 = vmul.f32 %v1051, %v1056
      %v1058 = vpack.c.bf16 %v1057, %v1057
      %1059 = vrot.lane.b32.xlu0 %v707, 104
      %v1060 = vpop.permute.xlu0 %1059
      %1061 = vrot.lane.b32.xlu0 %v833, 104
      %v1062 = vpop.permute.xlu0 %1061
      %v1064 = vsel %vm713, %v1060, 0
      %v1067 = vsel %vm713, %v1062, 0
      %1069 = vmatprep.subr.bf16.mxu0 0
      %1070 = vmatpush1.bf16.xpose.msra.mxu0 0
      %1071 = vmatprep.subr.bf16.mxu0 0
      %1072 = vmatpush1.bf16.xpose.msra.mxu0 0
      %1073 = vmatprep.subr.bf16.mxu0 0
      %1074 = vmatpush1.bf16.xpose.msra.mxu0 0
      %1075 = vmatprep.subr.bf16.mxu0 0
      %1076 = vmatpush1.bf16.xpose.msra.mxu0 0
      %1077 = vmatprep.subr.bf16.mxu0 0
      %1078 = vmatpush1.bf16.xpose.msra.mxu0 0
      %1079 = vmatprep.subr.bf16.mxu0 0
      %1080 = vmatpush1.bf16.xpose.msra.mxu0 0
      %1081 = vmatprep.subr.bf16.mxu0 0
      %1082 = vmatpush1.bf16.xpose.msra.mxu0 0
      %1083 = vmatprep.subr.bf16.mxu0 0
      %1084 = vmatpush1.bf16.xpose.msra.mxu0 %v1067
      %1085 = vmatprep.subr.bf16.mxu0 0
      %1086 = vmatpush2.bf16.xpose.msra.mxu0 0
      %1087 = vmatprep.subr.bf16.mxu0 0
      %1088 = vmatpush2.bf16.xpose.msra.mxu0 0
      %1089 = vmatprep.subr.bf16.mxu0 0
      %1090 = vmatpush2.bf16.xpose.msra.mxu0 0
      %1091 = vmatprep.subr.bf16.mxu0 0
      %1092 = vmatpush2.bf16.xpose.msra.mxu0 0
      %1093 = vmatprep.subr.bf16.mxu0 0
      %1094 = vmatpush2.bf16.xpose.msra.mxu0 0
      %1095 = vmatprep.subr.bf16.mxu0 0
      %1096 = vmatpush2.bf16.xpose.msra.mxu0 0
      %1097 = vmatprep.subr.bf16.mxu0 0
      %1098 = vmatpush2.bf16.xpose.msra.mxu0 0
      %1099 = vmatprep.subr.bf16.mxu0 0
      %1100 = vmatpush2.bf16.xpose.msra.mxu0 0
      %1101 = vmatprep.mubr.bf16.mxu0 0
      %1102 = vmatmul.mubr.bf16.gmra.mxu0 %v1064
      %v1103 = vpop.f32.mrf.mxu0
      %v1104 = vadd.f32 0.0, %v1103
      %v1105 = vpop.f32.mrf.mxu0
      %v1106 = vpop.f32.mrf.mxu0
      %v1107 = vpop.f32.mrf.mxu0
      %1108 = vdwg.mxu0
      %v1109 = vsel %vm766, %v1104, -1e+09
      %v1110 = vsel %vm713, %v1109, -inf
      %1111 = vmax.xlane.f32.xlu0 %v1110
      %v1112 = vpop.xlane.xlu0 %1111
      %v1113 = vsub.f32 %v1109, %v1112
      %v1114 = vmul.f32 %v1113, 1.442695
      %v1115 = vpow.pop %v1114
      %v1116 = vsel %vm713, %v1115, 0.0
      %1117 = vadd.xlane.f32.xlu0 %v1116
      %v1118 = vpop.xlane.xlu0 %1117
      %v1119 = vpack.c.bf16 %v1115, %v1115
      %1120 = vrot.lane.b32.xlu0 %v895, 104
      %v1121 = vpop.permute.xlu0 %1120
      %v1123 = vsel %vm713, %v1119, 0
      %v1126 = vsel %vm781, %v1121, 0
      %1128 = vmatprep.subr.bf16.mxu0 0
      %1129 = vmatpush1.bf16.msra.mxu0 0
      %1130 = vmatprep.subr.bf16.mxu0 0
      %1131 = vmatpush1.bf16.msra.mxu0 0
      %1132 = vmatprep.subr.bf16.mxu0 0
      %1133 = vmatpush1.bf16.msra.mxu0 0
      %1134 = vmatprep.subr.bf16.mxu0 0
      %1135 = vmatpush1.bf16.msra.mxu0 0
      %1136 = vmatprep.subr.bf16.mxu0 0
      %1137 = vmatpush1.bf16.msra.mxu0 0
      %1138 = vmatprep.subr.bf16.mxu0 0
      %1139 = vmatpush1.bf16.msra.mxu0 0
      %1140 = vmatprep.subr.bf16.mxu0 0
      %1141 = vmatpush1.bf16.msra.mxu0 0
      %1142 = vmatprep.subr.bf16.mxu0 0
      %1143 = vmatpush1.bf16.msra.mxu0 %v1126
      %1144 = vmatprep.subr.bf16.mxu0 0
      %1145 = vmatpush2.bf16.msra.mxu0 0
      %1146 = vmatprep.subr.bf16.mxu0 0
      %1147 = vmatpush2.bf16.msra.mxu0 0
      %1148 = vmatprep.subr.bf16.mxu0 0
      %1149 = vmatpush2.bf16.msra.mxu0 0
      %1150 = vmatprep.subr.bf16.mxu0 0
      %1151 = vmatpush2.bf16.msra.mxu0 0
      %1152 = vmatprep.subr.bf16.mxu0 0
      %1153 = vmatpush2.bf16.msra.mxu0 0
      %1154 = vmatprep.subr.bf16.mxu0 0
      %1155 = vmatpush2.bf16.msra.mxu0 0
      %1156 = vmatprep.subr.bf16.mxu0 0
      %1157 = vmatpush2.bf16.msra.mxu0 0
      %1158 = vmatprep.subr.bf16.mxu0 0
      %1159 = vmatpush2.bf16.msra.mxu0 0
      %1160 = vmatprep.mubr.bf16.mxu0 0
      %1161 = vmatmul.mubr.bf16.gmra.mxu0 %v1123
      %v1162 = vpop.f32.mrf.mxu0
      %v1163 = vadd.f32 0.0, %v1162
      %v1164 = vpop.f32.mrf.mxu0
      %v1165 = vpop.f32.mrf.mxu0
      %v1166 = vpop.f32.mrf.mxu0
      %1167 = vdwg.mxu0
      %v1168 = vrcp.pop %v1118
      %v1169 = vmul.f32 %v1163, %v1168
      %v1170 = vpack.c.bf16 %v1169, %v1169
      %1172 = vrot.lane.b32.xlu0 %v946, 8
      %v1173 = vpop.permute.xlu0 %1172
      %1175 = vrot.lane.b32.xlu0 %v1058, 16
      %v1176 = vpop.permute.xlu0 %1175
      %1178 = vrot.lane.b32.xlu0 %v1170, 24
      %v1179 = vpop.permute.xlu0 %1178
      %v1182 = vsel %vm713, %v827, %v1173
      %vm1183 = vcmask 130048
      %v1185 = vsel %vm1183, %v1182, %v1176
      %vm1186 = vcmask 195584
      %v1188 = vsel %vm1186, %v1185, %v1179
      %v1189 = vld [vmem:[%s9] sm:$0xf]
      %v1190 = vld [vmem:[%s9 + $0x4] sm:$0xf]
      %v1191 = vld [vmem:[%s9 + $0x8] sm:$0xf]
      %v1192 = vld [vmem:[%s9 + $0xc] sm:$0xf]
      %v1193 = vld [vmem:[%s10] sm:$0x1]
      %v1195 = vlaneseq
      %v1196 = vshrl.u32 %v1195, 7
      %v1197 = vsub.s32 0, %v1196
      %v1198 = vrot.slane %v1193, %v1197
      %v1204 = vunpack.c.l.b16 %v1189
      %v1205 = vunpack.c.l.b16 %v1190
      %v1206 = vunpack.c.l.b16 %v1191
      %v1207 = vunpack.c.l.b16 %v1192
      %v1208 = vpack.c.b16 %v1205, %v1204
      %v1209 = vpack.c.b16 %v1207, %v1206
      %v1212 = vsel %vm663, %v1188, 0
      %1214 = vmatprep.subr.bf16.mxu0 0
      %1215 = vmatpush1.bf16.msra.mxu0 0
      %1216 = vmatprep.subr.bf16.mxu0 0
      %1217 = vmatpush1.bf16.msra.mxu0 0
      %1218 = vmatprep.subr.bf16.mxu0 0
      %1219 = vmatpush1.bf16.msra.mxu0 0
      %1220 = vmatprep.subr.bf16.mxu0 0
      %1221 = vmatpush1.bf16.msra.mxu0 0
      %1222 = vmatprep.subr.bf16.mxu0 0
      %1223 = vmatpush1.bf16.msra.mxu0 0
      %1224 = vmatprep.subr.bf16.mxu0 0
      %1225 = vmatpush1.bf16.msra.mxu0 0
      %1226 = vmatprep.subr.bf16.mxu0 0
      %1227 = vmatpush1.bf16.msra.mxu0 %v1209
      %1228 = vmatprep.subr.bf16.mxu0 0
      %1229 = vmatpush1.bf16.msra.mxu0 %v1208
      %1230 = vmatprep.subr.bf16.mxu0 0
      %1231 = vmatpush2.bf16.msra.mxu0 0
      %1232 = vmatprep.subr.bf16.mxu0 0
      %1233 = vmatpush2.bf16.msra.mxu0 0
      %1234 = vmatprep.subr.bf16.mxu0 0
      %1235 = vmatpush2.bf16.msra.mxu0 0
      %1236 = vmatprep.subr.bf16.mxu0 0
      %1237 = vmatpush2.bf16.msra.mxu0 0
      %1238 = vmatprep.subr.bf16.mxu0 0
      %1239 = vmatpush2.bf16.msra.mxu0 0
      %1240 = vmatprep.subr.bf16.mxu0 0
      %1241 = vmatpush2.bf16.msra.mxu0 0
      %1242 = vmatprep.subr.bf16.mxu0 0
      %1243 = vmatpush2.bf16.msra.mxu0 0
      %1244 = vmatprep.subr.bf16.mxu0 0
      %1245 = vmatpush2.bf16.msra.mxu0 0
      %1246 = vmatprep.mubr.bf16.mxu0 0
      %1247 = vmatmul.mubr.bf16.gmra.mxu0 %v1212
      %v1248 = vpop.f32.mrf.mxu0
      %v1249 = vadd.f32 %v1198, %v1248
      %v1250 = vpop.f32.mrf.mxu0
      %v1251 = vpop.f32.mrf.mxu0
      %v1252 = vpop.f32.mrf.mxu0
      %1253 = vdwg.mxu0
      %v1254 = vunpack.c.l.bf16 %v639
      %v1255 = vadd.f32 %v1254, %v1249
      %v1256 = vld [vmem:[%s11] sm:$0x1]
      %v1257 = vld [vmem:[%s12] sm:$0x1]
      %v1258 = vsel %vm663, %v1255, 0.0
      %1259 = vadd.xlane.f32.xlu0 %v1258
      %v1260 = vpop.xlane.xlu0 %1259
      %v1261 = vrcp.pop 32.0
      %v1262 = vmul.f32 %v1260, %v1261
      %v1263 = vsub.f32 %v1255, %v1262
      %v1264 = vmul.f32 %v1263, %v1263
      %v1265 = vsel %vm663, %v1264, 0.0
      %1266 = vadd.xlane.f32.xlu0 %v1265
      %v1267 = vpop.xlane.xlu0 %1266
      %v1268 = vmul.f32 %v1267, %v1261
      %v1269 = vadd.f32 %v1268, 1e-05
      %v1270 = vrsqrt.pop %v1269
      %v1271 = vmul.f32 %v1263, %v1270
      %v1273 = vlaneseq
      %v1274 = vshrl.u32 %v1273, 7
      %v1275 = vsub.s32 0, %v1274
      %v1276 = vrot.slane %v1256, %v1275
      %v1278 = vmul.f32 %v1271, %v1276
      %v1280 = vlaneseq
      %v1281 = vshrl.u32 %v1280, 7
      %v1282 = vsub.s32 0, %v1281
      %v1283 = vrot.slane %v1257, %v1282
      %v1285 = vadd.f32 %v1278, %v1283
      %v1286 = vpack.c.bf16 %v1285, %v1285
      %vm1287 = vcmask 257024
      %1288 = vst.msk [vmem:[%s497] sm:$0xf] %vm1287, %v1286
      %p1289 = scmp.lt.s32.totalorder %s28, 1
      %s1290 = scalar_select %p1289, %s28, 1
      %p1291 = scmp.lt.s32.totalorder %s29, 0
      %s1292 = scalar_select %p1291, %s29, 0
      %s1293 = sadd.s32 %s1292, %s1290
      %s1294 = smul.addr %s1293, 4
      %s1295 = scalar_lea.vmem %s13, %s1294
      // Predicated region
      $region77: #{decoder_forward.8} parent=71 // pred_check
        %p1296 = pneg %p346
      $region78: #{decoder_forward.8} parent=71 // pred_check_branch
        %1298 = sbr.rel (%p1296) target = $region80
      $region79: #{decoder_forward.8} parent=71 // pred_region
        _
      $region80: #{decoder_forward.8} parent=71 // pred_fallthru
        _
    $region72: #{decoder_forward.8} parent=5 // pred_fallthru
      _
    %p1299 = scmp.le.s32.totalorder 2, %s19
    // Predicated region
    $region81: #{decoder_forward.8} parent=5 // pred_check
      %p1300 = pneg %p1299
    $region82: #{decoder_forward.8} parent=5 // pred_check_branch
      %1302 = sbr.rel (%p1300) target = $region84
    $region83: #{decoder_forward.8} parent=5 // pred_region
      %s1303 = ssub.s32 %s19, 2
      // Predicated region
      $region85: #{decoder_forward.8} parent=83 // pred_check
        %p1304 = pneg %p352
      $region86: #{decoder_forward.8} parent=83 // pred_check_branch
        %1306 = sbr.rel (%p1304) target = $region88
      $region87: #{decoder_forward.8} parent=83 // pred_region
        %p1307 = scmp.lt.s32.totalorder %s30, 1
        %s1308 = scalar_select %p1307, %s30, 1
        %p1309 = scmp.lt.s32.totalorder %s31, 0
        %s1310 = scalar_select %p1309, %s31, 0
        %s1311 = sadd.s32 %s1310, %s1308
        %s1312 = smul.addr %s1311, 4
        %s1313 = scalar_lea.vmem %s13, %s1312
      $region88: #{decoder_forward.8} parent=83 // pred_fallthru
        _
    $region84: #{decoder_forward.8} parent=5 // pred_fallthru
      _
  $region6: #{decoder_forward.8} parent=0 // loop_footer
    %s23 = sadd.s32 1, %s19
  $region7: #{decoder_forward.8} parent=0 // loop_footer_branch
    %18 = sbr.rel target = $region3
  $region8: #{decoder_forward.8} parent=0 // loop_exit
    _

</llo_original>
